<compile_context>
chip_gen: v7x
topology: tpu7x:2x2x1
jax: 0.10.0
libtpu: 0.0.40
codegen_flags: <defaults>
</compile_context>

<pallas_src>
import functools

import jax
import jax.numpy as jnp
from jax.experimental import pallas as pl
from jax.experimental.pallas import tpu as pltpu


# ------------------------------- Pallas kernel --------------------------------
def _lstm_recurrent_kernel(pg1_ref, wh1_ref, wx2_ref, wh2_ref, b2_ref,
                           h2seq_ref,
                           h1_sc, c1_sc, h2_sc, c2_sc,
                           *, hidden, t_block, unroll):
    """Recurrent part only.

    pg1_ref  : (T_BLOCK, BB, 4H)  precomputed x@Wx1 + b1 for this time block
    wh1_ref  : (H, 4H)            recurrent weights of cell 1
    wx2_ref  : (H, 4H)            input weights of cell 2 (un-fused)
    wh2_ref  : (H, 4H)            recurrent weights of cell 2 (un-fused)
    b2_ref   : (1, 4H)
    h2seq_ref: (T_BLOCK, BB, H)   per-timestep h2 (head applied outside)
    scratch  : h1/c1/h2/c2 carried across time blocks, (BB, H) f32 each
    """
    H = hidden
    t = pl.program_id(1)           # time-block index (sequential / "arbitrary")

    @pl.when(t == 0)
    def _init():
        h1_sc[...] = jnp.zeros_like(h1_sc)
        c1_sc[...] = jnp.zeros_like(c1_sc)
        h2_sc[...] = jnp.zeros_like(h2_sc)
        c2_sc[...] = jnp.zeros_like(c2_sc)

    # Hoist weight loads and the bias broadcast out of the timestep loop
    # (JAX does not CSE broadcast_in_dim inside the loop).
    wh1 = wh1_ref[...]
    wx2 = wx2_ref[...]
    wh2 = wh2_ref[...]
    mm_dt = wh1.dtype                       # matmul operand dtype (f32 or bf16)
    bb = h1_sc.shape[0]
    b2 = jnp.broadcast_to(b2_ref[...].astype(jnp.float32), (bb, 4 * H))

    def gates_to_hc(gates, c_prev):
        # Gate order [i, f, g, o]; slices are lane-tile aligned when H % 128 == 0.
        i = jax.nn.sigmoid(gates[:, 0 * H:1 * H])    # input gate
        f = jax.nn.sigmoid(gates[:, 1 * H:2 * H])    # forget gate
        g = jnp.tanh(gates[:, 2 * H:3 * H])          # memory candidate
        o = jax.nn.sigmoid(gates[:, 3 * H:4 * H])    # output gate
        c_new = g * i + f * c_prev
        h_new = o * jnp.tanh(c_new)
        return h_new, c_new

    def step(tt, carry):
        h1, c1, h2, c2 = carry
        # h2_{t-1} @ Wh2 depends only on the previous step, so it is free ILP
        # that overlaps cell-1's recurrent matmul below (LLO schedules both
        # MXU pushes back to back); only h1_t @ Wx2 remains on the dependent
        # path.  This also removes the previous per-step [h1|h2] lane-concat.
        g2_part = jnp.dot(h2.astype(mm_dt), wh2,
                          preferred_element_type=jnp.float32) + b2
        # Cell 1: only the recurrent matmul sits on the serial path
        # (x@Wx1 + b1 was precomputed into pg1).
        g1 = pg1_ref[tt].astype(jnp.float32) + jnp.dot(
            h1.astype(mm_dt), wh1, preferred_element_type=jnp.float32)
        h1, c1 = gates_to_hc(g1, c1)
        # Cell 2: the only matmul left behind cell-1 on the critical path.
        g2 = g2_part + jnp.dot(h1.astype(mm_dt), wx2,
                               preferred_element_type=jnp.float32)
        h2, c2 = gates_to_hc(g2, c2)
        h2seq_ref[tt] = h2.astype(h2seq_ref.dtype)
        return (h1, c1, h2, c2)

    carry = (h1_sc[...], c1_sc[...], h2_sc[...], c2_sc[...])

    # Bounded unroll: fully unrolling a long time block bloats bundles / vreg
    # pressure, so run an outer fori_loop over inner unrolled chunks instead.
    n_inner = min(t_block, unroll)          # wrapper guarantees it divides
    n_outer = t_block // n_inner
    if n_outer == 1:
        carry = jax.lax.fori_loop(0, t_block, step, carry, unroll=True)
    else:
        def outer_body(o, c):
            base = pl.multiple_of(o * n_inner, n_inner)
            return jax.lax.fori_loop(
                0, n_inner, lambda j, cc: step(base + j, cc), c, unroll=True)
        carry = jax.lax.fori_loop(0, n_outer, outer_body, carry)

    h1_sc[...], c1_sc[...], h2_sc[...], c2_sc[...] = carry


# --------------------------------- wrapper -------------------------------------
def _largest_divisor_leq(n, cap):
    for d in range(min(n, cap), 0, -1):
        if n % d == 0:
            return d
    return 1


def lstm_pallas_forward(input_ids, params, *, hidden_shape,
                        t_block=None, batch_block=None, unroll=8,
                        matmul_dtype=jnp.float32, out_dtype=jnp.float32,
                        single_buffer_weights=False):
    """input_ids: (B, S) int32 -> (B, S, num_class) float32."""
    tok_emb = params["tok_emb"]          # (V, D)
    pos_emb = params["pos_emb"]          # (S, D)
    B, S = input_ids.shape
    H = hidden_shape

    if t_block is None:
        # Raised cap (was 16): fewer grid steps / scratch round trips for long S.
        t_block = _largest_divisor_leq(S, 64)
    if batch_block is None:
        # Fill MXU rows (256 on v6e/v7x, 128 on v5e) on the serial-path matmuls;
        # for large B keep a divisor <= 256 so the "parallel" batch axis has
        # extent >= 2 and can shard across v7x's two TensorCores.
        batch_block = B if B <= 256 else _largest_divisor_leq(B, 256)
    assert S % t_block == 0 and B % batch_block == 0
    # Inner unroll factor must divide the time block exactly.
    unroll = _largest_divisor_leq(t_block, max(1, unroll))
    nt = S // t_block
    nb = B // batch_block

    # ---- glue (plain JAX / XLA): gathers + hoisted large lane-dense matmuls ----
    embeds = tok_emb[input_ids] + pos_emb[None, :, :]            # (B, S, D)
    embeds = jnp.transpose(embeds, (1, 0, 2))                    # (S, B, D) time-major
    # Non-recurrent input projection of cell 1 hoisted off the serial path
    # (b1 folded in here, so the kernel never re-adds it).
    pg1 = (jnp.einsum("sbd,dg->sbg", embeds, params["wx1"])
           + params["b1"]).astype(matmul_dtype)                  # (S, B, 4H)
    wh1 = params["wh1"].astype(matmul_dtype)
    wx2 = params["wx2"].astype(matmul_dtype)
    wh2 = params["wh2"].astype(matmul_dtype)

    def weight_spec(shape):
        kwargs = {}
        if single_buffer_weights:
            # Grid-invariant weights don't need double buffering; halves their
            # resident VMEM (matters at production H on v7x's 64 MiB).
            kwargs["pipeline_mode"] = pl.Buffered(1)
        return pl.BlockSpec(shape, lambda b, t: tuple(0 for _ in shape), **kwargs)

    h2_seq = pl.pallas_call(
        functools.partial(_lstm_recurrent_kernel, hidden=H,
                          t_block=t_block, unroll=unroll),
        out_shape=jax.ShapeDtypeStruct((S, B, H), out_dtype),
        grid_spec=pltpu.PrefetchScalarGridSpec(
            num_scalar_prefetch=0,
            grid=(nb, nt),
            in_specs=[
                pl.BlockSpec((t_block, batch_block, 4 * H),
                             lambda b, t: (t, b, 0)),            # pre-gates slab
                weight_spec((H, 4 * H)),                         # Wh1 (resident)
                weight_spec((H, 4 * H)),                         # Wx2
                weight_spec((H, 4 * H)),                         # Wh2
                weight_spec((1, 4 * H)),                         # b2
            ],
            out_specs=pl.BlockSpec((t_block, batch_block, H),
                                   lambda b, t: (t, b, 0)),      # lane-dense h2 slab
            scratch_shapes=[
                pltpu.VMEM((batch_block, H), jnp.float32),   # h1
                pltpu.VMEM((batch_block, H), jnp.float32),   # c1
                pltpu.VMEM((batch_block, H), jnp.float32),   # h2
                pltpu.VMEM((batch_block, H), jnp.float32),   # c2
            ],
        ),
        compiler_params=pltpu.CompilerParams(
            # batch axis is embarrassingly parallel, sequence axis is the carry
            dimension_semantics=("parallel", "arbitrary"),
            # <= 56 MiB: fits v7x's 64 MiB physical VMEM with headroom, well
            # above the 16/32 MiB scoped defaults on v5e/v6e.
            vmem_limit_bytes=48 * 1024 * 1024,
        ),
    )(pg1, wh1, wx2, wh2, params["b2"])

    # Hoisted linear head: one big matmul instead of S tiny (B, C) ones.
    out = jnp.einsum("sbh,hc->bsc", h2_seq.astype(jnp.float32),
                     params["wl"]) + params["bl"]
    # torch's .squeeze(2) is a no-op for num_class > 1.
    return out


# ---------------------------- reference (pure JAX) ----------------------------
def lstm_ref_forward(input_ids, params, *, hidden_shape):
    tok_emb = params["tok_emb"]
    pos_emb = params["pos_emb"]
    B, S = input_ids.shape
    H = hidden_shape
    embeds = tok_emb[input_ids] + pos_emb[None, :, :]            # (B, S, D)

    def cell(x, h, c, wx, wh, b):
        gates = x @ wx + h @ wh + b
        i = jax.nn.sigmoid(gates[:, 0 * H:1 * H])
        f = jax.nn.sigmoid(gates[:, 1 * H:2 * H])
        g = jnp.tanh(gates[:, 2 * H:3 * H])
        o = jax.nn.sigmoid(gates[:, 3 * H:4 * H])
        c_new = g * i + f * c
        h_new = o * jnp.tanh(c_new)
        return h_new, c_new

    def step(carry, x_t):
        h1, c1, h2, c2 = carry
        h1, c1 = cell(x_t, h1, c1, params["wx1"], params["wh1"], params["b1"])
        h2, c2 = cell(h1, h2, c2, params["wx2"], params["wh2"], params["b2"])
        out = h2 @ params["wl"] + params["bl"]
        return (h1, c1, h2, c2), out

    init = tuple(jnp.zeros((B, H), jnp.float32) for _ in range(4))
    _, outs = jax.lax.scan(step, init, jnp.transpose(embeds, (1, 0, 2)))
    return jnp.transpose(outs, (1, 0, 2))


# ---------------------------- parameter construction --------------------------
def make_params(key, *, vocab_size, seq_size, input_shape, hidden_shape, num_class):
    ks = jax.random.split(key, 16)
    D, H, C = input_shape, hidden_shape, num_class
    s = 0.1
    nrm = lambda k, shape: (s * jax.random.normal(k, shape)).astype(jnp.float32)
    return {
        "tok_emb": nrm(ks[0], (vocab_size, D)),
        "pos_emb": nrm(ks[1], (seq_size, D)),
        # cell 1: gate order [i, f, g, o]
        "wx1": nrm(ks[2], (D, 4 * H)),
        "wh1": nrm(ks[3], (H, 4 * H)),
        "b1":  nrm(ks[4], (1, 4 * H)),
        # cell 2
        "wx2": nrm(ks[5], (H, 4 * H)),
        "wh2": nrm(ks[6], (H, 4 * H)),
        "b2":  nrm(ks[7], (1, 4 * H)),
        # linear head
        "wl":  nrm(ks[8], (H, C)),
        "bl":  nrm(ks[9], (1, C)),
    }


if __name__ == "__main__":
    # Small shapes consistent with LSTM(vocab_size, seq_size, input_shape,
    # hidden_shape, num_class).  H=128 (the module default) keeps the gate
    # slices lane-aligned; B=8 fills a full f32 sublane.
    VOCAB, SEQ, D, H, C = 100, 16, 64, 128, 9
    B = 8

    key = jax.random.PRNGKey(0)
    k_param, k_ids = jax.random.split(key)
    params = make_params(k_param, vocab_size=VOCAB, seq_size=SEQ,
                         input_shape=D, hidden_shape=H, num_class=C)
    input_ids = jax.random.randint(k_ids, (B, SEQ), 0, VOCAB, dtype=jnp.int32)

    # t_block=8 -> two sequential time blocks (exercises the VMEM-carried
    # state); unroll=4 -> exercises the outer-loop + bounded-unroll structure.
    # f32 matmul/out dtypes keep the tight check against the f32 reference;
    # pass matmul_dtype=jnp.bfloat16 / out_dtype=jnp.bfloat16 for production.
    out = lstm_pallas_forward(input_ids, params, hidden_shape=H,
                              t_block=8, unroll=4)
    out = jax.block_until_ready(out)

    ref = lstm_ref_forward(input_ids, params, hidden_shape=H)
    assert out.shape == (B, SEQ, C), out.shape
    assert jnp.allclose(out, ref, atol=1e-4, rtol=1e-4), \
        float(jnp.max(jnp.abs(out - ref)))

    print("KERNEL_OK")
</pallas_src>

<mosaic_0001>
module attributes {stable_mosaic.version = 11 : i64} {
  func.func @_lstm_recurrent_kernel(%arg0: i32, %arg1: i32, %arg2: memref<8x8x512xf32, #tpu.memory_space<vmem>>, %arg3: memref<128x512xf32, #tpu.memory_space<vmem>>, %arg4: memref<128x512xf32, #tpu.memory_space<vmem>>, %arg5: memref<128x512xf32, #tpu.memory_space<vmem>>, %arg6: memref<1x512xf32, #tpu.memory_space<vmem>>, %arg7: memref<8x8x128xf32, #tpu.memory_space<vmem>>, %arg8: memref<8x128xf32, #tpu.memory_space<vmem>>, %arg9: memref<8x128xf32, #tpu.memory_space<vmem>>, %arg10: memref<8x128xf32, #tpu.memory_space<vmem>>, %arg11: memref<8x128xf32, #tpu.memory_space<vmem>>) attributes {dimension_semantics = [#tpu.dimension_semantics<parallel>, #tpu.dimension_semantics<arbitrary>], iteration_bounds = array<i64: 1, 2>, scalar_prefetch = 0 : i64, scratch_operands = 4 : i64, tpu.core_type = #tpu.core_type<tc>, window_params = [{transform_indices = @transform_0, window_bounds = array<i64: 8, 8, 512>}, {pipeline_mode = #tpu.pipeline_mode<synchronous>, transform_indices = @transform_1, window_bounds = array<i64: 128, 512>}, {pipeline_mode = #tpu.pipeline_mode<synchronous>, transform_indices = @transform_2, window_bounds = array<i64: 128, 512>}, {pipeline_mode = #tpu.pipeline_mode<synchronous>, transform_indices = @transform_3, window_bounds = array<i64: 128, 512>}, {pipeline_mode = #tpu.pipeline_mode<synchronous>, transform_indices = @transform_4, window_bounds = array<i64: 1, 512>}, {transform_indices = @transform_5, window_bounds = array<i64: 8, 8, 128>}]} {
    %c0_i32 = arith.constant 0 : i32
    %0 = arith.cmpi eq, %arg1, %c0_i32 : i32
    %1 = arith.extui %0 : i1 to i32
    %c0_i32_0 = arith.constant 0 : i32
    %2 = arith.cmpi ne, %1, %c0_i32_0 : i32
    scf.if %2 {
      %cst = arith.constant 0.000000e+00 : f32
      %19 = vector.broadcast %cst : f32 to vector<8x128xf32>
      %c0_26 = arith.constant 0 : index
      %c0_27 = arith.constant 0 : index
      %20 = vector.load %arg8[%c0_26, %c0_27] : memref<8x128xf32, #tpu.memory_space<vmem>>, vector<8x128xf32>
      tpu.vector_store %arg8[%c0_26, %c0_27], %19 {strides = array<i32>} : memref<8x128xf32, #tpu.memory_space<vmem>>, vector<8x128xf32>,
      %cst_28 = arith.constant 0.000000e+00 : f32
      %21 = vector.broadcast %cst_28 : f32 to vector<8x128xf32>
      %c0_29 = arith.constant 0 : index
      %c0_30 = arith.constant 0 : index
      %22 = vector.load %arg9[%c0_29, %c0_30] : memref<8x128xf32, #tpu.memory_space<vmem>>, vector<8x128xf32>
      tpu.vector_store %arg9[%c0_29, %c0_30], %21 {strides = array<i32>} : memref<8x128xf32, #tpu.memory_space<vmem>>, vector<8x128xf32>,
      %cst_31 = arith.constant 0.000000e+00 : f32
      %23 = vector.broadcast %cst_31 : f32 to vector<8x128xf32>
      %c0_32 = arith.constant 0 : index
      %c0_33 = arith.constant 0 : index
      %24 = vector.load %arg10[%c0_32, %c0_33] : memref<8x128xf32, #tpu.memory_space<vmem>>, vector<8x128xf32>
      tpu.vector_store %arg10[%c0_32, %c0_33], %23 {strides = array<i32>} : memref<8x128xf32, #tpu.memory_space<vmem>>, vector<8x128xf32>,
      %cst_34 = arith.constant 0.000000e+00 : f32
      %25 = vector.broadcast %cst_34 : f32 to vector<8x128xf32>
      %c0_35 = arith.constant 0 : index
      %c0_36 = arith.constant 0 : index
      %26 = vector.load %arg11[%c0_35, %c0_36] : memref<8x128xf32, #tpu.memory_space<vmem>>, vector<8x128xf32>
      tpu.vector_store %arg11[%c0_35, %c0_36], %25 {strides = array<i32>} : memref<8x128xf32, #tpu.memory_space<vmem>>, vector<8x128xf32>,
    } else {
    }
    %c0 = arith.constant 0 : index
    %c0_1 = arith.constant 0 : index
    %3 = vector.load %arg3[%c0, %c0_1] : memref<128x512xf32, #tpu.memory_space<vmem>>, vector<128x512xf32>
    %c0_2 = arith.constant 0 : index
    %c0_3 = arith.constant 0 : index
    %4 = vector.load %arg4[%c0_2, %c0_3] : memref<128x512xf32, #tpu.memory_space<vmem>>, vector<128x512xf32>
    %c0_4 = arith.constant 0 : index
    %c0_5 = arith.constant 0 : index
    %5 = vector.load %arg5[%c0_4, %c0_5] : memref<128x512xf32, #tpu.memory_space<vmem>>, vector<128x512xf32>
    %c0_6 = arith.constant 0 : index
    %c0_7 = arith.constant 0 : index
    %6 = vector.load %arg6[%c0_6, %c0_7] : memref<1x512xf32, #tpu.memory_space<vmem>>, vector<1x512xf32>
    %7 = vector.shape_cast %6 : vector<1x512xf32> to vector<1x512xf32>
    %8 = vector.broadcast %7 : vector<1x512xf32> to vector<8x512xf32>
    %c0_8 = arith.constant 0 : index
    %c0_9 = arith.constant 0 : index
    %9 = vector.load %arg8[%c0_8, %c0_9] : memref<8x128xf32, #tpu.memory_space<vmem>>, vector<8x128xf32>
    %c0_10 = arith.constant 0 : index
    %c0_11 = arith.constant 0 : index
    %10 = vector.load %arg9[%c0_10, %c0_11] : memref<8x128xf32, #tpu.memory_space<vmem>>, vector<8x128xf32>
    %c0_12 = arith.constant 0 : index
    %c0_13 = arith.constant 0 : index
    %11 = vector.load %arg10[%c0_12, %c0_13] : memref<8x128xf32, #tpu.memory_space<vmem>>, vector<8x128xf32>
    %c0_14 = arith.constant 0 : index
    %c0_15 = arith.constant 0 : index
    %12 = vector.load %arg11[%c0_14, %c0_15] : memref<8x128xf32, #tpu.memory_space<vmem>>, vector<8x128xf32>
    %c0_i32_16 = arith.constant 0 : i32
    %c2_i32 = arith.constant 2 : i32
    %13 = arith.addi %c0_i32_16, %c2_i32 : i32
    %c1_i32 = arith.constant 1 : i32
    %14:4 = scf.for %arg12 = %c0_i32_16 to %13 step %c1_i32 iter_args(%arg13 = %9, %arg14 = %10, %arg15 = %11, %arg16 = %12) -> (vector<8x128xf32>, vector<8x128xf32>, vector<8x128xf32>, vector<8x128xf32>)  : i32 {
      %c4_i32 = arith.constant 4 : i32
      %19 = arith.muli %arg12, %c4_i32 : i32
      %20 = tpu.assume_multiple %19, 4 : i32
      %c0_i32_26 = arith.constant 0 : i32
      %21 = arith.addi %20, %c0_i32_26 : i32
      %cst = arith.constant dense<0.000000e+00> : vector<8x512xf32>
      %22 = tpu.matmul %arg15, %5, %cst {dimension_numbers = #tpu.dot_dimension_numbers<[1], [0], [0], [1], [0, 0, 1, 1], [], []>} : vector<8x128xf32>, vector<128x512xf32>, vector<8x512xf32> -> vector<8x512xf32>
      %23 = arith.addf %22, %8 : vector<8x512xf32>
      %24 = arith.index_cast %21 : i32 to index
      %c0_27 = arith.constant 0 : index
      %c0_28 = arith.constant 0 : index
      %25 = vector.load %arg2[%24, %c0_27, %c0_28] : memref<8x8x512xf32, #tpu.memory_space<vmem>>, vector<1x8x512xf32>
      %26 = vector.shape_cast %25 : vector<1x8x512xf32> to vector<8x512xf32>
      %cst_29 = arith.constant dense<0.000000e+00> : vector<8x512xf32>
      %27 = tpu.matmul %arg13, %3, %cst_29 {dimension_numbers = #tpu.dot_dimension_numbers<[1], [0], [0], [1], [0, 0, 1, 1], [], []>} : vector<8x128xf32>, vector<128x512xf32>, vector<8x512xf32> -> vector<8x512xf32>
      %28 = arith.addf %26, %27 : vector<8x512xf32>
      %29 = vector.extract_strided_slice %28 {offsets = [0, 0], sizes = [8, 128], strides = [1, 1]} : vector<8x512xf32> to vector<8x128xf32>
      %30 = arith.negf %29 : vector<8x128xf32>
      %31 = math.exp %30 : vector<8x128xf32>
      %cst_30 = arith.constant 1.000000e+00 : f32
      %32 = vector.broadcast %cst_30 : f32 to vector<8x128xf32>
      %33 = arith.addf %32, %31 : vector<8x128xf32>
      %34 = arith.divf %32, %33 : vector<8x128xf32>
      %35 = vector.extract_strided_slice %28 {offsets = [0, 128], sizes = [8, 128], strides = [1, 1]} : vector<8x512xf32> to vector<8x128xf32>
      %36 = arith.negf %35 : vector<8x128xf32>
      %37 = math.exp %36 : vector<8x128xf32>
      %cst_31 = arith.constant 1.000000e+00 : f32
      %38 = vector.broadcast %cst_31 : f32 to vector<8x128xf32>
      %39 = arith.addf %38, %37 : vector<8x128xf32>
      %40 = arith.divf %38, %39 : vector<8x128xf32>
      %41 = vector.extract_strided_slice %28 {offsets = [0, 256], sizes = [8, 128], strides = [1, 1]} : vector<8x512xf32> to vector<8x128xf32>
      %42 = math.tanh %41 : vector<8x128xf32>
      %43 = vector.extract_strided_slice %28 {offsets = [0, 384], sizes = [8, 128], strides = [1, 1]} : vector<8x512xf32> to vector<8x128xf32>
      %44 = arith.negf %43 : vector<8x128xf32>
      %45 = math.exp %44 : vector<8x128xf32>
      %cst_32 = arith.constant 1.000000e+00 : f32
      %46 = vector.broadcast %cst_32 : f32 to vector<8x128xf32>
      %47 = arith.addf %46, %45 : vector<8x128xf32>
      %48 = arith.divf %46, %47 : vector<8x128xf32>
      %49 = arith.mulf %42, %34 : vector<8x128xf32>
      %50 = arith.mulf %40, %arg14 : vector<8x128xf32>
      %51 = arith.addf %49, %50 : vector<8x128xf32>
      %52 = math.tanh %51 : vector<8x128xf32>
      %53 = arith.mulf %48, %52 : vector<8x128xf32>
      %cst_33 = arith.constant dense<0.000000e+00> : vector<8x512xf32>
      %54 = tpu.matmul %53, %4, %cst_33 {dimension_numbers = #tpu.dot_dimension_numbers<[1], [0], [0], [1], [0, 0, 1, 1], [], []>} : vector<8x128xf32>, vector<128x512xf32>, vector<8x512xf32> -> vector<8x512xf32>
      %55 = arith.addf %23, %54 : vector<8x512xf32>
      %56 = vector.extract_strided_slice %55 {offsets = [0, 0], sizes = [8, 128], strides = [1, 1]} : vector<8x512xf32> to vector<8x128xf32>
      %57 = arith.negf %56 : vector<8x128xf32>
      %58 = math.exp %57 : vector<8x128xf32>
      %cst_34 = arith.constant 1.000000e+00 : f32
      %59 = vector.broadcast %cst_34 : f32 to vector<8x128xf32>
      %60 = arith.addf %59, %58 : vector<8x128xf32>
      %61 = arith.divf %59, %60 : vector<8x128xf32>
      %62 = vector.extract_strided_slice %55 {offsets = [0, 128], sizes = [8, 128], strides = [1, 1]} : vector<8x512xf32> to vector<8x128xf32>
      %63 = arith.negf %62 : vector<8x128xf32>
      %64 = math.exp %63 : vector<8x128xf32>
      %cst_35 = arith.constant 1.000000e+00 : f32
      %65 = vector.broadcast %cst_35 : f32 to vector<8x128xf32>
      %66 = arith.addf %65, %64 : vector<8x128xf32>
      %67 = arith.divf %65, %66 : vector<8x128xf32>
      %68 = vector.extract_strided_slice %55 {offsets = [0, 256], sizes = [8, 128], strides = [1, 1]} : vector<8x512xf32> to vector<8x128xf32>
      %69 = math.tanh %68 : vector<8x128xf32>
      %70 = vector.extract_strided_slice %55 {offsets = [0, 384], sizes = [8, 128], strides = [1, 1]} : vector<8x512xf32> to vector<8x128xf32>
      %71 = arith.negf %70 : vector<8x128xf32>
      %72 = math.exp %71 : vector<8x128xf32>
      %cst_36 = arith.constant 1.000000e+00 : f32
      %73 = vector.broadcast %cst_36 : f32 to vector<8x128xf32>
      %74 = arith.addf %73, %72 : vector<8x128xf32>
      %75 = arith.divf %73, %74 : vector<8x128xf32>
      %76 = arith.mulf %69, %61 : vector<8x128xf32>
      %77 = arith.mulf %67, %arg16 : vector<8x128xf32>
      %78 = arith.addf %76, %77 : vector<8x128xf32>
      %79 = math.tanh %78 : vector<8x128xf32>
      %80 = arith.mulf %75, %79 : vector<8x128xf32>
      %81 = arith.index_cast %21 : i32 to index
      %c0_37 = arith.constant 0 : index
      %c0_38 = arith.constant 0 : index
      %82 = vector.load %arg7[%81, %c0_37, %c0_38] : memref<8x8x128xf32, #tpu.memory_space<vmem>>, vector<1x8x128xf32>
      %83 = vector.shape_cast %82 : vector<1x8x128xf32> to vector<8x128xf32>
      %84 = vector.shape_cast %80 : vector<8x128xf32> to vector<1x8x128xf32>
      tpu.vector_store %arg7[%81, %c0_37, %c0_38], %84 {strides = array<i32>} : memref<8x8x128xf32, #tpu.memory_space<vmem>>, vector<1x8x128xf32>,
      %c1_i32_39 = arith.constant 1 : i32
      %85 = arith.addi %20, %c1_i32_39 : i32
      %cst_40 = arith.constant dense<0.000000e+00> : vector<8x512xf32>
      %86 = tpu.matmul %80, %5, %cst_40 {dimension_numbers = #tpu.dot_dimension_numbers<[1], [0], [0], [1], [0, 0, 1, 1], [], []>} : vector<8x128xf32>, vector<128x512xf32>, vector<8x512xf32> -> vector<8x512xf32>
      %87 = arith.addf %86, %8 : vector<8x512xf32>
      %88 = arith.index_cast %85 : i32 to index
      %c0_41 = arith.constant 0 : index
      %c0_42 = arith.constant 0 : index
      %89 = vector.load %arg2[%88, %c0_41, %c0_42] : memref<8x8x512xf32, #tpu.memory_space<vmem>>, vector<1x8x512xf32>
      %90 = vector.shape_cast %89 : vector<1x8x512xf32> to vector<8x512xf32>
      %cst_43 = arith.constant dense<0.000000e+00> : vector<8x512xf32>
      %91 = tpu.matmul %53, %3, %cst_43 {dimension_numbers = #tpu.dot_dimension_numbers<[1], [0], [0], [1], [0, 0, 1, 1], [], []>} : vector<8x128xf32>, vector<128x512xf32>, vector<8x512xf32> -> vector<8x512xf32>
      %92 = arith.addf %90, %91 : vector<8x512xf32>
      %93 = vector.extract_strided_slice %92 {offsets = [0, 0], sizes = [8, 128], strides = [1, 1]} : vector<8x512xf32> to vector<8x128xf32>
      %94 = arith.negf %93 : vector<8x128xf32>
      %95 = math.exp %94 : vector<8x128xf32>
      %cst_44 = arith.constant 1.000000e+00 : f32
      %96 = vector.broadcast %cst_44 : f32 to vector<8x128xf32>
      %97 = arith.addf %96, %95 : vector<8x128xf32>
      %98 = arith.divf %96, %97 : vector<8x128xf32>
      %99 = vector.extract_strided_slice %92 {offsets = [0, 128], sizes = [8, 128], strides = [1, 1]} : vector<8x512xf32> to vector<8x128xf32>
      %100 = arith.negf %99 : vector<8x128xf32>
      %101 = math.exp %100 : vector<8x128xf32>
      %cst_45 = arith.constant 1.000000e+00 : f32
      %102 = vector.broadcast %cst_45 : f32 to vector<8x128xf32>
      %103 = arith.addf %102, %101 : vector<8x128xf32>
      %104 = arith.divf %102, %103 : vector<8x128xf32>
      %105 = vector.extract_strided_slice %92 {offsets = [0, 256], sizes = [8, 128], strides = [1, 1]} : vector<8x512xf32> to vector<8x128xf32>
      %106 = math.tanh %105 : vector<8x128xf32>
      %107 = vector.extract_strided_slice %92 {offsets = [0, 384], sizes = [8, 128], strides = [1, 1]} : vector<8x512xf32> to vector<8x128xf32>
      %108 = arith.negf %107 : vector<8x128xf32>
      %109 = math.exp %108 : vector<8x128xf32>
      %cst_46 = arith.constant 1.000000e+00 : f32
      %110 = vector.broadcast %cst_46 : f32 to vector<8x128xf32>
      %111 = arith.addf %110, %109 : vector<8x128xf32>
      %112 = arith.divf %110, %111 : vector<8x128xf32>
      %113 = arith.mulf %106, %98 : vector<8x128xf32>
      %114 = arith.mulf %104, %51 : vector<8x128xf32>
      %115 = arith.addf %113, %114 : vector<8x128xf32>
      %116 = math.tanh %115 : vector<8x128xf32>
      %117 = arith.mulf %112, %116 : vector<8x128xf32>
      %cst_47 = arith.constant dense<0.000000e+00> : vector<8x512xf32>
      %118 = tpu.matmul %117, %4, %cst_47 {dimension_numbers = #tpu.dot_dimension_numbers<[1], [0], [0], [1], [0, 0, 1, 1], [], []>} : vector<8x128xf32>, vector<128x512xf32>, vector<8x512xf32> -> vector<8x512xf32>
      %119 = arith.addf %87, %118 : vector<8x512xf32>
      %120 = vector.extract_strided_slice %119 {offsets = [0, 0], sizes = [8, 128], strides = [1, 1]} : vector<8x512xf32> to vector<8x128xf32>
      %121 = arith.negf %120 : vector<8x128xf32>
      %122 = math.exp %121 : vector<8x128xf32>
      %cst_48 = arith.constant 1.000000e+00 : f32
      %123 = vector.broadcast %cst_48 : f32 to vector<8x128xf32>
      %124 = arith.addf %123, %122 : vector<8x128xf32>
      %125 = arith.divf %123, %124 : vector<8x128xf32>
      %126 = vector.extract_strided_slice %119 {offsets = [0, 128], sizes = [8, 128], strides = [1, 1]} : vector<8x512xf32> to vector<8x128xf32>
      %127 = arith.negf %126 : vector<8x128xf32>
      %128 = math.exp %127 : vector<8x128xf32>
      %cst_49 = arith.constant 1.000000e+00 : f32
      %129 = vector.broadcast %cst_49 : f32 to vector<8x128xf32>
      %130 = arith.addf %129, %128 : vector<8x128xf32>
      %131 = arith.divf %129, %130 : vector<8x128xf32>
      %132 = vector.extract_strided_slice %119 {offsets = [0, 256], sizes = [8, 128], strides = [1, 1]} : vector<8x512xf32> to vector<8x128xf32>
      %133 = math.tanh %132 : vector<8x128xf32>
      %134 = vector.extract_strided_slice %119 {offsets = [0, 384], sizes = [8, 128], strides = [1, 1]} : vector<8x512xf32> to vector<8x128xf32>
      %135 = arith.negf %134 : vector<8x128xf32>
      %136 = math.exp %135 : vector<8x128xf32>
      %cst_50 = arith.constant 1.000000e+00 : f32
      %137 = vector.broadcast %cst_50 : f32 to vector<8x128xf32>
      %138 = arith.addf %137, %136 : vector<8x128xf32>
      %139 = arith.divf %137, %138 : vector<8x128xf32>
      %140 = arith.mulf %133, %125 : vector<8x128xf32>
      %141 = arith.mulf %131, %78 : vector<8x128xf32>
      %142 = arith.addf %140, %141 : vector<8x128xf32>
      %143 = math.tanh %142 : vector<8x128xf32>
      %144 = arith.mulf %139, %143 : vector<8x128xf32>
      %145 = arith.index_cast %85 : i32 to index
      %c0_51 = arith.constant 0 : index
      %c0_52 = arith.constant 0 : index
      %146 = vector.load %arg7[%145, %c0_51, %c0_52] : memref<8x8x128xf32, #tpu.memory_space<vmem>>, vector<1x8x128xf32>
      %147 = vector.shape_cast %146 : vector<1x8x128xf32> to vector<8x128xf32>
      %148 = vector.shape_cast %144 : vector<8x128xf32> to vector<1x8x128xf32>
      tpu.vector_store %arg7[%145, %c0_51, %c0_52], %148 {strides = array<i32>} : memref<8x8x128xf32, #tpu.memory_space<vmem>>, vector<1x8x128xf32>,
      %c2_i32_53 = arith.constant 2 : i32
      %149 = arith.addi %20, %c2_i32_53 : i32
      %cst_54 = arith.constant dense<0.000000e+00> : vector<8x512xf32>
      %150 = tpu.matmul %144, %5, %cst_54 {dimension_numbers = #tpu.dot_dimension_numbers<[1], [0], [0], [1], [0, 0, 1, 1], [], []>} : vector<8x128xf32>, vector<128x512xf32>, vector<8x512xf32> -> vector<8x512xf32>
      %151 = arith.addf %150, %8 : vector<8x512xf32>
      %152 = arith.index_cast %149 : i32 to index
      %c0_55 = arith.constant 0 : index
      %c0_56 = arith.constant 0 : index
      %153 = vector.load %arg2[%152, %c0_55, %c0_56] : memref<8x8x512xf32, #tpu.memory_space<vmem>>, vector<1x8x512xf32>
      %154 = vector.shape_cast %153 : vector<1x8x512xf32> to vector<8x512xf32>
      %cst_57 = arith.constant dense<0.000000e+00> : vector<8x512xf32>
      %155 = tpu.matmul %117, %3, %cst_57 {dimension_numbers = #tpu.dot_dimension_numbers<[1], [0], [0], [1], [0, 0, 1, 1], [], []>} : vector<8x128xf32>, vector<128x512xf32>, vector<8x512xf32> -> vector<8x512xf32>
      %156 = arith.addf %154, %155 : vector<8x512xf32>
      %157 = vector.extract_strided_slice %156 {offsets = [0, 0], sizes = [8, 128], strides = [1, 1]} : vector<8x512xf32> to vector<8x128xf32>
      %158 = arith.negf %157 : vector<8x128xf32>
      %159 = math.exp %158 : vector<8x128xf32>
      %cst_58 = arith.constant 1.000000e+00 : f32
      %160 = vector.broadcast %cst_58 : f32 to vector<8x128xf32>
      %161 = arith.addf %160, %159 : vector<8x128xf32>
      %162 = arith.divf %160, %161 : vector<8x128xf32>
      %163 = vector.extract_strided_slice %156 {offsets = [0, 128], sizes = [8, 128], strides = [1, 1]} : vector<8x512xf32> to vector<8x128xf32>
      %164 = arith.negf %163 : vector<8x128xf32>
      %165 = math.exp %164 : vector<8x128xf32>
      %cst_59 = arith.constant 1.000000e+00 : f32
      %166 = vector.broadcast %cst_59 : f32 to vector<8x128xf32>
      %167 = arith.addf %166, %165 : vector<8x128xf32>
      %168 = arith.divf %166, %167 : vector<8x128xf32>
      %169 = vector.extract_strided_slice %156 {offsets = [0, 256], sizes = [8, 128], strides = [1, 1]} : vector<8x512xf32> to vector<8x128xf32>
      %170 = math.tanh %169 : vector<8x128xf32>
      %171 = vector.extract_strided_slice %156 {offsets = [0, 384], sizes = [8, 128], strides = [1, 1]} : vector<8x512xf32> to vector<8x128xf32>
      %172 = arith.negf %171 : vector<8x128xf32>
      %173 = math.exp %172 : vector<8x128xf32>
      %cst_60 = arith.constant 1.000000e+00 : f32
      %174 = vector.broadcast %cst_60 : f32 to vector<8x128xf32>
      %175 = arith.addf %174, %173 : vector<8x128xf32>
      %176 = arith.divf %174, %175 : vector<8x128xf32>
      %177 = arith.mulf %170, %162 : vector<8x128xf32>
      %178 = arith.mulf %168, %115 : vector<8x128xf32>
      %179 = arith.addf %177, %178 : vector<8x128xf32>
      %180 = math.tanh %179 : vector<8x128xf32>
      %181 = arith.mulf %176, %180 : vector<8x128xf32>
      %cst_61 = arith.constant dense<0.000000e+00> : vector<8x512xf32>
      %182 = tpu.matmul %181, %4, %cst_61 {dimension_numbers = #tpu.dot_dimension_numbers<[1], [0], [0], [1], [0, 0, 1, 1], [], []>} : vector<8x128xf32>, vector<128x512xf32>, vector<8x512xf32> -> vector<8x512xf32>
      %183 = arith.addf %151, %182 : vector<8x512xf32>
      %184 = vector.extract_strided_slice %183 {offsets = [0, 0], sizes = [8, 128], strides = [1, 1]} : vector<8x512xf32> to vector<8x128xf32>
      %185 = arith.negf %184 : vector<8x128xf32>
      %186 = math.exp %185 : vector<8x128xf32>
      %cst_62 = arith.constant 1.000000e+00 : f32
      %187 = vector.broadcast %cst_62 : f32 to vector<8x128xf32>
      %188 = arith.addf %187, %186 : vector<8x128xf32>
      %189 = arith.divf %187, %188 : vector<8x128xf32>
      %190 = vector.extract_strided_slice %183 {offsets = [0, 128], sizes = [8, 128], strides = [1, 1]} : vector<8x512xf32> to vector<8x128xf32>
      %191 = arith.negf %190 : vector<8x128xf32>
      %192 = math.exp %191 : vector<8x128xf32>
      %cst_63 = arith.constant 1.000000e+00 : f32
      %193 = vector.broadcast %cst_63 : f32 to vector<8x128xf32>
      %194 = arith.addf %193, %192 : vector<8x128xf32>
      %195 = arith.divf %193, %194 : vector<8x128xf32>
      %196 = vector.extract_strided_slice %183 {offsets = [0, 256], sizes = [8, 128], strides = [1, 1]} : vector<8x512xf32> to vector<8x128xf32>
      %197 = math.tanh %196 : vector<8x128xf32>
      %198 = vector.extract_strided_slice %183 {offsets = [0, 384], sizes = [8, 128], strides = [1, 1]} : vector<8x512xf32> to vector<8x128xf32>
      %199 = arith.negf %198 : vector<8x128xf32>
      %200 = math.exp %199 : vector<8x128xf32>
      %cst_64 = arith.constant 1.000000e+00 : f32
      %201 = vector.broadcast %cst_64 : f32 to vector<8x128xf32>
      %202 = arith.addf %201, %200 : vector<8x128xf32>
      %203 = arith.divf %201, %202 : vector<8x128xf32>
      %204 = arith.mulf %197, %189 : vector<8x128xf32>
      %205 = arith.mulf %195, %142 : vector<8x128xf32>
      %206 = arith.addf %204, %205 : vector<8x128xf32>
      %207 = math.tanh %206 : vector<8x128xf32>
      %208 = arith.mulf %203, %207 : vector<8x128xf32>
      %209 = arith.index_cast %149 : i32 to index
      %c0_65 = arith.constant 0 : index
      %c0_66 = arith.constant 0 : index
      %210 = vector.load %arg7[%209, %c0_65, %c0_66] : memref<8x8x128xf32, #tpu.memory_space<vmem>>, vector<1x8x128xf32>
      %211 = vector.shape_cast %210 : vector<1x8x128xf32> to vector<8x128xf32>
      %212 = vector.shape_cast %208 : vector<8x128xf32> to vector<1x8x128xf32>
      tpu.vector_store %arg7[%209, %c0_65, %c0_66], %212 {strides = array<i32>} : memref<8x8x128xf32, #tpu.memory_space<vmem>>, vector<1x8x128xf32>,
      %c3_i32 = arith.constant 3 : i32
      %213 = arith.addi %20, %c3_i32 : i32
      %cst_67 = arith.constant dense<0.000000e+00> : vector<8x512xf32>
      %214 = tpu.matmul %208, %5, %cst_67 {dimension_numbers = #tpu.dot_dimension_numbers<[1], [0], [0], [1], [0, 0, 1, 1], [], []>} : vector<8x128xf32>, vector<128x512xf32>, vector<8x512xf32> -> vector<8x512xf32>
      %215 = arith.addf %214, %8 : vector<8x512xf32>
      %216 = arith.index_cast %213 : i32 to index
      %c0_68 = arith.constant 0 : index
      %c0_69 = arith.constant 0 : index
      %217 = vector.load %arg2[%216, %c0_68, %c0_69] : memref<8x8x512xf32, #tpu.memory_space<vmem>>, vector<1x8x512xf32>
      %218 = vector.shape_cast %217 : vector<1x8x512xf32> to vector<8x512xf32>
      %cst_70 = arith.constant dense<0.000000e+00> : vector<8x512xf32>
      %219 = tpu.matmul %181, %3, %cst_70 {dimension_numbers = #tpu.dot_dimension_numbers<[1], [0], [0], [1], [0, 0, 1, 1], [], []>} : vector<8x128xf32>, vector<128x512xf32>, vector<8x512xf32> -> vector<8x512xf32>
      %220 = arith.addf %218, %219 : vector<8x512xf32>
      %221 = vector.extract_strided_slice %220 {offsets = [0, 0], sizes = [8, 128], strides = [1, 1]} : vector<8x512xf32> to vector<8x128xf32>
      %222 = arith.negf %221 : vector<8x128xf32>
      %223 = math.exp %222 : vector<8x128xf32>
      %cst_71 = arith.constant 1.000000e+00 : f32
      %224 = vector.broadcast %cst_71 : f32 to vector<8x128xf32>
      %225 = arith.addf %224, %223 : vector<8x128xf32>
      %226 = arith.divf %224, %225 : vector<8x128xf32>
      %227 = vector.extract_strided_slice %220 {offsets = [0, 128], sizes = [8, 128], strides = [1, 1]} : vector<8x512xf32> to vector<8x128xf32>
      %228 = arith.negf %227 : vector<8x128xf32>
      %229 = math.exp %228 : vector<8x128xf32>
      %cst_72 = arith.constant 1.000000e+00 : f32
      %230 = vector.broadcast %cst_72 : f32 to vector<8x128xf32>
      %231 = arith.addf %230, %229 : vector<8x128xf32>
      %232 = arith.divf %230, %231 : vector<8x128xf32>
      %233 = vector.extract_strided_slice %220 {offsets = [0, 256], sizes = [8, 128], strides = [1, 1]} : vector<8x512xf32> to vector<8x128xf32>
      %234 = math.tanh %233 : vector<8x128xf32>
      %235 = vector.extract_strided_slice %220 {offsets = [0, 384], sizes = [8, 128], strides = [1, 1]} : vector<8x512xf32> to vector<8x128xf32>
      %236 = arith.negf %235 : vector<8x128xf32>
      %237 = math.exp %236 : vector<8x128xf32>
      %cst_73 = arith.constant 1.000000e+00 : f32
      %238 = vector.broadcast %cst_73 : f32 to vector<8x128xf32>
      %239 = arith.addf %238, %237 : vector<8x128xf32>
      %240 = arith.divf %238, %239 : vector<8x128xf32>
      %241 = arith.mulf %234, %226 : vector<8x128xf32>
      %242 = arith.mulf %232, %179 : vector<8x128xf32>
      %243 = arith.addf %241, %242 : vector<8x128xf32>
      %244 = math.tanh %243 : vector<8x128xf32>
      %245 = arith.mulf %240, %244 : vector<8x128xf32>
      %cst_74 = arith.constant dense<0.000000e+00> : vector<8x512xf32>
      %246 = tpu.matmul %245, %4, %cst_74 {dimension_numbers = #tpu.dot_dimension_numbers<[1], [0], [0], [1], [0, 0, 1, 1], [], []>} : vector<8x128xf32>, vector<128x512xf32>, vector<8x512xf32> -> vector<8x512xf32>
      %247 = arith.addf %215, %246 : vector<8x512xf32>
      %248 = vector.extract_strided_slice %247 {offsets = [0, 0], sizes = [8, 128], strides = [1, 1]} : vector<8x512xf32> to vector<8x128xf32>
      %249 = arith.negf %248 : vector<8x128xf32>
      %250 = math.exp %249 : vector<8x128xf32>
      %cst_75 = arith.constant 1.000000e+00 : f32
      %251 = vector.broadcast %cst_75 : f32 to vector<8x128xf32>
      %252 = arith.addf %251, %250 : vector<8x128xf32>
      %253 = arith.divf %251, %252 : vector<8x128xf32>
      %254 = vector.extract_strided_slice %247 {offsets = [0, 128], sizes = [8, 128], strides = [1, 1]} : vector<8x512xf32> to vector<8x128xf32>
      %255 = arith.negf %254 : vector<8x128xf32>
      %256 = math.exp %255 : vector<8x128xf32>
      %cst_76 = arith.constant 1.000000e+00 : f32
      %257 = vector.broadcast %cst_76 : f32 to vector<8x128xf32>
      %258 = arith.addf %257, %256 : vector<8x128xf32>
      %259 = arith.divf %257, %258 : vector<8x128xf32>
      %260 = vector.extract_strided_slice %247 {offsets = [0, 256], sizes = [8, 128], strides = [1, 1]} : vector<8x512xf32> to vector<8x128xf32>
      %261 = math.tanh %260 : vector<8x128xf32>
      %262 = vector.extract_strided_slice %247 {offsets = [0, 384], sizes = [8, 128], strides = [1, 1]} : vector<8x512xf32> to vector<8x128xf32>
      %263 = arith.negf %262 : vector<8x128xf32>
      %264 = math.exp %263 : vector<8x128xf32>
      %cst_77 = arith.constant 1.000000e+00 : f32
      %265 = vector.broadcast %cst_77 : f32 to vector<8x128xf32>
      %266 = arith.addf %265, %264 : vector<8x128xf32>
      %267 = arith.divf %265, %266 : vector<8x128xf32>
      %268 = arith.mulf %261, %253 : vector<8x128xf32>
      %269 = arith.mulf %259, %206 : vector<8x128xf32>
      %270 = arith.addf %268, %269 : vector<8x128xf32>
      %271 = math.tanh %270 : vector<8x128xf32>
      %272 = arith.mulf %267, %271 : vector<8x128xf32>
      %273 = arith.index_cast %213 : i32 to index
      %c0_78 = arith.constant 0 : index
      %c0_79 = arith.constant 0 : index
      %274 = vector.load %arg7[%273, %c0_78, %c0_79] : memref<8x8x128xf32, #tpu.memory_space<vmem>>, vector<1x8x128xf32>
      %275 = vector.shape_cast %274 : vector<1x8x128xf32> to vector<8x128xf32>
      %276 = vector.shape_cast %272 : vector<8x128xf32> to vector<1x8x128xf32>
      tpu.vector_store %arg7[%273, %c0_78, %c0_79], %276 {strides = array<i32>} : memref<8x8x128xf32, #tpu.memory_space<vmem>>, vector<1x8x128xf32>,
      %c4_i32_80 = arith.constant 4 : i32
      scf.yield %245, %243, %272, %270 : vector<8x128xf32>, vector<8x128xf32>, vector<8x128xf32>, vector<8x128xf32>
    }
    %c2_i32_17 = arith.constant 2 : i32
    %c0_18 = arith.constant 0 : index
    %c0_19 = arith.constant 0 : index
    %15 = vector.load %arg8[%c0_18, %c0_19] : memref<8x128xf32, #tpu.memory_space<vmem>>, vector<8x128xf32>
    tpu.vector_store %arg8[%c0_18, %c0_19], %14#0 {strides = array<i32>} : memref<8x128xf32, #tpu.memory_space<vmem>>, vector<8x128xf32>,
    %c0_20 = arith.constant 0 : index
    %c0_21 = arith.constant 0 : index
    %16 = vector.load %arg9[%c0_20, %c0_21] : memref<8x128xf32, #tpu.memory_space<vmem>>, vector<8x128xf32>
    tpu.vector_store %arg9[%c0_20, %c0_21], %14#1 {strides = array<i32>} : memref<8x128xf32, #tpu.memory_space<vmem>>, vector<8x128xf32>,
    %c0_22 = arith.constant 0 : index
    %c0_23 = arith.constant 0 : index
    %17 = vector.load %arg10[%c0_22, %c0_23] : memref<8x128xf32, #tpu.memory_space<vmem>>, vector<8x128xf32>
    tpu.vector_store %arg10[%c0_22, %c0_23], %14#2 {strides = array<i32>} : memref<8x128xf32, #tpu.memory_space<vmem>>, vector<8x128xf32>,
    %c0_24 = arith.constant 0 : index
    %c0_25 = arith.constant 0 : index
    %18 = vector.load %arg11[%c0_24, %c0_25] : memref<8x128xf32, #tpu.memory_space<vmem>>, vector<8x128xf32>
    tpu.vector_store %arg11[%c0_24, %c0_25], %14#3 {strides = array<i32>} : memref<8x128xf32, #tpu.memory_space<vmem>>, vector<8x128xf32>,
    return
  }
  func.func @transform_0(%arg0: i32, %arg1: i32) -> (i32, i32, i32) {
    %c0_i32 = arith.constant 0 : i32
    %c0_i32_0 = arith.constant 0 : i32
    return %arg1, %arg0, %c0_i32 : i32, i32, i32
  }
  func.func @transform_1(%arg0: i32, %arg1: i32) -> (i32, i32) {
    %c0_i32 = arith.constant 0 : i32
    %c0_i32_0 = arith.constant 0 : i32
    %c0_i32_1 = arith.constant 0 : i32
    return %c0_i32, %c0_i32_0 : i32, i32
  }
  func.func @transform_2(%arg0: i32, %arg1: i32) -> (i32, i32) {
    %c0_i32 = arith.constant 0 : i32
    %c0_i32_0 = arith.constant 0 : i32
    %c0_i32_1 = arith.constant 0 : i32
    return %c0_i32, %c0_i32_0 : i32, i32
  }
  func.func @transform_3(%arg0: i32, %arg1: i32) -> (i32, i32) {
    %c0_i32 = arith.constant 0 : i32
    %c0_i32_0 = arith.constant 0 : i32
    %c0_i32_1 = arith.constant 0 : i32
    return %c0_i32, %c0_i32_0 : i32, i32
  }
  func.func @transform_4(%arg0: i32, %arg1: i32) -> (i32, i32) {
    %c0_i32 = arith.constant 0 : i32
    %c0_i32_0 = arith.constant 0 : i32
    %c0_i32_1 = arith.constant 0 : i32
    return %c0_i32, %c0_i32_0 : i32, i32
  }
  func.func @transform_5(%arg0: i32, %arg1: i32) -> (i32, i32, i32) {
    %c0_i32 = arith.constant 0 : i32
    %c0_i32_0 = arith.constant 0 : i32
    return %arg1, %arg0, %c0_i32 : i32, i32, i32
  }
}

</mosaic_0001>

<llo_original>
// kernel: tpu_custom_call.1
$region0: #{tpu_custom_call.1}
  #allocation0 [shape = 'u32[]', space=smem, size = 0x4, offset = 0x4, fixed_abs, tag = 'smem constant byte address 0x4 - core index']
  #allocation1 [shape = 'u32[144,128]{1,0:T(1,128)}', space=vmem, size = 0x12000, scoped, tag = 'internal scratch']
  #allocation2 [shape = 'f32[8,128]{1,0:T(8,128)}', space=vmem, size = 0x1000, scoped, tag = 'scratch operand']
  #allocation3 [shape = 'f32[8,128]{1,0:T(8,128)}', space=vmem, size = 0x1000, scoped, tag = 'scratch operand']
  #allocation4 [shape = 'f32[8,128]{1,0:T(8,128)}', space=vmem, size = 0x1000, scoped, tag = 'scratch operand']
  #allocation5 [shape = 'f32[8,128]{1,0:T(8,128)}', space=vmem, size = 0x1000, scoped, tag = 'scratch operand']
  %s0 = inlined_call_operand.hbm [shape: f32[16,8,512], index: 0, kind: input, shape index: {}]
  %s1 = inlined_call_operand.hbm [shape: f32[128,512], index: 1, kind: input, shape index: {}]
  %s2 = inlined_call_operand.hbm [shape: f32[128,512], index: 2, kind: input, shape index: {}]
  %s3 = inlined_call_operand.hbm [shape: f32[128,512], index: 3, kind: input, shape index: {}]
  %s4 = inlined_call_operand.vmem [shape: f32[1,512], index: 4, kind: input, shape index: {}]
  %s5 = inlined_call_operand.hbm [shape: f32[16,8,128], index: 5, kind: output, shape index: {}]
  %s6 = sld [smem:[#allocation0]]
  $region80: #{tpu_custom_call.1} parent=0
    _
  %s8 = ssub.s32 1, %s6
  %s9 = scalar_select 0, %s8, %s6
  $region1: #{tpu_custom_call.1} parent=0
    #allocation6 [shape = 'u8[262144]{0}', space=vmem, size = 0x40000, scoped, tag = 'input window, operand 0']
    #allocation7 [shape = 's32[2]{0}', space=sflag, size = 0x8, scoped, tag = 'scoped memory for tpu_custom_call.1']
    #allocation8 [shape = 's32[2]{0}', space=sflag, size = 0x8, scoped, tag = 'scoped memory for tpu_custom_call.1']
    #allocation9 [shape = 'u8[262144]{0}', space=vmem, size = 0x40000, scoped, tag = 'input window, operand 1, single buffered']
    #allocation10 [shape = 's32[1]{0}', space=sflag, size = 0x4, scoped, tag = 'scoped memory for tpu_custom_call.1']
    #allocation11 [shape = 'u8[262144]{0}', space=vmem, size = 0x40000, scoped, tag = 'input window, operand 2, single buffered']
    #allocation12 [shape = 'u8[262144]{0}', space=vmem, size = 0x40000, scoped, tag = 'input window, operand 3, single buffered']
    #allocation13 [shape = 's32[1]{0}', space=sflag, size = 0x4, scoped, tag = 'scoped memory for tpu_custom_call.1']
    #allocation14 [shape = 'u8[65536]{0}', space=vmem, size = 0x10000, scoped, tag = 'output window, operand 0']
    %10 = vsyncpa [#allocation7], 0
    %s11 = scalar_lea.sflag [#allocation7], 1
    %12 = vsyncpa %s11, 0
    %13 = vsyncpa [#allocation10], 0
    %14 = vsyncpa [#allocation13], 0
    %15 = vsyncpa [#allocation8], 0
    %s16 = scalar_lea.sflag [#allocation8], 1
    %17 = vsyncpa %s16, 0
    loop: start=0, step=1, limit=4
    $region2: #{tpu_custom_call.1} parent=1 // loop_pre_header
      _
    $region3: #{tpu_custom_call.1} parent=1 // loop_header
      %s19 = sphi 0, %s23
      %p20 = scmp.ge.s32.totalorder %s19, 4
      %s26 = sphi 0, %s38
      %s27 = sphi 0, %s34
      %s28 = sphi 0, %s26
      %s29 = sphi 0, %s27
      %s30 = sphi 0, %s28
      %s31 = sphi 0, %s29
      %s43 = sphi 0, %s45
      %s46 = sphi 0, %s43
      %s47 = sphi 0, %s46
      %s63 = sphi 0, %s47
      %s67 = sphi 0, %s67
      %s69 = sphi 0, %s67
      %s70 = sphi 0, %s69
      %s84 = sphi 0, %s70
      %s88 = sphi 0, %s88
      %s90 = sphi 0, %s88
      %s91 = sphi 0, %s90
      %s105 = sphi 0, %s91
      %s109 = sphi 0, %s109
      %s111 = sphi 0, %s109
      %s112 = sphi 0, %s111
      %s126 = sphi 0, %s112
      %s130 = sphi 0, %s130
      %s132 = sphi 0, %s130
      %s133 = sphi 0, %s132
      %s147 = sphi 0, %s133
      %s155 = sphi 0, %s157
      %s158 = sphi 0, %s155
      %s159 = sphi 0, %s158
      %s175 = sphi 0, %s159
    $region4: #{tpu_custom_call.1} parent=1 // loop_header_branch
      %22 = sbr.rel (%p20) target = $region8
    $region5: #{tpu_custom_call.1} parent=1 // loop_body
      %s24 = ssub.s32 %s19, 1
      %s25 = ssub.s32 %s19, 2
      %s32 = sadd.s32 1, %s27
      %p33 = scmp.ge.s32.totalorder %s32, 2
      %s34 = scalar_select %p33, 0, %s32
      %s35 = sadd.s32 1, %s26
      %s36 = scalar_select %p33, %s35, %s26
      %p37 = scmp.ge.s32.totalorder %s36, 1
      %s38 = scalar_select %p37, 0, %s36
      %s39 = ssub.s32 %s27, %s34
      %s40 = ssub.s32 %s26, %s38
      %s41 = sor.u32 %s39, %s40
      %p42 = scmp.eq.s32.totalorder %s41, 0
      %s44 = sadd.s32 %s43, 1
      %s45 = scalar_select %p42, %s43, %s44
      %p48 = pneg %p42
      %p49 = scmp.eq.s32.totalorder %s19, 1
      %p50 = por %p48, %p49
      %p51 = scmp.ne.s32.totalorder %s43, %s46
      %p52 = scmp.eq.s32.totalorder %s19, 0
      %p53 = por %p51, %p52
      %p54 = scmp.ne.s32.totalorder %s43, %s46
      %p55 = scmp.eq.s32.totalorder %s24, 1
      %p56 = por %p54, %p55
      %p57 = scmp.ne.s32.totalorder %s46, %s47
      %p58 = scmp.eq.s32.totalorder %s24, 0
      %p59 = por %p57, %p58
      %p60 = scmp.ne.s32.totalorder %s46, %s47
      %p61 = scmp.eq.s32.totalorder %s25, 1
      %p62 = por %p60, %p61
      %p64 = scmp.ne.s32.totalorder %s47, %s63
      %p65 = scmp.eq.s32.totalorder %s25, 0
      %p66 = por %p64, %p65
      %s68 = sadd.s32 %s67, 1
      %p71 = scmp.eq.s32.totalorder %s19, 1
      %p72 = scmp.ne.s32.totalorder %s67, %s69
      %p73 = scmp.eq.s32.totalorder %s19, 0
      %p74 = por %p72, %p73
      %p75 = scmp.ne.s32.totalorder %s67, %s69
      %p76 = scmp.eq.s32.totalorder %s24, 1
      %p77 = por %p75, %p76
      %p78 = scmp.ne.s32.totalorder %s69, %s70
      %p79 = scmp.eq.s32.totalorder %s24, 0
      %p80 = por %p78, %p79
      %p81 = scmp.ne.s32.totalorder %s69, %s70
      %p82 = scmp.eq.s32.totalorder %s25, 1
      %p83 = por %p81, %p82
      %p85 = scmp.ne.s32.totalorder %s70, %s84
      %p86 = scmp.eq.s32.totalorder %s25, 0
      %p87 = por %p85, %p86
      %s89 = sadd.s32 %s88, 1
      %p92 = scmp.eq.s32.totalorder %s19, 1
      %p93 = scmp.ne.s32.totalorder %s88, %s90
      %p94 = scmp.eq.s32.totalorder %s19, 0
      %p95 = por %p93, %p94
      %p96 = scmp.ne.s32.totalorder %s88, %s90
      %p97 = scmp.eq.s32.totalorder %s24, 1
      %p98 = por %p96, %p97
      %p99 = scmp.ne.s32.totalorder %s90, %s91
      %p100 = scmp.eq.s32.totalorder %s24, 0
      %p101 = por %p99, %p100
      %p102 = scmp.ne.s32.totalorder %s90, %s91
      %p103 = scmp.eq.s32.totalorder %s25, 1
      %p104 = por %p102, %p103
      %p106 = scmp.ne.s32.totalorder %s91, %s105
      %p107 = scmp.eq.s32.totalorder %s25, 0
      %p108 = por %p106, %p107
      %s110 = sadd.s32 %s109, 1
      %p113 = scmp.eq.s32.totalorder %s19, 1
      %p114 = scmp.ne.s32.totalorder %s109, %s111
      %p115 = scmp.eq.s32.totalorder %s19, 0
      %p116 = por %p114, %p115
      %p117 = scmp.ne.s32.totalorder %s109, %s111
      %p118 = scmp.eq.s32.totalorder %s24, 1
      %p119 = por %p117, %p118
      %p120 = scmp.ne.s32.totalorder %s111, %s112
      %p121 = scmp.eq.s32.totalorder %s24, 0
      %p122 = por %p120, %p121
      %p123 = scmp.ne.s32.totalorder %s111, %s112
      %p124 = scmp.eq.s32.totalorder %s25, 1
      %p125 = por %p123, %p124
      %p127 = scmp.ne.s32.totalorder %s112, %s126
      %p128 = scmp.eq.s32.totalorder %s25, 0
      %p129 = por %p127, %p128
      %s131 = sadd.s32 %s130, 1
      %p134 = scmp.eq.s32.totalorder %s19, 1
      %p135 = scmp.ne.s32.totalorder %s130, %s132
      %p136 = scmp.eq.s32.totalorder %s19, 0
      %p137 = por %p135, %p136
      %p138 = scmp.ne.s32.totalorder %s130, %s132
      %p139 = scmp.eq.s32.totalorder %s24, 1
      %p140 = por %p138, %p139
      %p141 = scmp.ne.s32.totalorder %s132, %s133
      %p142 = scmp.eq.s32.totalorder %s24, 0
      %p143 = por %p141, %p142
      %p144 = scmp.ne.s32.totalorder %s132, %s133
      %p145 = scmp.eq.s32.totalorder %s25, 1
      %p146 = por %p144, %p145
      %p148 = scmp.ne.s32.totalorder %s133, %s147
      %p149 = scmp.eq.s32.totalorder %s25, 0
      %p150 = por %p148, %p149
      %s151 = ssub.s32 %s27, %s34
      %s152 = ssub.s32 %s26, %s38
      %s153 = sor.u32 %s151, %s152
      %p154 = scmp.eq.s32.totalorder %s153, 0
      %s156 = sadd.s32 %s155, 1
      %s157 = scalar_select %p154, %s155, %s156
      %p160 = pneg %p154
      %p161 = scmp.eq.s32.totalorder %s19, 1
      %p162 = por %p160, %p161
      %p163 = scmp.ne.s32.totalorder %s155, %s158
      %p164 = scmp.eq.s32.totalorder %s19, 0
      %p165 = por %p163, %p164
      %p166 = scmp.ne.s32.totalorder %s155, %s158
      %p167 = scmp.eq.s32.totalorder %s24, 1
      %p168 = por %p166, %p167
      %p169 = scmp.ne.s32.totalorder %s158, %s159
      %p170 = scmp.eq.s32.totalorder %s24, 0
      %p171 = por %p169, %p170
      %p172 = scmp.ne.s32.totalorder %s158, %s159
      %p173 = scmp.eq.s32.totalorder %s25, 1
      %p174 = por %p172, %p173
      %p176 = scmp.ne.s32.totalorder %s159, %s175
      %p177 = scmp.eq.s32.totalorder %s25, 0
      %p178 = por %p176, %p177
      %p179 = scmp.le.s32.totalorder 1, %s19
      %p180 = scmp.lt.s32.totalorder %s19, 3
      %p181 = pnand %p179, %p180
      %p182 = pneg %p181
      // Predicated region
      $region9: #{tpu_custom_call.1} parent=5 // pred_check
        _
      $region10: #{tpu_custom_call.1} parent=5 // pred_check_branch
        %184 = sbr.rel (%p181) target = $region12
      $region11: #{tpu_custom_call.1} parent=5 // pred_region
        %s185 = ssub.s32 %s19, 1
        // Predicated region
        $region13: #{tpu_custom_call.1} parent=11 // pred_check
          %p186 = pneg %p80
        $region14: #{tpu_custom_call.1} parent=11 // pred_check_branch
          %188 = sbr.rel (%p186) target = $region16
        $region15: #{tpu_custom_call.1} parent=11 // pred_region
          %s190 = ssub.s32 8192, 8192
          %191 = vsyncadd [#allocation10], %s190
          %s192 = sshll.u32 [#allocation9], 4
          %s193 = int_to_ptr.vmem [resolvable:$true] %s192
          %198 = dma.hbm_to_vmem [thread:$0]  %s1, 8192, %s193, [#allocation10], 512, 512, 32
        $region16: #{tpu_custom_call.1} parent=11 // pred_fallthru
          _
        // Predicated region
        $region17: #{tpu_custom_call.1} parent=11 // pred_check
          %p199 = pneg %p101
        $region18: #{tpu_custom_call.1} parent=11 // pred_check_branch
          %201 = sbr.rel (%p199) target = $region20
        $region19: #{tpu_custom_call.1} parent=11 // pred_region
          %s203 = ssub.s32 8192, 8192
          %204 = vsyncadd [#allocation10], %s203
          %s205 = sshll.u32 [#allocation11], 4
          %s206 = int_to_ptr.vmem [resolvable:$true] %s205
          %211 = dma.hbm_to_vmem [thread:$0]  %s2, 8192, %s206, [#allocation10], 512, 512, 32
        $region20: #{tpu_custom_call.1} parent=11 // pred_fallthru
          _
        // Predicated region
        $region21: #{tpu_custom_call.1} parent=11 // pred_check
          %p212 = pneg %p122
        $region22: #{tpu_custom_call.1} parent=11 // pred_check_branch
          %214 = sbr.rel (%p212) target = $region24
        $region23: #{tpu_custom_call.1} parent=11 // pred_region
          %s216 = ssub.s32 8192, 8192
          %217 = vsyncadd [#allocation13], %s216
          %s218 = sshll.u32 [#allocation12], 4
          %s219 = int_to_ptr.vmem [resolvable:$true] %s218
          %224 = dma.hbm_to_vmem [thread:$0]  %s3, 8192, %s219, [#allocation13], 512, 512, 32
        $region24: #{tpu_custom_call.1} parent=11 // pred_fallthru
          _
        // Predicated region
        $region25: #{tpu_custom_call.1} parent=11 // pred_check
          %p225 = pneg %p143
        $region26: #{tpu_custom_call.1} parent=11 // pred_check_branch
          %227 = sbr.rel (%p225) target = $region28
        $region27: #{tpu_custom_call.1} parent=11 // pred_region
          _
        $region28: #{tpu_custom_call.1} parent=11 // pred_fallthru
          _
      $region12: #{tpu_custom_call.1} parent=5 // pred_fallthru
        _
      %p228 = scmp.lt.s32.totalorder %s19, 2
      // Predicated region
      $region29: #{tpu_custom_call.1} parent=5 // pred_check
        %p229 = pneg %p228
      $region30: #{tpu_custom_call.1} parent=5 // pred_check_branch
        %231 = sbr.rel (%p229) target = $region32
      $region31: #{tpu_custom_call.1} parent=5 // pred_region
        // Predicated region
        $region33: #{tpu_custom_call.1} parent=31 // pred_check
          %p232 = pneg %p53
        $region34: #{tpu_custom_call.1} parent=31 // pred_check_branch
          %234 = sbr.rel (%p232) target = $region36
        $region35: #{tpu_custom_call.1} parent=31 // pred_region
          %s235 = sand.u32 %s43, 1
          %s236 = scalar_lea.sflag [#allocation7], %s235
          %s237 = sand.u32 %s43, 1
          %s238 = smul.addr %s237, 256
          %s239 = scalar_lea.vmem [#allocation6], %s238
          %s240 = smul.u32 8, %s27
          %s242 = ssub.s32 4096, 4096
          %243 = vsyncadd %s236, %s242
          %s244 = smul.addr %s26, 4
          %s245 = smul.addr %s240, 4
          %s246 = sadd.s32 %s244, %s245
          %s247 = smul.addr %s246, 128
          %s248 = scalar_lea.hbm %s0, %s247
          %s249 = sshll.u32 %s239, 4
          %s250 = int_to_ptr.vmem [resolvable:$true] %s249
          %255 = dma.hbm_to_vmem [thread:$0]  %s248, 4096, %s250, %s236, 512, 512, 32
        $region36: #{tpu_custom_call.1} parent=31 // pred_fallthru
          _
      $region32: #{tpu_custom_call.1} parent=5 // pred_fallthru
        _
      %p256 = scmp.le.s32.totalorder 1, %s19
      %p257 = scmp.lt.s32.totalorder %s19, 3
      %p258 = pnand %p256, %p257
      %p259 = pneg %p258
      // Predicated region
      $region37: #{tpu_custom_call.1} parent=5 // pred_check
        _
      $region38: #{tpu_custom_call.1} parent=5 // pred_check_branch
        %261 = sbr.rel (%p258) target = $region40
      $region39: #{tpu_custom_call.1} parent=5 // pred_region
        %s262 = ssub.s32 %s19, 1
        %s263 = sand.u32 %s46, 1
        %s264 = scalar_lea.sflag [#allocation7], %s263
        %s265 = sand.u32 %s46, 1
        %s266 = smul.addr %s265, 256
        %s267 = scalar_lea.vmem [#allocation6], %s266
        // Predicated region
        $region41: #{tpu_custom_call.1} parent=39 // pred_check
          %p268 = pneg %p59
        $region42: #{tpu_custom_call.1} parent=39 // pred_check_branch
          %270 = sbr.rel (%p268) target = $region44
        $region43: #{tpu_custom_call.1} parent=39 // pred_region
          %271 = dma.done %s264, 4096
        $region44: #{tpu_custom_call.1} parent=39 // pred_fallthru
          _
        // Predicated region
        $region45: #{tpu_custom_call.1} parent=39 // pred_check
          %p272 = pneg %p80
        $region46: #{tpu_custom_call.1} parent=39 // pred_check_branch
          %274 = sbr.rel (%p272) target = $region48
        $region47: #{tpu_custom_call.1} parent=39 // pred_region
          %275 = dma.done [#allocation10], 8192
        $region48: #{tpu_custom_call.1} parent=39 // pred_fallthru
          _
        // Predicated region
        $region49: #{tpu_custom_call.1} parent=39 // pred_check
          %p276 = pneg %p101
        $region50: #{tpu_custom_call.1} parent=39 // pred_check_branch
          %278 = sbr.rel (%p276) target = $region52
        $region51: #{tpu_custom_call.1} parent=39 // pred_region
          %279 = dma.done [#allocation10], 8192
        $region52: #{tpu_custom_call.1} parent=39 // pred_fallthru
          _
        // Predicated region
        $region53: #{tpu_custom_call.1} parent=39 // pred_check
          %p280 = pneg %p122
        $region54: #{tpu_custom_call.1} parent=39 // pred_check_branch
          %282 = sbr.rel (%p280) target = $region56
        $region55: #{tpu_custom_call.1} parent=39 // pred_region
          %283 = dma.done [#allocation13], 8192
        $region56: #{tpu_custom_call.1} parent=39 // pred_fallthru
          _
        %s284 = sand.u32 %s46, 1
        %s285 = scalar_lea.sflag [#allocation7], %s284
        %s286 = sand.u32 %s46, 1
        %s287 = smul.addr %s286, 256
        %s288 = scalar_lea.vmem [#allocation6], %s287
        %p289 = pneg %p59
        %p290 = pneg %p56
        %p291 = pneg %p80
        %p292 = pneg %p77
        %p293 = pneg %p101
        %p294 = pneg %p98
        %p295 = pneg %p122
        %p296 = pneg %p119
        %p297 = pneg %p143
        %p298 = pneg %p140
        %p299 = pneg %p171
        %p300 = pneg %p168
        %s301 = sand.u32 %s158, 1
        %s302 = scalar_lea.sflag [#allocation8], %s301
        %s303 = sand.u32 %s158, 1
        %s304 = smul.addr %s303, 64
        %s305 = scalar_lea.vmem [#allocation14], %s304
        %s306 = smul.u32 8, %s29
        %s307 = smul.u32 8, %s29
        %p308 = scmp.eq.s32.totalorder %s29, 0
        // Predicated region
        $region57: #{tpu_custom_call.1} parent=39 // pred_check
          %p309 = pneg %p308
        $region58: #{tpu_custom_call.1} parent=39 // pred_check_branch
          %311 = sbr.rel (%p309) target = $region60
        $region59: #{tpu_custom_call.1} parent=39 // pred_region
          %312 = vst [vmem:[#allocation2] sm:$0xff] 0.0
          %313 = vst [vmem:[#allocation3] sm:$0xff] 0.0
          %314 = vst [vmem:[#allocation4] sm:$0xff] 0.0
          %315 = vst [vmem:[#allocation5] sm:$0xff] 0.0
        $region60: #{tpu_custom_call.1} parent=39 // pred_fallthru
          _
        %v316 = vld [vmem:[#allocation9] sm:$0xff]
        %v317 = vld [vmem:[#allocation9 + $0x8] sm:$0xff]
        %v318 = vld [vmem:[#allocation9 + $0x10] sm:$0xff]
        %v319 = vld [vmem:[#allocation9 + $0x18] sm:$0xff]
        %v320 = vld [vmem:[#allocation9 + $0x20] sm:$0xff]
        %v321 = vld [vmem:[#allocation9 + $0x28] sm:$0xff]
        %v322 = vld [vmem:[#allocation9 + $0x30] sm:$0xff]
        %v323 = vld [vmem:[#allocation9 + $0x38] sm:$0xff]
        %v324 = vld [vmem:[#allocation9 + $0x40] sm:$0xff]
        %v325 = vld [vmem:[#allocation9 + $0x48] sm:$0xff]
        %v326 = vld [vmem:[#allocation9 + $0x50] sm:$0xff]
        %v327 = vld [vmem:[#allocation9 + $0x58] sm:$0xff]
        %v328 = vld [vmem:[#allocation9 + $0x60] sm:$0xff]
        %v329 = vld [vmem:[#allocation9 + $0x68] sm:$0xff]
        %v330 = vld [vmem:[#allocation9 + $0x70] sm:$0xff]
        %v331 = vld [vmem:[#allocation9 + $0x78] sm:$0xff]
        %v332 = vld [vmem:[#allocation9 + $0x80] sm:$0xff]
        %v333 = vld [vmem:[#allocation9 + $0x88] sm:$0xff]
        %v334 = vld [vmem:[#allocation9 + $0x90] sm:$0xff]
        %v335 = vld [vmem:[#allocation9 + $0x98] sm:$0xff]
        %v336 = vld [vmem:[#allocation9 + $0xa0] sm:$0xff]
        %v337 = vld [vmem:[#allocation9 + $0xa8] sm:$0xff]
        %v338 = vld [vmem:[#allocation9 + $0xb0] sm:$0xff]
        %v339 = vld [vmem:[#allocation9 + $0xb8] sm:$0xff]
        %v340 = vld [vmem:[#allocation9 + $0xc0] sm:$0xff]
        %v341 = vld [vmem:[#allocation9 + $0xc8] sm:$0xff]
        %v342 = vld [vmem:[#allocation9 + $0xd0] sm:$0xff]
        %v343 = vld [vmem:[#allocation9 + $0xd8] sm:$0xff]
        %v344 = vld [vmem:[#allocation9 + $0xe0] sm:$0xff]
        %v345 = vld [vmem:[#allocation9 + $0xe8] sm:$0xff]
        %v346 = vld [vmem:[#allocation9 + $0xf0] sm:$0xff]
        %v347 = vld [vmem:[#allocation9 + $0xf8] sm:$0xff]
        %v348 = vld [vmem:[#allocation9 + $0x100] sm:$0xff]
        %v349 = vld [vmem:[#allocation9 + $0x108] sm:$0xff]
        %v350 = vld [vmem:[#allocation9 + $0x110] sm:$0xff]
        %v351 = vld [vmem:[#allocation9 + $0x118] sm:$0xff]
        %v352 = vld [vmem:[#allocation9 + $0x120] sm:$0xff]
        %v353 = vld [vmem:[#allocation9 + $0x128] sm:$0xff]
        %v354 = vld [vmem:[#allocation9 + $0x130] sm:$0xff]
        %v355 = vld [vmem:[#allocation9 + $0x138] sm:$0xff]
        %v356 = vld [vmem:[#allocation9 + $0x140] sm:$0xff]
        %v357 = vld [vmem:[#allocation9 + $0x148] sm:$0xff]
        %v358 = vld [vmem:[#allocation9 + $0x150] sm:$0xff]
        %v359 = vld [vmem:[#allocation9 + $0x158] sm:$0xff]
        %v360 = vld [vmem:[#allocation9 + $0x160] sm:$0xff]
        %v361 = vld [vmem:[#allocation9 + $0x168] sm:$0xff]
        %v362 = vld [vmem:[#allocation9 + $0x170] sm:$0xff]
        %v363 = vld [vmem:[#allocation9 + $0x178] sm:$0xff]
        %v364 = vld [vmem:[#allocation9 + $0x180] sm:$0xff]
        %v365 = vld [vmem:[#allocation9 + $0x188] sm:$0xff]
        %v366 = vld [vmem:[#allocation9 + $0x190] sm:$0xff]
        %v367 = vld [vmem:[#allocation9 + $0x198] sm:$0xff]
        %v368 = vld [vmem:[#allocation9 + $0x1a0] sm:$0xff]
        %v369 = vld [vmem:[#allocation9 + $0x1a8] sm:$0xff]
        %v370 = vld [vmem:[#allocation9 + $0x1b0] sm:$0xff]
        %v371 = vld [vmem:[#allocation9 + $0x1b8] sm:$0xff]
        %v372 = vld [vmem:[#allocation9 + $0x1c0] sm:$0xff]
        %v373 = vld [vmem:[#allocation9 + $0x1c8] sm:$0xff]
        %v374 = vld [vmem:[#allocation9 + $0x1d0] sm:$0xff]
        %v375 = vld [vmem:[#allocation9 + $0x1d8] sm:$0xff]
        %v376 = vld [vmem:[#allocation9 + $0x1e0] sm:$0xff]
        %v377 = vld [vmem:[#allocation9 + $0x1e8] sm:$0xff]
        %v378 = vld [vmem:[#allocation9 + $0x1f0] sm:$0xff]
        %v379 = vld [vmem:[#allocation9 + $0x1f8] sm:$0xff]
        %v380 = vld [vmem:[#allocation11] sm:$0xff]
        %v381 = vld [vmem:[#allocation11 + $0x8] sm:$0xff]
        %v382 = vld [vmem:[#allocation11 + $0x10] sm:$0xff]
        %v383 = vld [vmem:[#allocation11 + $0x18] sm:$0xff]
        %v384 = vld [vmem:[#allocation11 + $0x20] sm:$0xff]
        %v385 = vld [vmem:[#allocation11 + $0x28] sm:$0xff]
        %v386 = vld [vmem:[#allocation11 + $0x30] sm:$0xff]
        %v387 = vld [vmem:[#allocation11 + $0x38] sm:$0xff]
        %v388 = vld [vmem:[#allocation11 + $0x40] sm:$0xff]
        %v389 = vld [vmem:[#allocation11 + $0x48] sm:$0xff]
        %v390 = vld [vmem:[#allocation11 + $0x50] sm:$0xff]
        %v391 = vld [vmem:[#allocation11 + $0x58] sm:$0xff]
        %v392 = vld [vmem:[#allocation11 + $0x60] sm:$0xff]
        %v393 = vld [vmem:[#allocation11 + $0x68] sm:$0xff]
        %v394 = vld [vmem:[#allocation11 + $0x70] sm:$0xff]
        %v395 = vld [vmem:[#allocation11 + $0x78] sm:$0xff]
        %v396 = vld [vmem:[#allocation11 + $0x80] sm:$0xff]
        %v397 = vld [vmem:[#allocation11 + $0x88] sm:$0xff]
        %v398 = vld [vmem:[#allocation11 + $0x90] sm:$0xff]
        %v399 = vld [vmem:[#allocation11 + $0x98] sm:$0xff]
        %v400 = vld [vmem:[#allocation11 + $0xa0] sm:$0xff]
        %v401 = vld [vmem:[#allocation11 + $0xa8] sm:$0xff]
        %v402 = vld [vmem:[#allocation11 + $0xb0] sm:$0xff]
        %v403 = vld [vmem:[#allocation11 + $0xb8] sm:$0xff]
        %v404 = vld [vmem:[#allocation11 + $0xc0] sm:$0xff]
        %v405 = vld [vmem:[#allocation11 + $0xc8] sm:$0xff]
        %v406 = vld [vmem:[#allocation11 + $0xd0] sm:$0xff]
        %v407 = vld [vmem:[#allocation11 + $0xd8] sm:$0xff]
        %v408 = vld [vmem:[#allocation11 + $0xe0] sm:$0xff]
        %v409 = vld [vmem:[#allocation11 + $0xe8] sm:$0xff]
        %v410 = vld [vmem:[#allocation11 + $0xf0] sm:$0xff]
        %v411 = vld [vmem:[#allocation11 + $0xf8] sm:$0xff]
        %v412 = vld [vmem:[#allocation11 + $0x100] sm:$0xff]
        %v413 = vld [vmem:[#allocation11 + $0x108] sm:$0xff]
        %v414 = vld [vmem:[#allocation11 + $0x110] sm:$0xff]
        %v415 = vld [vmem:[#allocation11 + $0x118] sm:$0xff]
        %v416 = vld [vmem:[#allocation11 + $0x120] sm:$0xff]
        %v417 = vld [vmem:[#allocation11 + $0x128] sm:$0xff]
        %v418 = vld [vmem:[#allocation11 + $0x130] sm:$0xff]
        %v419 = vld [vmem:[#allocation11 + $0x138] sm:$0xff]
        %v420 = vld [vmem:[#allocation11 + $0x140] sm:$0xff]
        %v421 = vld [vmem:[#allocation11 + $0x148] sm:$0xff]
        %v422 = vld [vmem:[#allocation11 + $0x150] sm:$0xff]
        %v423 = vld [vmem:[#allocation11 + $0x158] sm:$0xff]
        %v424 = vld [vmem:[#allocation11 + $0x160] sm:$0xff]
        %v425 = vld [vmem:[#allocation11 + $0x168] sm:$0xff]
        %v426 = vld [vmem:[#allocation11 + $0x170] sm:$0xff]
        %v427 = vld [vmem:[#allocation11 + $0x178] sm:$0xff]
        %v428 = vld [vmem:[#allocation11 + $0x180] sm:$0xff]
        %v429 = vld [vmem:[#allocation11 + $0x188] sm:$0xff]
        %v430 = vld [vmem:[#allocation11 + $0x190] sm:$0xff]
        %v431 = vld [vmem:[#allocation11 + $0x198] sm:$0xff]
        %v432 = vld [vmem:[#allocation11 + $0x1a0] sm:$0xff]
        %v433 = vld [vmem:[#allocation11 + $0x1a8] sm:$0xff]
        %v434 = vld [vmem:[#allocation11 + $0x1b0] sm:$0xff]
        %v435 = vld [vmem:[#allocation11 + $0x1b8] sm:$0xff]
        %v436 = vld [vmem:[#allocation11 + $0x1c0] sm:$0xff]
        %v437 = vld [vmem:[#allocation11 + $0x1c8] sm:$0xff]
        %v438 = vld [vmem:[#allocation11 + $0x1d0] sm:$0xff]
        %v439 = vld [vmem:[#allocation11 + $0x1d8] sm:$0xff]
        %v440 = vld [vmem:[#allocation11 + $0x1e0] sm:$0xff]
        %v441 = vld [vmem:[#allocation11 + $0x1e8] sm:$0xff]
        %v442 = vld [vmem:[#allocation11 + $0x1f0] sm:$0xff]
        %v443 = vld [vmem:[#allocation11 + $0x1f8] sm:$0xff]
        %v444 = vld [vmem:[#allocation12] sm:$0xff]
        %v445 = vld [vmem:[#allocation12 + $0x8] sm:$0xff]
        %v446 = vld [vmem:[#allocation12 + $0x10] sm:$0xff]
        %v447 = vld [vmem:[#allocation12 + $0x18] sm:$0xff]
        %v448 = vld [vmem:[#allocation12 + $0x20] sm:$0xff]
        %v449 = vld [vmem:[#allocation12 + $0x28] sm:$0xff]
        %v450 = vld [vmem:[#allocation12 + $0x30] sm:$0xff]
        %v451 = vld [vmem:[#allocation12 + $0x38] sm:$0xff]
        %v452 = vld [vmem:[#allocation12 + $0x40] sm:$0xff]
        %v453 = vld [vmem:[#allocation12 + $0x48] sm:$0xff]
        %v454 = vld [vmem:[#allocation12 + $0x50] sm:$0xff]
        %v455 = vld [vmem:[#allocation12 + $0x58] sm:$0xff]
        %v456 = vld [vmem:[#allocation12 + $0x60] sm:$0xff]
        %v457 = vld [vmem:[#allocation12 + $0x68] sm:$0xff]
        %v458 = vld [vmem:[#allocation12 + $0x70] sm:$0xff]
        %v459 = vld [vmem:[#allocation12 + $0x78] sm:$0xff]
        %v460 = vld [vmem:[#allocation12 + $0x80] sm:$0xff]
        %v461 = vld [vmem:[#allocation12 + $0x88] sm:$0xff]
        %v462 = vld [vmem:[#allocation12 + $0x90] sm:$0xff]
        %v463 = vld [vmem:[#allocation12 + $0x98] sm:$0xff]
        %v464 = vld [vmem:[#allocation12 + $0xa0] sm:$0xff]
        %v465 = vld [vmem:[#allocation12 + $0xa8] sm:$0xff]
        %v466 = vld [vmem:[#allocation12 + $0xb0] sm:$0xff]
        %v467 = vld [vmem:[#allocation12 + $0xb8] sm:$0xff]
        %v468 = vld [vmem:[#allocation12 + $0xc0] sm:$0xff]
        %v469 = vld [vmem:[#allocation12 + $0xc8] sm:$0xff]
        %v470 = vld [vmem:[#allocation12 + $0xd0] sm:$0xff]
        %v471 = vld [vmem:[#allocation12 + $0xd8] sm:$0xff]
        %v472 = vld [vmem:[#allocation12 + $0xe0] sm:$0xff]
        %v473 = vld [vmem:[#allocation12 + $0xe8] sm:$0xff]
        %v474 = vld [vmem:[#allocation12 + $0xf0] sm:$0xff]
        %v475 = vld [vmem:[#allocation12 + $0xf8] sm:$0xff]
        %v476 = vld [vmem:[#allocation12 + $0x100] sm:$0xff]
        %v477 = vld [vmem:[#allocation12 + $0x108] sm:$0xff]
        %v478 = vld [vmem:[#allocation12 + $0x110] sm:$0xff]
        %v479 = vld [vmem:[#allocation12 + $0x118] sm:$0xff]
        %v480 = vld [vmem:[#allocation12 + $0x120] sm:$0xff]
        %v481 = vld [vmem:[#allocation12 + $0x128] sm:$0xff]
        %v482 = vld [vmem:[#allocation12 + $0x130] sm:$0xff]
        %v483 = vld [vmem:[#allocation12 + $0x138] sm:$0xff]
        %v484 = vld [vmem:[#allocation12 + $0x140] sm:$0xff]
        %v485 = vld [vmem:[#allocation12 + $0x148] sm:$0xff]
        %v486 = vld [vmem:[#allocation12 + $0x150] sm:$0xff]
        %v487 = vld [vmem:[#allocation12 + $0x158] sm:$0xff]
        %v488 = vld [vmem:[#allocation12 + $0x160] sm:$0xff]
        %v489 = vld [vmem:[#allocation12 + $0x168] sm:$0xff]
        %v490 = vld [vmem:[#allocation12 + $0x170] sm:$0xff]
        %v491 = vld [vmem:[#allocation12 + $0x178] sm:$0xff]
        %v492 = vld [vmem:[#allocation12 + $0x180] sm:$0xff]
        %v493 = vld [vmem:[#allocation12 + $0x188] sm:$0xff]
        %v494 = vld [vmem:[#allocation12 + $0x190] sm:$0xff]
        %v495 = vld [vmem:[#allocation12 + $0x198] sm:$0xff]
        %v496 = vld [vmem:[#allocation12 + $0x1a0] sm:$0xff]
        %v497 = vld [vmem:[#allocation12 + $0x1a8] sm:$0xff]
        %v498 = vld [vmem:[#allocation12 + $0x1b0] sm:$0xff]
        %v499 = vld [vmem:[#allocation12 + $0x1b8] sm:$0xff]
        %v500 = vld [vmem:[#allocation12 + $0x1c0] sm:$0xff]
        %v501 = vld [vmem:[#allocation12 + $0x1c8] sm:$0xff]
        %v502 = vld [vmem:[#allocation12 + $0x1d0] sm:$0xff]
        %v503 = vld [vmem:[#allocation12 + $0x1d8] sm:$0xff]
        %v504 = vld [vmem:[#allocation12 + $0x1e0] sm:$0xff]
        %v505 = vld [vmem:[#allocation12 + $0x1e8] sm:$0xff]
        %v506 = vld [vmem:[#allocation12 + $0x1f0] sm:$0xff]
        %v507 = vld [vmem:[#allocation12 + $0x1f8] sm:$0xff]
        %v508 = vld [vmem:[%s4] sm:$0xf]
        %v510 = vlaneseq
        %v511 = vshrl.u32 %v510, 7
        %v512 = vsub.s32 0, %v511
        %v513 = vrot.slane %v508, %v512
        %v514 = vlaneseq
        %v515 = vshrl.u32 %v514, 7
        %v516 = vsub.s32 1, %v515
        %v517 = vrot.slane %v508, %v516
        %v518 = vlaneseq
        %v519 = vshrl.u32 %v518, 7
        %v520 = vsub.s32 2, %v519
        %v521 = vrot.slane %v508, %v520
        %v522 = vlaneseq
        %v523 = vshrl.u32 %v522, 7
        %v524 = vsub.s32 3, %v523
        %v525 = vrot.slane %v508, %v524
        %v530 = vld [vmem:[#allocation2] sm:$0xff]
        %v531 = vld [vmem:[#allocation3] sm:$0xff]
        %v532 = vld [vmem:[#allocation4] sm:$0xff]
        %v533 = vld [vmem:[#allocation5] sm:$0xff]
        loop: start=0, step=1, limit=2
        $region61: #{tpu_custom_call.1} parent=39 // loop_pre_header
          _
        $region62: #{tpu_custom_call.1} parent=39 // loop_header
          %s535 = sphi 0, %s539
          %p536 = scmp.ge.s32.totalorder %s535, 2
          %v540 = vphi %v530, %v2342
          %v541 = vphi %v531, %v2340
          %v542 = vphi %v532, %v2512
          %v543 = vphi %v533, %v2510
        $region63: #{tpu_custom_call.1} parent=39 // loop_header_branch
          %538 = sbr.rel (%p536) target = $region67
        $region64: #{tpu_custom_call.1} parent=39 // loop_body
          %s544 = smul.u32 %s535, 4
          %545 = vmatprep.subr.mxu0 %v445
          %546 = vmatpush1.msra.mxu0 %v444
          %547 = vmatprep.subr.mxu0 %v449
          %548 = vmatpush1.msra.mxu0 %v448
          %549 = vmatprep.subr.mxu0 %v453
          %550 = vmatpush1.msra.mxu0 %v452
          %551 = vmatprep.subr.mxu0 %v457
          %552 = vmatpush1.msra.mxu0 %v456
          %553 = vmatprep.subr.mxu0 %v461
          %554 = vmatpush1.msra.mxu0 %v460
          %555 = vmatprep.subr.mxu0 %v465
          %556 = vmatpush1.msra.mxu0 %v464
          %557 = vmatprep.subr.mxu0 %v469
          %558 = vmatpush1.msra.mxu0 %v468
          %559 = vmatprep.subr.mxu0 %v473
          %560 = vmatpush1.msra.mxu0 %v472
          %561 = vmatprep.subr.mxu0 %v477
          %562 = vmatpush1.msra.mxu0 %v476
          %563 = vmatprep.subr.mxu0 %v481
          %564 = vmatpush1.msra.mxu0 %v480
          %565 = vmatprep.subr.mxu0 %v485
          %566 = vmatpush1.msra.mxu0 %v484
          %567 = vmatprep.subr.mxu0 %v489
          %568 = vmatpush1.msra.mxu0 %v488
          %569 = vmatprep.subr.mxu0 %v493
          %570 = vmatpush1.msra.mxu0 %v492
          %571 = vmatprep.subr.mxu0 %v497
          %572 = vmatpush1.msra.mxu0 %v496
          %573 = vmatprep.subr.mxu0 %v501
          %574 = vmatpush1.msra.mxu0 %v500
          %575 = vmatprep.subr.mxu0 %v505
          %576 = vmatpush1.msra.mxu0 %v504
          %577 = vmatprep.subr.mxu0 0.0
          %578 = vmatpush1.msra.mxu0 0.0
          %579 = vmatprep.subr.mxu0 0.0
          %580 = vmatpush1.msra.mxu0 0.0
          %581 = vmatprep.subr.mxu0 0.0
          %582 = vmatpush1.msra.mxu0 0.0
          %583 = vmatprep.subr.mxu0 0.0
          %584 = vmatpush1.msra.mxu0 0.0
          %585 = vmatprep.subr.mxu0 0.0
          %586 = vmatpush1.msra.mxu0 0.0
          %587 = vmatprep.subr.mxu0 0.0
          %588 = vmatpush1.msra.mxu0 0.0
          %589 = vmatprep.subr.mxu0 0.0
          %590 = vmatpush1.msra.mxu0 0.0
          %591 = vmatprep.subr.mxu0 0.0
          %592 = vmatpush1.msra.mxu0 0.0
          %593 = vmatprep.subr.mxu0 0.0
          %594 = vmatpush1.msra.mxu0 0.0
          %595 = vmatprep.subr.mxu0 0.0
          %596 = vmatpush1.msra.mxu0 0.0
          %597 = vmatprep.subr.mxu0 0.0
          %598 = vmatpush1.msra.mxu0 0.0
          %599 = vmatprep.subr.mxu0 0.0
          %600 = vmatpush1.msra.mxu0 0.0
          %601 = vmatprep.subr.mxu0 0.0
          %602 = vmatpush1.msra.mxu0 0.0
          %603 = vmatprep.subr.mxu0 0.0
          %604 = vmatpush1.msra.mxu0 0.0
          %605 = vmatprep.subr.mxu0 0.0
          %606 = vmatpush1.msra.mxu0 0.0
          %607 = vmatprep.subr.mxu0 0.0
          %608 = vmatpush1.msra.mxu0 0.0
          %609 = vmatprep.mubr.f32.mxu0 0.0
          %610 = vmatmul.mubr.f32.gmra.mrb[0].mxu0 %v542
          %v611 = vpop.f32.mrb[0].mxu0
          %v612 = vadd.f32 %v513, %v611
          %v613 = vpop.f32.mrb[0].mxu0
          %v614 = vadd.f32 %v517, %v613
          %615 = vdwg.mxu0
          %616 = vmatprep.subr.mxu0 %v447
          %617 = vmatpush1.msra.mxu0 %v446
          %618 = vmatprep.subr.mxu0 %v451
          %619 = vmatpush1.msra.mxu0 %v450
          %620 = vmatprep.subr.mxu0 %v455
          %621 = vmatpush1.msra.mxu0 %v454
          %622 = vmatprep.subr.mxu0 %v459
          %623 = vmatpush1.msra.mxu0 %v458
          %624 = vmatprep.subr.mxu0 %v463
          %625 = vmatpush1.msra.mxu0 %v462
          %626 = vmatprep.subr.mxu0 %v467
          %627 = vmatpush1.msra.mxu0 %v466
          %628 = vmatprep.subr.mxu0 %v471
          %629 = vmatpush1.msra.mxu0 %v470
          %630 = vmatprep.subr.mxu0 %v475
          %631 = vmatpush1.msra.mxu0 %v474
          %632 = vmatprep.subr.mxu0 %v479
          %633 = vmatpush1.msra.mxu0 %v478
          %634 = vmatprep.subr.mxu0 %v483
          %635 = vmatpush1.msra.mxu0 %v482
          %636 = vmatprep.subr.mxu0 %v487
          %637 = vmatpush1.msra.mxu0 %v486
          %638 = vmatprep.subr.mxu0 %v491
          %639 = vmatpush1.msra.mxu0 %v490
          %640 = vmatprep.subr.mxu0 %v495
          %641 = vmatpush1.msra.mxu0 %v494
          %642 = vmatprep.subr.mxu0 %v499
          %643 = vmatpush1.msra.mxu0 %v498
          %644 = vmatprep.subr.mxu0 %v503
          %645 = vmatpush1.msra.mxu0 %v502
          %646 = vmatprep.subr.mxu0 %v507
          %647 = vmatpush1.msra.mxu0 %v506
          %648 = vmatprep.subr.mxu0 0.0
          %649 = vmatpush1.msra.mxu0 0.0
          %650 = vmatprep.subr.mxu0 0.0
          %651 = vmatpush1.msra.mxu0 0.0
          %652 = vmatprep.subr.mxu0 0.0
          %653 = vmatpush1.msra.mxu0 0.0
          %654 = vmatprep.subr.mxu0 0.0
          %655 = vmatpush1.msra.mxu0 0.0
          %656 = vmatprep.subr.mxu0 0.0
          %657 = vmatpush1.msra.mxu0 0.0
          %658 = vmatprep.subr.mxu0 0.0
          %659 = vmatpush1.msra.mxu0 0.0
          %660 = vmatprep.subr.mxu0 0.0
          %661 = vmatpush1.msra.mxu0 0.0
          %662 = vmatprep.subr.mxu0 0.0
          %663 = vmatpush1.msra.mxu0 0.0
          %664 = vmatprep.subr.mxu0 0.0
          %665 = vmatpush1.msra.mxu0 0.0
          %666 = vmatprep.subr.mxu0 0.0
          %667 = vmatpush1.msra.mxu0 0.0
          %668 = vmatprep.subr.mxu0 0.0
          %669 = vmatpush1.msra.mxu0 0.0
          %670 = vmatprep.subr.mxu0 0.0
          %671 = vmatpush1.msra.mxu0 0.0
          %672 = vmatprep.subr.mxu0 0.0
          %673 = vmatpush1.msra.mxu0 0.0
          %674 = vmatprep.subr.mxu0 0.0
          %675 = vmatpush1.msra.mxu0 0.0
          %676 = vmatprep.subr.mxu0 0.0
          %677 = vmatpush1.msra.mxu0 0.0
          %678 = vmatprep.subr.mxu0 0.0
          %679 = vmatpush1.msra.mxu0 0.0
          %680 = vmatprep.mubr.f32.mxu0 0.0
          %681 = vmatmul.mubr.f32.gmra.mrb[0].mxu0 %v542
          %v682 = vpop.f32.mrb[0].mxu0
          %v683 = vadd.f32 %v521, %v682
          %v684 = vpop.f32.mrb[0].mxu0
          %v685 = vadd.f32 %v525, %v684
          %686 = vdwg.mxu0
          %s687 = smul.u32 %s544, 4
          %s688 = smul.addr %s687, 8
          %s689 = scalar_lea.vmem %s267, %s688 [#allocation6]
          %v690 = vld [vmem:[%s689] sm:$0xff]
          %v691 = vld [vmem:[%s689 + $0x8] sm:$0xff]
          %v692 = vld [vmem:[%s689 + $0x10] sm:$0xff]
          %v693 = vld [vmem:[%s689 + $0x18] sm:$0xff]
          %694 = vmatprep.subr.mxu0 %v317
          %695 = vmatpush1.msra.mxu0 %v316
          %696 = vmatprep.subr.mxu0 %v321
          %697 = vmatpush1.msra.mxu0 %v320
          %698 = vmatprep.subr.mxu0 %v325
          %699 = vmatpush1.msra.mxu0 %v324
          %700 = vmatprep.subr.mxu0 %v329
          %701 = vmatpush1.msra.mxu0 %v328
          %702 = vmatprep.subr.mxu0 %v333
          %703 = vmatpush1.msra.mxu0 %v332
          %704 = vmatprep.subr.mxu0 %v337
          %705 = vmatpush1.msra.mxu0 %v336
          %706 = vmatprep.subr.mxu0 %v341
          %707 = vmatpush1.msra.mxu0 %v340
          %708 = vmatprep.subr.mxu0 %v345
          %709 = vmatpush1.msra.mxu0 %v344
          %710 = vmatprep.subr.mxu0 %v349
          %711 = vmatpush1.msra.mxu0 %v348
          %712 = vmatprep.subr.mxu0 %v353
          %713 = vmatpush1.msra.mxu0 %v352
          %714 = vmatprep.subr.mxu0 %v357
          %715 = vmatpush1.msra.mxu0 %v356
          %716 = vmatprep.subr.mxu0 %v361
          %717 = vmatpush1.msra.mxu0 %v360
          %718 = vmatprep.subr.mxu0 %v365
          %719 = vmatpush1.msra.mxu0 %v364
          %720 = vmatprep.subr.mxu0 %v369
          %721 = vmatpush1.msra.mxu0 %v368
          %722 = vmatprep.subr.mxu0 %v373
          %723 = vmatpush1.msra.mxu0 %v372
          %724 = vmatprep.subr.mxu0 %v377
          %725 = vmatpush1.msra.mxu0 %v376
          %726 = vmatprep.subr.mxu0 0.0
          %727 = vmatpush1.msra.mxu0 0.0
          %728 = vmatprep.subr.mxu0 0.0
          %729 = vmatpush1.msra.mxu0 0.0
          %730 = vmatprep.subr.mxu0 0.0
          %731 = vmatpush1.msra.mxu0 0.0
          %732 = vmatprep.subr.mxu0 0.0
          %733 = vmatpush1.msra.mxu0 0.0
          %734 = vmatprep.subr.mxu0 0.0
          %735 = vmatpush1.msra.mxu0 0.0
          %736 = vmatprep.subr.mxu0 0.0
          %737 = vmatpush1.msra.mxu0 0.0
          %738 = vmatprep.subr.mxu0 0.0
          %739 = vmatpush1.msra.mxu0 0.0
          %740 = vmatprep.subr.mxu0 0.0
          %741 = vmatpush1.msra.mxu0 0.0
          %742 = vmatprep.subr.mxu0 0.0
          %743 = vmatpush1.msra.mxu0 0.0
          %744 = vmatprep.subr.mxu0 0.0
          %745 = vmatpush1.msra.mxu0 0.0
          %746 = vmatprep.subr.mxu0 0.0
          %747 = vmatpush1.msra.mxu0 0.0
          %748 = vmatprep.subr.mxu0 0.0
          %749 = vmatpush1.msra.mxu0 0.0
          %750 = vmatprep.subr.mxu0 0.0
          %751 = vmatpush1.msra.mxu0 0.0
          %752 = vmatprep.subr.mxu0 0.0
          %753 = vmatpush1.msra.mxu0 0.0
          %754 = vmatprep.subr.mxu0 0.0
          %755 = vmatpush1.msra.mxu0 0.0
          %756 = vmatprep.subr.mxu0 0.0
          %757 = vmatpush1.msra.mxu0 0.0
          %758 = vmatprep.mubr.f32.mxu0 0.0
          %759 = vmatmul.mubr.f32.gmra.mrb[0].mxu0 %v540
          %v760 = vpop.f32.mrb[0].mxu0
          %v761 = vadd.f32 0.0, %v760
          %v762 = vpop.f32.mrb[0].mxu0
          %v763 = vadd.f32 0.0, %v762
          %764 = vdwg.mxu0
          %765 = vmatprep.subr.mxu0 %v319
          %766 = vmatpush1.msra.mxu0 %v318
          %767 = vmatprep.subr.mxu0 %v323
          %768 = vmatpush1.msra.mxu0 %v322
          %769 = vmatprep.subr.mxu0 %v327
          %770 = vmatpush1.msra.mxu0 %v326
          %771 = vmatprep.subr.mxu0 %v331
          %772 = vmatpush1.msra.mxu0 %v330
          %773 = vmatprep.subr.mxu0 %v335
          %774 = vmatpush1.msra.mxu0 %v334
          %775 = vmatprep.subr.mxu0 %v339
          %776 = vmatpush1.msra.mxu0 %v338
          %777 = vmatprep.subr.mxu0 %v343
          %778 = vmatpush1.msra.mxu0 %v342
          %779 = vmatprep.subr.mxu0 %v347
          %780 = vmatpush1.msra.mxu0 %v346
          %781 = vmatprep.subr.mxu0 %v351
          %782 = vmatpush1.msra.mxu0 %v350
          %783 = vmatprep.subr.mxu0 %v355
          %784 = vmatpush1.msra.mxu0 %v354
          %785 = vmatprep.subr.mxu0 %v359
          %786 = vmatpush1.msra.mxu0 %v358
          %787 = vmatprep.subr.mxu0 %v363
          %788 = vmatpush1.msra.mxu0 %v362
          %789 = vmatprep.subr.mxu0 %v367
          %790 = vmatpush1.msra.mxu0 %v366
          %791 = vmatprep.subr.mxu0 %v371
          %792 = vmatpush1.msra.mxu0 %v370
          %793 = vmatprep.subr.mxu0 %v375
          %794 = vmatpush1.msra.mxu0 %v374
          %795 = vmatprep.subr.mxu0 %v379
          %796 = vmatpush1.msra.mxu0 %v378
          %797 = vmatprep.subr.mxu0 0.0
          %798 = vmatpush1.msra.mxu0 0.0
          %799 = vmatprep.subr.mxu0 0.0
          %800 = vmatpush1.msra.mxu0 0.0
          %801 = vmatprep.subr.mxu0 0.0
          %802 = vmatpush1.msra.mxu0 0.0
          %803 = vmatprep.subr.mxu0 0.0
          %804 = vmatpush1.msra.mxu0 0.0
          %805 = vmatprep.subr.mxu0 0.0
          %806 = vmatpush1.msra.mxu0 0.0
          %807 = vmatprep.subr.mxu0 0.0
          %808 = vmatpush1.msra.mxu0 0.0
          %809 = vmatprep.subr.mxu0 0.0
          %810 = vmatpush1.msra.mxu0 0.0
          %811 = vmatprep.subr.mxu0 0.0
          %812 = vmatpush1.msra.mxu0 0.0
          %813 = vmatprep.subr.mxu0 0.0
          %814 = vmatpush1.msra.mxu0 0.0
          %815 = vmatprep.subr.mxu0 0.0
          %816 = vmatpush1.msra.mxu0 0.0
          %817 = vmatprep.subr.mxu0 0.0
          %818 = vmatpush1.msra.mxu0 0.0
          %819 = vmatprep.subr.mxu0 0.0
          %820 = vmatpush1.msra.mxu0 0.0
          %821 = vmatprep.subr.mxu0 0.0
          %822 = vmatpush1.msra.mxu0 0.0
          %823 = vmatprep.subr.mxu0 0.0
          %824 = vmatpush1.msra.mxu0 0.0
          %825 = vmatprep.subr.mxu0 0.0
          %826 = vmatpush1.msra.mxu0 0.0
          %827 = vmatprep.subr.mxu0 0.0
          %828 = vmatpush1.msra.mxu0 0.0
          %829 = vmatprep.mubr.f32.mxu0 0.0
          %830 = vmatmul.mubr.f32.gmra.mrb[0].mxu0 %v540
          %v831 = vpop.f32.mrb[0].mxu0
          %v832 = vadd.f32 0.0, %v831
          %v833 = vpop.f32.mrb[0].mxu0
          %v834 = vadd.f32 0.0, %v833
          %835 = vdwg.mxu0
          %v836 = vadd.f32 %v690, %v761
          %v837 = vadd.f32 %v691, %v763
          %v838 = vadd.f32 %v692, %v832
          %v839 = vadd.f32 %v693, %v834
          %v840 = vxor.u32 %v836, 2147483648
          %v841 = vmul.f32 %v840, 1.442695
          %v842 = vpow.pop %v841
          %v843 = vadd.f32 %v842, 1.0
          %v844 = vrcp.pop %v843
          %v845 = vmul.f32 1.0, %v844
          %v846 = vxor.u32 %v837, 2147483648
          %v847 = vmul.f32 %v846, 1.442695
          %v848 = vpow.pop %v847
          %v849 = vadd.f32 %v848, 1.0
          %v850 = vrcp.pop %v849
          %v851 = vmul.f32 1.0, %v850
          %v852 = vtanh.pop %v838
          %v853 = vxor.u32 %v839, 2147483648
          %v854 = vmul.f32 %v853, 1.442695
          %v855 = vpow.pop %v854
          %v856 = vadd.f32 %v855, 1.0
          %v857 = vrcp.pop %v856
          %v858 = vmul.f32 1.0, %v857
          %v859 = vmul.f32 %v852, %v845
          %v860 = vmul.f32 %v851, %v541
          %v861 = vadd.f32 %v859, %v860
          %v862 = vtanh.pop %v861
          %v863 = vmul.f32 %v858, %v862
          %864 = vmatprep.subr.mxu0 %v381
          %865 = vmatpush1.msra.mxu0 %v380
          %866 = vmatprep.subr.mxu0 %v385
          %867 = vmatpush1.msra.mxu0 %v384
          %868 = vmatprep.subr.mxu0 %v389
          %869 = vmatpush1.msra.mxu0 %v388
          %870 = vmatprep.subr.mxu0 %v393
          %871 = vmatpush1.msra.mxu0 %v392
          %872 = vmatprep.subr.mxu0 %v397
          %873 = vmatpush1.msra.mxu0 %v396
          %874 = vmatprep.subr.mxu0 %v401
          %875 = vmatpush1.msra.mxu0 %v400
          %876 = vmatprep.subr.mxu0 %v405
          %877 = vmatpush1.msra.mxu0 %v404
          %878 = vmatprep.subr.mxu0 %v409
          %879 = vmatpush1.msra.mxu0 %v408
          %880 = vmatprep.subr.mxu0 %v413
          %881 = vmatpush1.msra.mxu0 %v412
          %882 = vmatprep.subr.mxu0 %v417
          %883 = vmatpush1.msra.mxu0 %v416
          %884 = vmatprep.subr.mxu0 %v421
          %885 = vmatpush1.msra.mxu0 %v420
          %886 = vmatprep.subr.mxu0 %v425
          %887 = vmatpush1.msra.mxu0 %v424
          %888 = vmatprep.subr.mxu0 %v429
          %889 = vmatpush1.msra.mxu0 %v428
          %890 = vmatprep.subr.mxu0 %v433
          %891 = vmatpush1.msra.mxu0 %v432
          %892 = vmatprep.subr.mxu0 %v437
          %893 = vmatpush1.msra.mxu0 %v436
          %894 = vmatprep.subr.mxu0 %v441
          %895 = vmatpush1.msra.mxu0 %v440
          %896 = vmatprep.subr.mxu0 0.0
          %897 = vmatpush1.msra.mxu0 0.0
          %898 = vmatprep.subr.mxu0 0.0
          %899 = vmatpush1.msra.mxu0 0.0
          %900 = vmatprep.subr.mxu0 0.0
          %901 = vmatpush1.msra.mxu0 0.0
          %902 = vmatprep.subr.mxu0 0.0
          %903 = vmatpush1.msra.mxu0 0.0
          %904 = vmatprep.subr.mxu0 0.0
          %905 = vmatpush1.msra.mxu0 0.0
          %906 = vmatprep.subr.mxu0 0.0
          %907 = vmatpush1.msra.mxu0 0.0
          %908 = vmatprep.subr.mxu0 0.0
          %909 = vmatpush1.msra.mxu0 0.0
          %910 = vmatprep.subr.mxu0 0.0
          %911 = vmatpush1.msra.mxu0 0.0
          %912 = vmatprep.subr.mxu0 0.0
          %913 = vmatpush1.msra.mxu0 0.0
          %914 = vmatprep.subr.mxu0 0.0
          %915 = vmatpush1.msra.mxu0 0.0
          %916 = vmatprep.subr.mxu0 0.0
          %917 = vmatpush1.msra.mxu0 0.0
          %918 = vmatprep.subr.mxu0 0.0
          %919 = vmatpush1.msra.mxu0 0.0
          %920 = vmatprep.subr.mxu0 0.0
          %921 = vmatpush1.msra.mxu0 0.0
          %922 = vmatprep.subr.mxu0 0.0
          %923 = vmatpush1.msra.mxu0 0.0
          %924 = vmatprep.subr.mxu0 0.0
          %925 = vmatpush1.msra.mxu0 0.0
          %926 = vmatprep.subr.mxu0 0.0
          %927 = vmatpush1.msra.mxu0 0.0
          %928 = vmatprep.mubr.f32.mxu0 0.0
          %929 = vmatmul.mubr.f32.gmra.mrb[0].mxu0 %v863
          %v930 = vpop.f32.mrb[0].mxu0
          %v931 = vadd.f32 0.0, %v930
          %v932 = vpop.f32.mrb[0].mxu0
          %v933 = vadd.f32 0.0, %v932
          %934 = vdwg.mxu0
          %935 = vmatprep.subr.mxu0 %v383
          %936 = vmatpush1.msra.mxu0 %v382
          %937 = vmatprep.subr.mxu0 %v387
          %938 = vmatpush1.msra.mxu0 %v386
          %939 = vmatprep.subr.mxu0 %v391
          %940 = vmatpush1.msra.mxu0 %v390
          %941 = vmatprep.subr.mxu0 %v395
          %942 = vmatpush1.msra.mxu0 %v394
          %943 = vmatprep.subr.mxu0 %v399
          %944 = vmatpush1.msra.mxu0 %v398
          %945 = vmatprep.subr.mxu0 %v403
          %946 = vmatpush1.msra.mxu0 %v402
          %947 = vmatprep.subr.mxu0 %v407
          %948 = vmatpush1.msra.mxu0 %v406
          %949 = vmatprep.subr.mxu0 %v411
          %950 = vmatpush1.msra.mxu0 %v410
          %951 = vmatprep.subr.mxu0 %v415
          %952 = vmatpush1.msra.mxu0 %v414
          %953 = vmatprep.subr.mxu0 %v419
          %954 = vmatpush1.msra.mxu0 %v418
          %955 = vmatprep.subr.mxu0 %v423
          %956 = vmatpush1.msra.mxu0 %v422
          %957 = vmatprep.subr.mxu0 %v427
          %958 = vmatpush1.msra.mxu0 %v426
          %959 = vmatprep.subr.mxu0 %v431
          %960 = vmatpush1.msra.mxu0 %v430
          %961 = vmatprep.subr.mxu0 %v435
          %962 = vmatpush1.msra.mxu0 %v434
          %963 = vmatprep.subr.mxu0 %v439
          %964 = vmatpush1.msra.mxu0 %v438
          %965 = vmatprep.subr.mxu0 %v443
          %966 = vmatpush1.msra.mxu0 %v442
          %967 = vmatprep.subr.mxu0 0.0
          %968 = vmatpush1.msra.mxu0 0.0
          %969 = vmatprep.subr.mxu0 0.0
          %970 = vmatpush1.msra.mxu0 0.0
          %971 = vmatprep.subr.mxu0 0.0
          %972 = vmatpush1.msra.mxu0 0.0
          %973 = vmatprep.subr.mxu0 0.0
          %974 = vmatpush1.msra.mxu0 0.0
          %975 = vmatprep.subr.mxu0 0.0
          %976 = vmatpush1.msra.mxu0 0.0
          %977 = vmatprep.subr.mxu0 0.0
          %978 = vmatpush1.msra.mxu0 0.0
          %979 = vmatprep.subr.mxu0 0.0
          %980 = vmatpush1.msra.mxu0 0.0
          %981 = vmatprep.subr.mxu0 0.0
          %982 = vmatpush1.msra.mxu0 0.0
          %983 = vmatprep.subr.mxu0 0.0
          %984 = vmatpush1.msra.mxu0 0.0
          %985 = vmatprep.subr.mxu0 0.0
          %986 = vmatpush1.msra.mxu0 0.0
          %987 = vmatprep.subr.mxu0 0.0
          %988 = vmatpush1.msra.mxu0 0.0
          %989 = vmatprep.subr.mxu0 0.0
          %990 = vmatpush1.msra.mxu0 0.0
          %991 = vmatprep.subr.mxu0 0.0
          %992 = vmatpush1.msra.mxu0 0.0
          %993 = vmatprep.subr.mxu0 0.0
          %994 = vmatpush1.msra.mxu0 0.0
          %995 = vmatprep.subr.mxu0 0.0
          %996 = vmatpush1.msra.mxu0 0.0
          %997 = vmatprep.subr.mxu0 0.0
          %998 = vmatpush1.msra.mxu0 0.0
          %999 = vmatprep.mubr.f32.mxu0 0.0
          %1000 = vmatmul.mubr.f32.gmra.mrb[0].mxu0 %v863
          %v1001 = vpop.f32.mrb[0].mxu0
          %v1002 = vadd.f32 0.0, %v1001
          %v1003 = vpop.f32.mrb[0].mxu0
          %v1004 = vadd.f32 0.0, %v1003
          %1005 = vdwg.mxu0
          %v1006 = vadd.f32 %v612, %v931
          %v1007 = vadd.f32 %v614, %v933
          %v1008 = vadd.f32 %v683, %v1002
          %v1009 = vadd.f32 %v685, %v1004
          %v1010 = vxor.u32 %v1006, 2147483648
          %v1011 = vmul.f32 %v1010, 1.442695
          %v1012 = vpow.pop %v1011
          %v1013 = vadd.f32 %v1012, 1.0
          %v1014 = vrcp.pop %v1013
          %v1015 = vmul.f32 1.0, %v1014
          %v1016 = vxor.u32 %v1007, 2147483648
          %v1017 = vmul.f32 %v1016, 1.442695
          %v1018 = vpow.pop %v1017
          %v1019 = vadd.f32 %v1018, 1.0
          %v1020 = vrcp.pop %v1019
          %v1021 = vmul.f32 1.0, %v1020
          %v1022 = vtanh.pop %v1008
          %v1023 = vxor.u32 %v1009, 2147483648
          %v1024 = vmul.f32 %v1023, 1.442695
          %v1025 = vpow.pop %v1024
          %v1026 = vadd.f32 %v1025, 1.0
          %v1027 = vrcp.pop %v1026
          %v1028 = vmul.f32 1.0, %v1027
          %v1029 = vmul.f32 %v1022, %v1015
          %v1030 = vmul.f32 %v1021, %v543
          %v1031 = vadd.f32 %v1029, %v1030
          %v1032 = vtanh.pop %v1031
          %v1033 = vmul.f32 %v1028, %v1032
          %s1034 = smul.u32 %s544, 8
          %s1035 = scalar_lea.vmem %s305, %s1034 [#allocation14]
          %1036 = vst [vmem:[%s1035] sm:$0xff] %v1033
          %s1037 = sadd.s32 %s544, 1
          %1038 = vmatprep.subr.mxu0 %v445
          %1039 = vmatpush1.msra.mxu0 %v444
          %1040 = vmatprep.subr.mxu0 %v449
          %1041 = vmatpush1.msra.mxu0 %v448
          %1042 = vmatprep.subr.mxu0 %v453
          %1043 = vmatpush1.msra.mxu0 %v452
          %1044 = vmatprep.subr.mxu0 %v457
          %1045 = vmatpush1.msra.mxu0 %v456
          %1046 = vmatprep.subr.mxu0 %v461
          %1047 = vmatpush1.msra.mxu0 %v460
          %1048 = vmatprep.subr.mxu0 %v465
          %1049 = vmatpush1.msra.mxu0 %v464
          %1050 = vmatprep.subr.mxu0 %v469
          %1051 = vmatpush1.msra.mxu0 %v468
          %1052 = vmatprep.subr.mxu0 %v473
          %1053 = vmatpush1.msra.mxu0 %v472
          %1054 = vmatprep.subr.mxu0 %v477
          %1055 = vmatpush1.msra.mxu0 %v476
          %1056 = vmatprep.subr.mxu0 %v481
          %1057 = vmatpush1.msra.mxu0 %v480
          %1058 = vmatprep.subr.mxu0 %v485
          %1059 = vmatpush1.msra.mxu0 %v484
          %1060 = vmatprep.subr.mxu0 %v489
          %1061 = vmatpush1.msra.mxu0 %v488
          %1062 = vmatprep.subr.mxu0 %v493
          %1063 = vmatpush1.msra.mxu0 %v492
          %1064 = vmatprep.subr.mxu0 %v497
          %1065 = vmatpush1.msra.mxu0 %v496
          %1066 = vmatprep.subr.mxu0 %v501
          %1067 = vmatpush1.msra.mxu0 %v500
          %1068 = vmatprep.subr.mxu0 %v505
          %1069 = vmatpush1.msra.mxu0 %v504
          %1070 = vmatprep.subr.mxu0 0.0
          %1071 = vmatpush1.msra.mxu0 0.0
          %1072 = vmatprep.subr.mxu0 0.0
          %1073 = vmatpush1.msra.mxu0 0.0
          %1074 = vmatprep.subr.mxu0 0.0
          %1075 = vmatpush1.msra.mxu0 0.0
          %1076 = vmatprep.subr.mxu0 0.0
          %1077 = vmatpush1.msra.mxu0 0.0
          %1078 = vmatprep.subr.mxu0 0.0
          %1079 = vmatpush1.msra.mxu0 0.0
          %1080 = vmatprep.subr.mxu0 0.0
          %1081 = vmatpush1.msra.mxu0 0.0
          %1082 = vmatprep.subr.mxu0 0.0
          %1083 = vmatpush1.msra.mxu0 0.0
          %1084 = vmatprep.subr.mxu0 0.0
          %1085 = vmatpush1.msra.mxu0 0.0
          %1086 = vmatprep.subr.mxu0 0.0
          %1087 = vmatpush1.msra.mxu0 0.0
          %1088 = vmatprep.subr.mxu0 0.0
          %1089 = vmatpush1.msra.mxu0 0.0
          %1090 = vmatprep.subr.mxu0 0.0
          %1091 = vmatpush1.msra.mxu0 0.0
          %1092 = vmatprep.subr.mxu0 0.0
          %1093 = vmatpush1.msra.mxu0 0.0
          %1094 = vmatprep.subr.mxu0 0.0
          %1095 = vmatpush1.msra.mxu0 0.0
          %1096 = vmatprep.subr.mxu0 0.0
          %1097 = vmatpush1.msra.mxu0 0.0
          %1098 = vmatprep.subr.mxu0 0.0
          %1099 = vmatpush1.msra.mxu0 0.0
          %1100 = vmatprep.subr.mxu0 0.0
          %1101 = vmatpush1.msra.mxu0 0.0
          %1102 = vmatprep.mubr.f32.mxu0 0.0
          %1103 = vmatmul.mubr.f32.gmra.mrb[0].mxu0 %v1033
          %v1104 = vpop.f32.mrb[0].mxu0
          %v1105 = vadd.f32 %v513, %v1104
          %v1106 = vpop.f32.mrb[0].mxu0
          %v1107 = vadd.f32 %v517, %v1106
          %1108 = vdwg.mxu0
          %1109 = vmatprep.subr.mxu0 %v447
          %1110 = vmatpush1.msra.mxu0 %v446
          %1111 = vmatprep.subr.mxu0 %v451
          %1112 = vmatpush1.msra.mxu0 %v450
          %1113 = vmatprep.subr.mxu0 %v455
          %1114 = vmatpush1.msra.mxu0 %v454
          %1115 = vmatprep.subr.mxu0 %v459
          %1116 = vmatpush1.msra.mxu0 %v458
          %1117 = vmatprep.subr.mxu0 %v463
          %1118 = vmatpush1.msra.mxu0 %v462
          %1119 = vmatprep.subr.mxu0 %v467
          %1120 = vmatpush1.msra.mxu0 %v466
          %1121 = vmatprep.subr.mxu0 %v471
          %1122 = vmatpush1.msra.mxu0 %v470
          %1123 = vmatprep.subr.mxu0 %v475
          %1124 = vmatpush1.msra.mxu0 %v474
          %1125 = vmatprep.subr.mxu0 %v479
          %1126 = vmatpush1.msra.mxu0 %v478
          %1127 = vmatprep.subr.mxu0 %v483
          %1128 = vmatpush1.msra.mxu0 %v482
          %1129 = vmatprep.subr.mxu0 %v487
          %1130 = vmatpush1.msra.mxu0 %v486
          %1131 = vmatprep.subr.mxu0 %v491
          %1132 = vmatpush1.msra.mxu0 %v490
          %1133 = vmatprep.subr.mxu0 %v495
          %1134 = vmatpush1.msra.mxu0 %v494
          %1135 = vmatprep.subr.mxu0 %v499
          %1136 = vmatpush1.msra.mxu0 %v498
          %1137 = vmatprep.subr.mxu0 %v503
          %1138 = vmatpush1.msra.mxu0 %v502
          %1139 = vmatprep.subr.mxu0 %v507
          %1140 = vmatpush1.msra.mxu0 %v506
          %1141 = vmatprep.subr.mxu0 0.0
          %1142 = vmatpush1.msra.mxu0 0.0
          %1143 = vmatprep.subr.mxu0 0.0
          %1144 = vmatpush1.msra.mxu0 0.0
          %1145 = vmatprep.subr.mxu0 0.0
          %1146 = vmatpush1.msra.mxu0 0.0
          %1147 = vmatprep.subr.mxu0 0.0
          %1148 = vmatpush1.msra.mxu0 0.0
          %1149 = vmatprep.subr.mxu0 0.0
          %1150 = vmatpush1.msra.mxu0 0.0
          %1151 = vmatprep.subr.mxu0 0.0
          %1152 = vmatpush1.msra.mxu0 0.0
          %1153 = vmatprep.subr.mxu0 0.0
          %1154 = vmatpush1.msra.mxu0 0.0
          %1155 = vmatprep.subr.mxu0 0.0
          %1156 = vmatpush1.msra.mxu0 0.0
          %1157 = vmatprep.subr.mxu0 0.0
          %1158 = vmatpush1.msra.mxu0 0.0
          %1159 = vmatprep.subr.mxu0 0.0
          %1160 = vmatpush1.msra.mxu0 0.0
          %1161 = vmatprep.subr.mxu0 0.0
          %1162 = vmatpush1.msra.mxu0 0.0
          %1163 = vmatprep.subr.mxu0 0.0
          %1164 = vmatpush1.msra.mxu0 0.0
          %1165 = vmatprep.subr.mxu0 0.0
          %1166 = vmatpush1.msra.mxu0 0.0
          %1167 = vmatprep.subr.mxu0 0.0
          %1168 = vmatpush1.msra.mxu0 0.0
          %1169 = vmatprep.subr.mxu0 0.0
          %1170 = vmatpush1.msra.mxu0 0.0
          %1171 = vmatprep.subr.mxu0 0.0
          %1172 = vmatpush1.msra.mxu0 0.0
          %1173 = vmatprep.mubr.f32.mxu0 0.0
          %1174 = vmatmul.mubr.f32.gmra.mrb[0].mxu0 %v1033
          %v1175 = vpop.f32.mrb[0].mxu0
          %v1176 = vadd.f32 %v521, %v1175
          %v1177 = vpop.f32.mrb[0].mxu0
          %v1178 = vadd.f32 %v525, %v1177
          %1179 = vdwg.mxu0
          %s1180 = smul.u32 %s1037, 4
          %s1181 = smul.addr %s1180, 8
          %s1182 = scalar_lea.vmem %s267, %s1181 [#allocation6]
          %v1183 = vld [vmem:[%s1182] sm:$0xff]
          %v1184 = vld [vmem:[%s1182 + $0x8] sm:$0xff]
          %v1185 = vld [vmem:[%s1182 + $0x10] sm:$0xff]
          %v1186 = vld [vmem:[%s1182 + $0x18] sm:$0xff]
          %1187 = vmatprep.subr.mxu0 %v317
          %1188 = vmatpush1.msra.mxu0 %v316
          %1189 = vmatprep.subr.mxu0 %v321
          %1190 = vmatpush1.msra.mxu0 %v320
          %1191 = vmatprep.subr.mxu0 %v325
          %1192 = vmatpush1.msra.mxu0 %v324
          %1193 = vmatprep.subr.mxu0 %v329
          %1194 = vmatpush1.msra.mxu0 %v328
          %1195 = vmatprep.subr.mxu0 %v333
          %1196 = vmatpush1.msra.mxu0 %v332
          %1197 = vmatprep.subr.mxu0 %v337
          %1198 = vmatpush1.msra.mxu0 %v336
          %1199 = vmatprep.subr.mxu0 %v341
          %1200 = vmatpush1.msra.mxu0 %v340
          %1201 = vmatprep.subr.mxu0 %v345
          %1202 = vmatpush1.msra.mxu0 %v344
          %1203 = vmatprep.subr.mxu0 %v349
          %1204 = vmatpush1.msra.mxu0 %v348
          %1205 = vmatprep.subr.mxu0 %v353
          %1206 = vmatpush1.msra.mxu0 %v352
          %1207 = vmatprep.subr.mxu0 %v357
          %1208 = vmatpush1.msra.mxu0 %v356
          %1209 = vmatprep.subr.mxu0 %v361
          %1210 = vmatpush1.msra.mxu0 %v360
          %1211 = vmatprep.subr.mxu0 %v365
          %1212 = vmatpush1.msra.mxu0 %v364
          %1213 = vmatprep.subr.mxu0 %v369
          %1214 = vmatpush1.msra.mxu0 %v368
          %1215 = vmatprep.subr.mxu0 %v373
          %1216 = vmatpush1.msra.mxu0 %v372
          %1217 = vmatprep.subr.mxu0 %v377
          %1218 = vmatpush1.msra.mxu0 %v376
          %1219 = vmatprep.subr.mxu0 0.0
          %1220 = vmatpush1.msra.mxu0 0.0
          %1221 = vmatprep.subr.mxu0 0.0
          %1222 = vmatpush1.msra.mxu0 0.0
          %1223 = vmatprep.subr.mxu0 0.0
          %1224 = vmatpush1.msra.mxu0 0.0
          %1225 = vmatprep.subr.mxu0 0.0
          %1226 = vmatpush1.msra.mxu0 0.0
          %1227 = vmatprep.subr.mxu0 0.0
          %1228 = vmatpush1.msra.mxu0 0.0
          %1229 = vmatprep.subr.mxu0 0.0
          %1230 = vmatpush1.msra.mxu0 0.0
          %1231 = vmatprep.subr.mxu0 0.0
          %1232 = vmatpush1.msra.mxu0 0.0
          %1233 = vmatprep.subr.mxu0 0.0
          %1234 = vmatpush1.msra.mxu0 0.0
          %1235 = vmatprep.subr.mxu0 0.0
          %1236 = vmatpush1.msra.mxu0 0.0
          %1237 = vmatprep.subr.mxu0 0.0
          %1238 = vmatpush1.msra.mxu0 0.0
          %1239 = vmatprep.subr.mxu0 0.0
          %1240 = vmatpush1.msra.mxu0 0.0
          %1241 = vmatprep.subr.mxu0 0.0
          %1242 = vmatpush1.msra.mxu0 0.0
          %1243 = vmatprep.subr.mxu0 0.0
          %1244 = vmatpush1.msra.mxu0 0.0
          %1245 = vmatprep.subr.mxu0 0.0
          %1246 = vmatpush1.msra.mxu0 0.0
          %1247 = vmatprep.subr.mxu0 0.0
          %1248 = vmatpush1.msra.mxu0 0.0
          %1249 = vmatprep.subr.mxu0 0.0
          %1250 = vmatpush1.msra.mxu0 0.0
          %1251 = vmatprep.mubr.f32.mxu0 0.0
          %1252 = vmatmul.mubr.f32.gmra.mrb[0].mxu0 %v863
          %v1253 = vpop.f32.mrb[0].mxu0
          %v1254 = vadd.f32 0.0, %v1253
          %v1255 = vpop.f32.mrb[0].mxu0
          %v1256 = vadd.f32 0.0, %v1255
          %1257 = vdwg.mxu0
          %1258 = vmatprep.subr.mxu0 %v319
          %1259 = vmatpush1.msra.mxu0 %v318
          %1260 = vmatprep.subr.mxu0 %v323
          %1261 = vmatpush1.msra.mxu0 %v322
          %1262 = vmatprep.subr.mxu0 %v327
          %1263 = vmatpush1.msra.mxu0 %v326
          %1264 = vmatprep.subr.mxu0 %v331
          %1265 = vmatpush1.msra.mxu0 %v330
          %1266 = vmatprep.subr.mxu0 %v335
          %1267 = vmatpush1.msra.mxu0 %v334
          %1268 = vmatprep.subr.mxu0 %v339
          %1269 = vmatpush1.msra.mxu0 %v338
          %1270 = vmatprep.subr.mxu0 %v343
          %1271 = vmatpush1.msra.mxu0 %v342
          %1272 = vmatprep.subr.mxu0 %v347
          %1273 = vmatpush1.msra.mxu0 %v346
          %1274 = vmatprep.subr.mxu0 %v351
          %1275 = vmatpush1.msra.mxu0 %v350
          %1276 = vmatprep.subr.mxu0 %v355
          %1277 = vmatpush1.msra.mxu0 %v354
          %1278 = vmatprep.subr.mxu0 %v359
          %1279 = vmatpush1.msra.mxu0 %v358
          %1280 = vmatprep.subr.mxu0 %v363
          %1281 = vmatpush1.msra.mxu0 %v362
          %1282 = vmatprep.subr.mxu0 %v367
          %1283 = vmatpush1.msra.mxu0 %v366
          %1284 = vmatprep.subr.mxu0 %v371
          %1285 = vmatpush1.msra.mxu0 %v370
          %1286 = vmatprep.subr.mxu0 %v375
          %1287 = vmatpush1.msra.mxu0 %v374
          %1288 = vmatprep.subr.mxu0 %v379
          %1289 = vmatpush1.msra.mxu0 %v378
          %1290 = vmatprep.subr.mxu0 0.0
          %1291 = vmatpush1.msra.mxu0 0.0
          %1292 = vmatprep.subr.mxu0 0.0
          %1293 = vmatpush1.msra.mxu0 0.0
          %1294 = vmatprep.subr.mxu0 0.0
          %1295 = vmatpush1.msra.mxu0 0.0
          %1296 = vmatprep.subr.mxu0 0.0
          %1297 = vmatpush1.msra.mxu0 0.0
          %1298 = vmatprep.subr.mxu0 0.0
          %1299 = vmatpush1.msra.mxu0 0.0
          %1300 = vmatprep.subr.mxu0 0.0
          %1301 = vmatpush1.msra.mxu0 0.0
          %1302 = vmatprep.subr.mxu0 0.0
          %1303 = vmatpush1.msra.mxu0 0.0
          %1304 = vmatprep.subr.mxu0 0.0
          %1305 = vmatpush1.msra.mxu0 0.0
          %1306 = vmatprep.subr.mxu0 0.0
          %1307 = vmatpush1.msra.mxu0 0.0
          %1308 = vmatprep.subr.mxu0 0.0
          %1309 = vmatpush1.msra.mxu0 0.0
          %1310 = vmatprep.subr.mxu0 0.0
          %1311 = vmatpush1.msra.mxu0 0.0
          %1312 = vmatprep.subr.mxu0 0.0
          %1313 = vmatpush1.msra.mxu0 0.0
          %1314 = vmatprep.subr.mxu0 0.0
          %1315 = vmatpush1.msra.mxu0 0.0
          %1316 = vmatprep.subr.mxu0 0.0
          %1317 = vmatpush1.msra.mxu0 0.0
          %1318 = vmatprep.subr.mxu0 0.0
          %1319 = vmatpush1.msra.mxu0 0.0
          %1320 = vmatprep.subr.mxu0 0.0
          %1321 = vmatpush1.msra.mxu0 0.0
          %1322 = vmatprep.mubr.f32.mxu0 0.0
          %1323 = vmatmul.mubr.f32.gmra.mrb[0].mxu0 %v863
          %v1324 = vpop.f32.mrb[0].mxu0
          %v1325 = vadd.f32 0.0, %v1324
          %v1326 = vpop.f32.mrb[0].mxu0
          %v1327 = vadd.f32 0.0, %v1326
          %1328 = vdwg.mxu0
          %v1329 = vadd.f32 %v1183, %v1254
          %v1330 = vadd.f32 %v1184, %v1256
          %v1331 = vadd.f32 %v1185, %v1325
          %v1332 = vadd.f32 %v1186, %v1327
          %v1333 = vxor.u32 %v1329, 2147483648
          %v1334 = vmul.f32 %v1333, 1.442695
          %v1335 = vpow.pop %v1334
          %v1336 = vadd.f32 %v1335, 1.0
          %v1337 = vrcp.pop %v1336
          %v1338 = vmul.f32 1.0, %v1337
          %v1339 = vxor.u32 %v1330, 2147483648
          %v1340 = vmul.f32 %v1339, 1.442695
          %v1341 = vpow.pop %v1340
          %v1342 = vadd.f32 %v1341, 1.0
          %v1343 = vrcp.pop %v1342
          %v1344 = vmul.f32 1.0, %v1343
          %v1345 = vtanh.pop %v1331
          %v1346 = vxor.u32 %v1332, 2147483648
          %v1347 = vmul.f32 %v1346, 1.442695
          %v1348 = vpow.pop %v1347
          %v1349 = vadd.f32 %v1348, 1.0
          %v1350 = vrcp.pop %v1349
          %v1351 = vmul.f32 1.0, %v1350
          %v1352 = vmul.f32 %v1345, %v1338
          %v1353 = vmul.f32 %v1344, %v861
          %v1354 = vadd.f32 %v1352, %v1353
          %v1355 = vtanh.pop %v1354
          %v1356 = vmul.f32 %v1351, %v1355
          %1357 = vmatprep.subr.mxu0 %v381
          %1358 = vmatpush1.msra.mxu0 %v380
          %1359 = vmatprep.subr.mxu0 %v385
          %1360 = vmatpush1.msra.mxu0 %v384
          %1361 = vmatprep.subr.mxu0 %v389
          %1362 = vmatpush1.msra.mxu0 %v388
          %1363 = vmatprep.subr.mxu0 %v393
          %1364 = vmatpush1.msra.mxu0 %v392
          %1365 = vmatprep.subr.mxu0 %v397
          %1366 = vmatpush1.msra.mxu0 %v396
          %1367 = vmatprep.subr.mxu0 %v401
          %1368 = vmatpush1.msra.mxu0 %v400
          %1369 = vmatprep.subr.mxu0 %v405
          %1370 = vmatpush1.msra.mxu0 %v404
          %1371 = vmatprep.subr.mxu0 %v409
          %1372 = vmatpush1.msra.mxu0 %v408
          %1373 = vmatprep.subr.mxu0 %v413
          %1374 = vmatpush1.msra.mxu0 %v412
          %1375 = vmatprep.subr.mxu0 %v417
          %1376 = vmatpush1.msra.mxu0 %v416
          %1377 = vmatprep.subr.mxu0 %v421
          %1378 = vmatpush1.msra.mxu0 %v420
          %1379 = vmatprep.subr.mxu0 %v425
          %1380 = vmatpush1.msra.mxu0 %v424
          %1381 = vmatprep.subr.mxu0 %v429
          %1382 = vmatpush1.msra.mxu0 %v428
          %1383 = vmatprep.subr.mxu0 %v433
          %1384 = vmatpush1.msra.mxu0 %v432
          %1385 = vmatprep.subr.mxu0 %v437
          %1386 = vmatpush1.msra.mxu0 %v436
          %1387 = vmatprep.subr.mxu0 %v441
          %1388 = vmatpush1.msra.mxu0 %v440
          %1389 = vmatprep.subr.mxu0 0.0
          %1390 = vmatpush1.msra.mxu0 0.0
          %1391 = vmatprep.subr.mxu0 0.0
          %1392 = vmatpush1.msra.mxu0 0.0
          %1393 = vmatprep.subr.mxu0 0.0
          %1394 = vmatpush1.msra.mxu0 0.0
          %1395 = vmatprep.subr.mxu0 0.0
          %1396 = vmatpush1.msra.mxu0 0.0
          %1397 = vmatprep.subr.mxu0 0.0
          %1398 = vmatpush1.msra.mxu0 0.0
          %1399 = vmatprep.subr.mxu0 0.0
          %1400 = vmatpush1.msra.mxu0 0.0
          %1401 = vmatprep.subr.mxu0 0.0
          %1402 = vmatpush1.msra.mxu0 0.0
          %1403 = vmatprep.subr.mxu0 0.0
          %1404 = vmatpush1.msra.mxu0 0.0
          %1405 = vmatprep.subr.mxu0 0.0
          %1406 = vmatpush1.msra.mxu0 0.0
          %1407 = vmatprep.subr.mxu0 0.0
          %1408 = vmatpush1.msra.mxu0 0.0
          %1409 = vmatprep.subr.mxu0 0.0
          %1410 = vmatpush1.msra.mxu0 0.0
          %1411 = vmatprep.subr.mxu0 0.0
          %1412 = vmatpush1.msra.mxu0 0.0
          %1413 = vmatprep.subr.mxu0 0.0
          %1414 = vmatpush1.msra.mxu0 0.0
          %1415 = vmatprep.subr.mxu0 0.0
          %1416 = vmatpush1.msra.mxu0 0.0
          %1417 = vmatprep.subr.mxu0 0.0
          %1418 = vmatpush1.msra.mxu0 0.0
          %1419 = vmatprep.subr.mxu0 0.0
          %1420 = vmatpush1.msra.mxu0 0.0
          %1421 = vmatprep.mubr.f32.mxu0 0.0
          %1422 = vmatmul.mubr.f32.gmra.mrb[0].mxu0 %v1356
          %v1423 = vpop.f32.mrb[0].mxu0
          %v1424 = vadd.f32 0.0, %v1423
          %v1425 = vpop.f32.mrb[0].mxu0
          %v1426 = vadd.f32 0.0, %v1425
          %1427 = vdwg.mxu0
          %1428 = vmatprep.subr.mxu0 %v383
          %1429 = vmatpush1.msra.mxu0 %v382
          %1430 = vmatprep.subr.mxu0 %v387
          %1431 = vmatpush1.msra.mxu0 %v386
          %1432 = vmatprep.subr.mxu0 %v391
          %1433 = vmatpush1.msra.mxu0 %v390
          %1434 = vmatprep.subr.mxu0 %v395
          %1435 = vmatpush1.msra.mxu0 %v394
          %1436 = vmatprep.subr.mxu0 %v399
          %1437 = vmatpush1.msra.mxu0 %v398
          %1438 = vmatprep.subr.mxu0 %v403
          %1439 = vmatpush1.msra.mxu0 %v402
          %1440 = vmatprep.subr.mxu0 %v407
          %1441 = vmatpush1.msra.mxu0 %v406
          %1442 = vmatprep.subr.mxu0 %v411
          %1443 = vmatpush1.msra.mxu0 %v410
          %1444 = vmatprep.subr.mxu0 %v415
          %1445 = vmatpush1.msra.mxu0 %v414
          %1446 = vmatprep.subr.mxu0 %v419
          %1447 = vmatpush1.msra.mxu0 %v418
          %1448 = vmatprep.subr.mxu0 %v423
          %1449 = vmatpush1.msra.mxu0 %v422
          %1450 = vmatprep.subr.mxu0 %v427
          %1451 = vmatpush1.msra.mxu0 %v426
          %1452 = vmatprep.subr.mxu0 %v431
          %1453 = vmatpush1.msra.mxu0 %v430
          %1454 = vmatprep.subr.mxu0 %v435
          %1455 = vmatpush1.msra.mxu0 %v434
          %1456 = vmatprep.subr.mxu0 %v439
          %1457 = vmatpush1.msra.mxu0 %v438
          %1458 = vmatprep.subr.mxu0 %v443
          %1459 = vmatpush1.msra.mxu0 %v442
          %1460 = vmatprep.subr.mxu0 0.0
          %1461 = vmatpush1.msra.mxu0 0.0
          %1462 = vmatprep.subr.mxu0 0.0
          %1463 = vmatpush1.msra.mxu0 0.0
          %1464 = vmatprep.subr.mxu0 0.0
          %1465 = vmatpush1.msra.mxu0 0.0
          %1466 = vmatprep.subr.mxu0 0.0
          %1467 = vmatpush1.msra.mxu0 0.0
          %1468 = vmatprep.subr.mxu0 0.0
          %1469 = vmatpush1.msra.mxu0 0.0
          %1470 = vmatprep.subr.mxu0 0.0
          %1471 = vmatpush1.msra.mxu0 0.0
          %1472 = vmatprep.subr.mxu0 0.0
          %1473 = vmatpush1.msra.mxu0 0.0
          %1474 = vmatprep.subr.mxu0 0.0
          %1475 = vmatpush1.msra.mxu0 0.0
          %1476 = vmatprep.subr.mxu0 0.0
          %1477 = vmatpush1.msra.mxu0 0.0
          %1478 = vmatprep.subr.mxu0 0.0
          %1479 = vmatpush1.msra.mxu0 0.0
          %1480 = vmatprep.subr.mxu0 0.0
          %1481 = vmatpush1.msra.mxu0 0.0
          %1482 = vmatprep.subr.mxu0 0.0
          %1483 = vmatpush1.msra.mxu0 0.0
          %1484 = vmatprep.subr.mxu0 0.0
          %1485 = vmatpush1.msra.mxu0 0.0
          %1486 = vmatprep.subr.mxu0 0.0
          %1487 = vmatpush1.msra.mxu0 0.0
          %1488 = vmatprep.subr.mxu0 0.0
          %1489 = vmatpush1.msra.mxu0 0.0
          %1490 = vmatprep.subr.mxu0 0.0
          %1491 = vmatpush1.msra.mxu0 0.0
          %1492 = vmatprep.mubr.f32.mxu0 0.0
          %1493 = vmatmul.mubr.f32.gmra.mrb[0].mxu0 %v1356
          %v1494 = vpop.f32.mrb[0].mxu0
          %v1495 = vadd.f32 0.0, %v1494
          %v1496 = vpop.f32.mrb[0].mxu0
          %v1497 = vadd.f32 0.0, %v1496
          %1498 = vdwg.mxu0
          %v1499 = vadd.f32 %v1105, %v1424
          %v1500 = vadd.f32 %v1107, %v1426
          %v1501 = vadd.f32 %v1176, %v1495
          %v1502 = vadd.f32 %v1178, %v1497
          %v1503 = vxor.u32 %v1499, 2147483648
          %v1504 = vmul.f32 %v1503, 1.442695
          %v1505 = vpow.pop %v1504
          %v1506 = vadd.f32 %v1505, 1.0
          %v1507 = vrcp.pop %v1506
          %v1508 = vmul.f32 1.0, %v1507
          %v1509 = vxor.u32 %v1500, 2147483648
          %v1510 = vmul.f32 %v1509, 1.442695
          %v1511 = vpow.pop %v1510
          %v1512 = vadd.f32 %v1511, 1.0
          %v1513 = vrcp.pop %v1512
          %v1514 = vmul.f32 1.0, %v1513
          %v1515 = vtanh.pop %v1501
          %v1516 = vxor.u32 %v1502, 2147483648
          %v1517 = vmul.f32 %v1516, 1.442695
          %v1518 = vpow.pop %v1517
          %v1519 = vadd.f32 %v1518, 1.0
          %v1520 = vrcp.pop %v1519
          %v1521 = vmul.f32 1.0, %v1520
          %v1522 = vmul.f32 %v1515, %v1508
          %v1523 = vmul.f32 %v1514, %v1031
          %v1524 = vadd.f32 %v1522, %v1523
          %v1525 = vtanh.pop %v1524
          %v1526 = vmul.f32 %v1521, %v1525
          %s1527 = smul.u32 %s1037, 8
          %s1528 = scalar_lea.vmem %s305, %s1527 [#allocation14]
          %1529 = vst [vmem:[%s1528] sm:$0xff] %v1526
          %s1530 = sadd.s32 %s544, 2
          %1531 = vmatprep.subr.mxu0 %v445
          %1532 = vmatpush1.msra.mxu0 %v444
          %1533 = vmatprep.subr.mxu0 %v449
          %1534 = vmatpush1.msra.mxu0 %v448
          %1535 = vmatprep.subr.mxu0 %v453
          %1536 = vmatpush1.msra.mxu0 %v452
          %1537 = vmatprep.subr.mxu0 %v457
          %1538 = vmatpush1.msra.mxu0 %v456
          %1539 = vmatprep.subr.mxu0 %v461
          %1540 = vmatpush1.msra.mxu0 %v460
          %1541 = vmatprep.subr.mxu0 %v465
          %1542 = vmatpush1.msra.mxu0 %v464
          %1543 = vmatprep.subr.mxu0 %v469
          %1544 = vmatpush1.msra.mxu0 %v468
          %1545 = vmatprep.subr.mxu0 %v473
          %1546 = vmatpush1.msra.mxu0 %v472
          %1547 = vmatprep.subr.mxu0 %v477
          %1548 = vmatpush1.msra.mxu0 %v476
          %1549 = vmatprep.subr.mxu0 %v481
          %1550 = vmatpush1.msra.mxu0 %v480
          %1551 = vmatprep.subr.mxu0 %v485
          %1552 = vmatpush1.msra.mxu0 %v484
          %1553 = vmatprep.subr.mxu0 %v489
          %1554 = vmatpush1.msra.mxu0 %v488
          %1555 = vmatprep.subr.mxu0 %v493
          %1556 = vmatpush1.msra.mxu0 %v492
          %1557 = vmatprep.subr.mxu0 %v497
          %1558 = vmatpush1.msra.mxu0 %v496
          %1559 = vmatprep.subr.mxu0 %v501
          %1560 = vmatpush1.msra.mxu0 %v500
          %1561 = vmatprep.subr.mxu0 %v505
          %1562 = vmatpush1.msra.mxu0 %v504
          %1563 = vmatprep.subr.mxu0 0.0
          %1564 = vmatpush1.msra.mxu0 0.0
          %1565 = vmatprep.subr.mxu0 0.0
          %1566 = vmatpush1.msra.mxu0 0.0
          %1567 = vmatprep.subr.mxu0 0.0
          %1568 = vmatpush1.msra.mxu0 0.0
          %1569 = vmatprep.subr.mxu0 0.0
          %1570 = vmatpush1.msra.mxu0 0.0
          %1571 = vmatprep.subr.mxu0 0.0
          %1572 = vmatpush1.msra.mxu0 0.0
          %1573 = vmatprep.subr.mxu0 0.0
          %1574 = vmatpush1.msra.mxu0 0.0
          %1575 = vmatprep.subr.mxu0 0.0
          %1576 = vmatpush1.msra.mxu0 0.0
          %1577 = vmatprep.subr.mxu0 0.0
          %1578 = vmatpush1.msra.mxu0 0.0
          %1579 = vmatprep.subr.mxu0 0.0
          %1580 = vmatpush1.msra.mxu0 0.0
          %1581 = vmatprep.subr.mxu0 0.0
          %1582 = vmatpush1.msra.mxu0 0.0
          %1583 = vmatprep.subr.mxu0 0.0
          %1584 = vmatpush1.msra.mxu0 0.0
          %1585 = vmatprep.subr.mxu0 0.0
          %1586 = vmatpush1.msra.mxu0 0.0
          %1587 = vmatprep.subr.mxu0 0.0
          %1588 = vmatpush1.msra.mxu0 0.0
          %1589 = vmatprep.subr.mxu0 0.0
          %1590 = vmatpush1.msra.mxu0 0.0
          %1591 = vmatprep.subr.mxu0 0.0
          %1592 = vmatpush1.msra.mxu0 0.0
          %1593 = vmatprep.subr.mxu0 0.0
          %1594 = vmatpush1.msra.mxu0 0.0
          %1595 = vmatprep.mubr.f32.mxu0 0.0
          %1596 = vmatmul.mubr.f32.gmra.mrb[0].mxu0 %v1526
          %v1597 = vpop.f32.mrb[0].mxu0
          %v1598 = vadd.f32 %v513, %v1597
          %v1599 = vpop.f32.mrb[0].mxu0
          %v1600 = vadd.f32 %v517, %v1599
          %1601 = vdwg.mxu0
          %1602 = vmatprep.subr.mxu0 %v447
          %1603 = vmatpush1.msra.mxu0 %v446
          %1604 = vmatprep.subr.mxu0 %v451
          %1605 = vmatpush1.msra.mxu0 %v450
          %1606 = vmatprep.subr.mxu0 %v455
          %1607 = vmatpush1.msra.mxu0 %v454
          %1608 = vmatprep.subr.mxu0 %v459
          %1609 = vmatpush1.msra.mxu0 %v458
          %1610 = vmatprep.subr.mxu0 %v463
          %1611 = vmatpush1.msra.mxu0 %v462
          %1612 = vmatprep.subr.mxu0 %v467
          %1613 = vmatpush1.msra.mxu0 %v466
          %1614 = vmatprep.subr.mxu0 %v471
          %1615 = vmatpush1.msra.mxu0 %v470
          %1616 = vmatprep.subr.mxu0 %v475
          %1617 = vmatpush1.msra.mxu0 %v474
          %1618 = vmatprep.subr.mxu0 %v479
          %1619 = vmatpush1.msra.mxu0 %v478
          %1620 = vmatprep.subr.mxu0 %v483
          %1621 = vmatpush1.msra.mxu0 %v482
          %1622 = vmatprep.subr.mxu0 %v487
          %1623 = vmatpush1.msra.mxu0 %v486
          %1624 = vmatprep.subr.mxu0 %v491
          %1625 = vmatpush1.msra.mxu0 %v490
          %1626 = vmatprep.subr.mxu0 %v495
          %1627 = vmatpush1.msra.mxu0 %v494
          %1628 = vmatprep.subr.mxu0 %v499
          %1629 = vmatpush1.msra.mxu0 %v498
          %1630 = vmatprep.subr.mxu0 %v503
          %1631 = vmatpush1.msra.mxu0 %v502
          %1632 = vmatprep.subr.mxu0 %v507
          %1633 = vmatpush1.msra.mxu0 %v506
          %1634 = vmatprep.subr.mxu0 0.0
          %1635 = vmatpush1.msra.mxu0 0.0
          %1636 = vmatprep.subr.mxu0 0.0
          %1637 = vmatpush1.msra.mxu0 0.0
          %1638 = vmatprep.subr.mxu0 0.0
          %1639 = vmatpush1.msra.mxu0 0.0
          %1640 = vmatprep.subr.mxu0 0.0
          %1641 = vmatpush1.msra.mxu0 0.0
          %1642 = vmatprep.subr.mxu0 0.0
          %1643 = vmatpush1.msra.mxu0 0.0
          %1644 = vmatprep.subr.mxu0 0.0
          %1645 = vmatpush1.msra.mxu0 0.0
          %1646 = vmatprep.subr.mxu0 0.0
          %1647 = vmatpush1.msra.mxu0 0.0
          %1648 = vmatprep.subr.mxu0 0.0
          %1649 = vmatpush1.msra.mxu0 0.0
          %1650 = vmatprep.subr.mxu0 0.0
          %1651 = vmatpush1.msra.mxu0 0.0
          %1652 = vmatprep.subr.mxu0 0.0
          %1653 = vmatpush1.msra.mxu0 0.0
          %1654 = vmatprep.subr.mxu0 0.0
          %1655 = vmatpush1.msra.mxu0 0.0
          %1656 = vmatprep.subr.mxu0 0.0
          %1657 = vmatpush1.msra.mxu0 0.0
          %1658 = vmatprep.subr.mxu0 0.0
          %1659 = vmatpush1.msra.mxu0 0.0
          %1660 = vmatprep.subr.mxu0 0.0
          %1661 = vmatpush1.msra.mxu0 0.0
          %1662 = vmatprep.subr.mxu0 0.0
          %1663 = vmatpush1.msra.mxu0 0.0
          %1664 = vmatprep.subr.mxu0 0.0
          %1665 = vmatpush1.msra.mxu0 0.0
          %1666 = vmatprep.mubr.f32.mxu0 0.0
          %1667 = vmatmul.mubr.f32.gmra.mrb[0].mxu0 %v1526
          %v1668 = vpop.f32.mrb[0].mxu0
          %v1669 = vadd.f32 %v521, %v1668
          %v1670 = vpop.f32.mrb[0].mxu0
          %v1671 = vadd.f32 %v525, %v1670
          %1672 = vdwg.mxu0
          %s1673 = smul.u32 %s1530, 4
          %s1674 = smul.addr %s1673, 8
          %s1675 = scalar_lea.vmem %s267, %s1674 [#allocation6]
          %v1676 = vld [vmem:[%s1675] sm:$0xff]
          %v1677 = vld [vmem:[%s1675 + $0x8] sm:$0xff]
          %v1678 = vld [vmem:[%s1675 + $0x10] sm:$0xff]
          %v1679 = vld [vmem:[%s1675 + $0x18] sm:$0xff]
          %1680 = vmatprep.subr.mxu0 %v317
          %1681 = vmatpush1.msra.mxu0 %v316
          %1682 = vmatprep.subr.mxu0 %v321
          %1683 = vmatpush1.msra.mxu0 %v320
          %1684 = vmatprep.subr.mxu0 %v325
          %1685 = vmatpush1.msra.mxu0 %v324
          %1686 = vmatprep.subr.mxu0 %v329
          %1687 = vmatpush1.msra.mxu0 %v328
          %1688 = vmatprep.subr.mxu0 %v333
          %1689 = vmatpush1.msra.mxu0 %v332
          %1690 = vmatprep.subr.mxu0 %v337
          %1691 = vmatpush1.msra.mxu0 %v336
          %1692 = vmatprep.subr.mxu0 %v341
          %1693 = vmatpush1.msra.mxu0 %v340
          %1694 = vmatprep.subr.mxu0 %v345
          %1695 = vmatpush1.msra.mxu0 %v344
          %1696 = vmatprep.subr.mxu0 %v349
          %1697 = vmatpush1.msra.mxu0 %v348
          %1698 = vmatprep.subr.mxu0 %v353
          %1699 = vmatpush1.msra.mxu0 %v352
          %1700 = vmatprep.subr.mxu0 %v357
          %1701 = vmatpush1.msra.mxu0 %v356
          %1702 = vmatprep.subr.mxu0 %v361
          %1703 = vmatpush1.msra.mxu0 %v360
          %1704 = vmatprep.subr.mxu0 %v365
          %1705 = vmatpush1.msra.mxu0 %v364
          %1706 = vmatprep.subr.mxu0 %v369
          %1707 = vmatpush1.msra.mxu0 %v368
          %1708 = vmatprep.subr.mxu0 %v373
          %1709 = vmatpush1.msra.mxu0 %v372
          %1710 = vmatprep.subr.mxu0 %v377
          %1711 = vmatpush1.msra.mxu0 %v376
          %1712 = vmatprep.subr.mxu0 0.0
          %1713 = vmatpush1.msra.mxu0 0.0
          %1714 = vmatprep.subr.mxu0 0.0
          %1715 = vmatpush1.msra.mxu0 0.0
          %1716 = vmatprep.subr.mxu0 0.0
          %1717 = vmatpush1.msra.mxu0 0.0
          %1718 = vmatprep.subr.mxu0 0.0
          %1719 = vmatpush1.msra.mxu0 0.0
          %1720 = vmatprep.subr.mxu0 0.0
          %1721 = vmatpush1.msra.mxu0 0.0
          %1722 = vmatprep.subr.mxu0 0.0
          %1723 = vmatpush1.msra.mxu0 0.0
          %1724 = vmatprep.subr.mxu0 0.0
          %1725 = vmatpush1.msra.mxu0 0.0
          %1726 = vmatprep.subr.mxu0 0.0
          %1727 = vmatpush1.msra.mxu0 0.0
          %1728 = vmatprep.subr.mxu0 0.0
          %1729 = vmatpush1.msra.mxu0 0.0
          %1730 = vmatprep.subr.mxu0 0.0
          %1731 = vmatpush1.msra.mxu0 0.0
          %1732 = vmatprep.subr.mxu0 0.0
          %1733 = vmatpush1.msra.mxu0 0.0
          %1734 = vmatprep.subr.mxu0 0.0
          %1735 = vmatpush1.msra.mxu0 0.0
          %1736 = vmatprep.subr.mxu0 0.0
          %1737 = vmatpush1.msra.mxu0 0.0
          %1738 = vmatprep.subr.mxu0 0.0
          %1739 = vmatpush1.msra.mxu0 0.0
          %1740 = vmatprep.subr.mxu0 0.0
          %1741 = vmatpush1.msra.mxu0 0.0
          %1742 = vmatprep.subr.mxu0 0.0
          %1743 = vmatpush1.msra.mxu0 0.0
          %1744 = vmatprep.mubr.f32.mxu0 0.0
          %1745 = vmatmul.mubr.f32.gmra.mrb[0].mxu0 %v1356
          %v1746 = vpop.f32.mrb[0].mxu0
          %v1747 = vadd.f32 0.0, %v1746
          %v1748 = vpop.f32.mrb[0].mxu0
          %v1749 = vadd.f32 0.0, %v1748
          %1750 = vdwg.mxu0
          %1751 = vmatprep.subr.mxu0 %v319
          %1752 = vmatpush1.msra.mxu0 %v318
          %1753 = vmatprep.subr.mxu0 %v323
          %1754 = vmatpush1.msra.mxu0 %v322
          %1755 = vmatprep.subr.mxu0 %v327
          %1756 = vmatpush1.msra.mxu0 %v326
          %1757 = vmatprep.subr.mxu0 %v331
          %1758 = vmatpush1.msra.mxu0 %v330
          %1759 = vmatprep.subr.mxu0 %v335
          %1760 = vmatpush1.msra.mxu0 %v334
          %1761 = vmatprep.subr.mxu0 %v339
          %1762 = vmatpush1.msra.mxu0 %v338
          %1763 = vmatprep.subr.mxu0 %v343
          %1764 = vmatpush1.msra.mxu0 %v342
          %1765 = vmatprep.subr.mxu0 %v347
          %1766 = vmatpush1.msra.mxu0 %v346
          %1767 = vmatprep.subr.mxu0 %v351
          %1768 = vmatpush1.msra.mxu0 %v350
          %1769 = vmatprep.subr.mxu0 %v355
          %1770 = vmatpush1.msra.mxu0 %v354
          %1771 = vmatprep.subr.mxu0 %v359
          %1772 = vmatpush1.msra.mxu0 %v358
          %1773 = vmatprep.subr.mxu0 %v363
          %1774 = vmatpush1.msra.mxu0 %v362
          %1775 = vmatprep.subr.mxu0 %v367
          %1776 = vmatpush1.msra.mxu0 %v366
          %1777 = vmatprep.subr.mxu0 %v371
          %1778 = vmatpush1.msra.mxu0 %v370
          %1779 = vmatprep.subr.mxu0 %v375
          %1780 = vmatpush1.msra.mxu0 %v374
          %1781 = vmatprep.subr.mxu0 %v379
          %1782 = vmatpush1.msra.mxu0 %v378
          %1783 = vmatprep.subr.mxu0 0.0
          %1784 = vmatpush1.msra.mxu0 0.0
          %1785 = vmatprep.subr.mxu0 0.0
          %1786 = vmatpush1.msra.mxu0 0.0
          %1787 = vmatprep.subr.mxu0 0.0
          %1788 = vmatpush1.msra.mxu0 0.0
          %1789 = vmatprep.subr.mxu0 0.0
          %1790 = vmatpush1.msra.mxu0 0.0
          %1791 = vmatprep.subr.mxu0 0.0
          %1792 = vmatpush1.msra.mxu0 0.0
          %1793 = vmatprep.subr.mxu0 0.0
          %1794 = vmatpush1.msra.mxu0 0.0
          %1795 = vmatprep.subr.mxu0 0.0
          %1796 = vmatpush1.msra.mxu0 0.0
          %1797 = vmatprep.subr.mxu0 0.0
          %1798 = vmatpush1.msra.mxu0 0.0
          %1799 = vmatprep.subr.mxu0 0.0
          %1800 = vmatpush1.msra.mxu0 0.0
          %1801 = vmatprep.subr.mxu0 0.0
          %1802 = vmatpush1.msra.mxu0 0.0
          %1803 = vmatprep.subr.mxu0 0.0
          %1804 = vmatpush1.msra.mxu0 0.0
          %1805 = vmatprep.subr.mxu0 0.0
          %1806 = vmatpush1.msra.mxu0 0.0
          %1807 = vmatprep.subr.mxu0 0.0
          %1808 = vmatpush1.msra.mxu0 0.0
          %1809 = vmatprep.subr.mxu0 0.0
          %1810 = vmatpush1.msra.mxu0 0.0
          %1811 = vmatprep.subr.mxu0 0.0
          %1812 = vmatpush1.msra.mxu0 0.0
          %1813 = vmatprep.subr.mxu0 0.0
          %1814 = vmatpush1.msra.mxu0 0.0
          %1815 = vmatprep.mubr.f32.mxu0 0.0
          %1816 = vmatmul.mubr.f32.gmra.mrb[0].mxu0 %v1356
          %v1817 = vpop.f32.mrb[0].mxu0
          %v1818 = vadd.f32 0.0, %v1817
          %v1819 = vpop.f32.mrb[0].mxu0
          %v1820 = vadd.f32 0.0, %v1819
          %1821 = vdwg.mxu0
          %v1822 = vadd.f32 %v1676, %v1747
          %v1823 = vadd.f32 %v1677, %v1749
          %v1824 = vadd.f32 %v1678, %v1818
          %v1825 = vadd.f32 %v1679, %v1820
          %v1826 = vxor.u32 %v1822, 2147483648
          %v1827 = vmul.f32 %v1826, 1.442695
          %v1828 = vpow.pop %v1827
          %v1829 = vadd.f32 %v1828, 1.0
          %v1830 = vrcp.pop %v1829
          %v1831 = vmul.f32 1.0, %v1830
          %v1832 = vxor.u32 %v1823, 2147483648
          %v1833 = vmul.f32 %v1832, 1.442695
          %v1834 = vpow.pop %v1833
          %v1835 = vadd.f32 %v1834, 1.0
          %v1836 = vrcp.pop %v1835
          %v1837 = vmul.f32 1.0, %v1836
          %v1838 = vtanh.pop %v1824
          %v1839 = vxor.u32 %v1825, 2147483648
          %v1840 = vmul.f32 %v1839, 1.442695
          %v1841 = vpow.pop %v1840
          %v1842 = vadd.f32 %v1841, 1.0
          %v1843 = vrcp.pop %v1842
          %v1844 = vmul.f32 1.0, %v1843
          %v1845 = vmul.f32 %v1838, %v1831
          %v1846 = vmul.f32 %v1837, %v1354
          %v1847 = vadd.f32 %v1845, %v1846
          %v1848 = vtanh.pop %v1847
          %v1849 = vmul.f32 %v1844, %v1848
          %1850 = vmatprep.subr.mxu0 %v381
          %1851 = vmatpush1.msra.mxu0 %v380
          %1852 = vmatprep.subr.mxu0 %v385
          %1853 = vmatpush1.msra.mxu0 %v384
          %1854 = vmatprep.subr.mxu0 %v389
          %1855 = vmatpush1.msra.mxu0 %v388
          %1856 = vmatprep.subr.mxu0 %v393
          %1857 = vmatpush1.msra.mxu0 %v392
          %1858 = vmatprep.subr.mxu0 %v397
          %1859 = vmatpush1.msra.mxu0 %v396
          %1860 = vmatprep.subr.mxu0 %v401
          %1861 = vmatpush1.msra.mxu0 %v400
          %1862 = vmatprep.subr.mxu0 %v405
          %1863 = vmatpush1.msra.mxu0 %v404
          %1864 = vmatprep.subr.mxu0 %v409
          %1865 = vmatpush1.msra.mxu0 %v408
          %1866 = vmatprep.subr.mxu0 %v413
          %1867 = vmatpush1.msra.mxu0 %v412
          %1868 = vmatprep.subr.mxu0 %v417
          %1869 = vmatpush1.msra.mxu0 %v416
          %1870 = vmatprep.subr.mxu0 %v421
          %1871 = vmatpush1.msra.mxu0 %v420
          %1872 = vmatprep.subr.mxu0 %v425
          %1873 = vmatpush1.msra.mxu0 %v424
          %1874 = vmatprep.subr.mxu0 %v429
          %1875 = vmatpush1.msra.mxu0 %v428
          %1876 = vmatprep.subr.mxu0 %v433
          %1877 = vmatpush1.msra.mxu0 %v432
          %1878 = vmatprep.subr.mxu0 %v437
          %1879 = vmatpush1.msra.mxu0 %v436
          %1880 = vmatprep.subr.mxu0 %v441
          %1881 = vmatpush1.msra.mxu0 %v440
          %1882 = vmatprep.subr.mxu0 0.0
          %1883 = vmatpush1.msra.mxu0 0.0
          %1884 = vmatprep.subr.mxu0 0.0
          %1885 = vmatpush1.msra.mxu0 0.0
          %1886 = vmatprep.subr.mxu0 0.0
          %1887 = vmatpush1.msra.mxu0 0.0
          %1888 = vmatprep.subr.mxu0 0.0
          %1889 = vmatpush1.msra.mxu0 0.0
          %1890 = vmatprep.subr.mxu0 0.0
          %1891 = vmatpush1.msra.mxu0 0.0
          %1892 = vmatprep.subr.mxu0 0.0
          %1893 = vmatpush1.msra.mxu0 0.0
          %1894 = vmatprep.subr.mxu0 0.0
          %1895 = vmatpush1.msra.mxu0 0.0
          %1896 = vmatprep.subr.mxu0 0.0
          %1897 = vmatpush1.msra.mxu0 0.0
          %1898 = vmatprep.subr.mxu0 0.0
          %1899 = vmatpush1.msra.mxu0 0.0
          %1900 = vmatprep.subr.mxu0 0.0
          %1901 = vmatpush1.msra.mxu0 0.0
          %1902 = vmatprep.subr.mxu0 0.0
          %1903 = vmatpush1.msra.mxu0 0.0
          %1904 = vmatprep.subr.mxu0 0.0
          %1905 = vmatpush1.msra.mxu0 0.0
          %1906 = vmatprep.subr.mxu0 0.0
          %1907 = vmatpush1.msra.mxu0 0.0
          %1908 = vmatprep.subr.mxu0 0.0
          %1909 = vmatpush1.msra.mxu0 0.0
          %1910 = vmatprep.subr.mxu0 0.0
          %1911 = vmatpush1.msra.mxu0 0.0
          %1912 = vmatprep.subr.mxu0 0.0
          %1913 = vmatpush1.msra.mxu0 0.0
          %1914 = vmatprep.mubr.f32.mxu0 0.0
          %1915 = vmatmul.mubr.f32.gmra.mrb[0].mxu0 %v1849
          %v1916 = vpop.f32.mrb[0].mxu0
          %v1917 = vadd.f32 0.0, %v1916
          %v1918 = vpop.f32.mrb[0].mxu0
          %v1919 = vadd.f32 0.0, %v1918
          %1920 = vdwg.mxu0
          %1921 = vmatprep.subr.mxu0 %v383
          %1922 = vmatpush1.msra.mxu0 %v382
          %1923 = vmatprep.subr.mxu0 %v387
          %1924 = vmatpush1.msra.mxu0 %v386
          %1925 = vmatprep.subr.mxu0 %v391
          %1926 = vmatpush1.msra.mxu0 %v390
          %1927 = vmatprep.subr.mxu0 %v395
          %1928 = vmatpush1.msra.mxu0 %v394
          %1929 = vmatprep.subr.mxu0 %v399
          %1930 = vmatpush1.msra.mxu0 %v398
          %1931 = vmatprep.subr.mxu0 %v403
          %1932 = vmatpush1.msra.mxu0 %v402
          %1933 = vmatprep.subr.mxu0 %v407
          %1934 = vmatpush1.msra.mxu0 %v406
          %1935 = vmatprep.subr.mxu0 %v411
          %1936 = vmatpush1.msra.mxu0 %v410
          %1937 = vmatprep.subr.mxu0 %v415
          %1938 = vmatpush1.msra.mxu0 %v414
          %1939 = vmatprep.subr.mxu0 %v419
          %1940 = vmatpush1.msra.mxu0 %v418
          %1941 = vmatprep.subr.mxu0 %v423
          %1942 = vmatpush1.msra.mxu0 %v422
          %1943 = vmatprep.subr.mxu0 %v427
          %1944 = vmatpush1.msra.mxu0 %v426
          %1945 = vmatprep.subr.mxu0 %v431
          %1946 = vmatpush1.msra.mxu0 %v430
          %1947 = vmatprep.subr.mxu0 %v435
          %1948 = vmatpush1.msra.mxu0 %v434
          %1949 = vmatprep.subr.mxu0 %v439
          %1950 = vmatpush1.msra.mxu0 %v438
          %1951 = vmatprep.subr.mxu0 %v443
          %1952 = vmatpush1.msra.mxu0 %v442
          %1953 = vmatprep.subr.mxu0 0.0
          %1954 = vmatpush1.msra.mxu0 0.0
          %1955 = vmatprep.subr.mxu0 0.0
          %1956 = vmatpush1.msra.mxu0 0.0
          %1957 = vmatprep.subr.mxu0 0.0
          %1958 = vmatpush1.msra.mxu0 0.0
          %1959 = vmatprep.subr.mxu0 0.0
          %1960 = vmatpush1.msra.mxu0 0.0
          %1961 = vmatprep.subr.mxu0 0.0
          %1962 = vmatpush1.msra.mxu0 0.0
          %1963 = vmatprep.subr.mxu0 0.0
          %1964 = vmatpush1.msra.mxu0 0.0
          %1965 = vmatprep.subr.mxu0 0.0
          %1966 = vmatpush1.msra.mxu0 0.0
          %1967 = vmatprep.subr.mxu0 0.0
          %1968 = vmatpush1.msra.mxu0 0.0
          %1969 = vmatprep.subr.mxu0 0.0
          %1970 = vmatpush1.msra.mxu0 0.0
          %1971 = vmatprep.subr.mxu0 0.0
          %1972 = vmatpush1.msra.mxu0 0.0
          %1973 = vmatprep.subr.mxu0 0.0
          %1974 = vmatpush1.msra.mxu0 0.0
          %1975 = vmatprep.subr.mxu0 0.0
          %1976 = vmatpush1.msra.mxu0 0.0
          %1977 = vmatprep.subr.mxu0 0.0
          %1978 = vmatpush1.msra.mxu0 0.0
          %1979 = vmatprep.subr.mxu0 0.0
          %1980 = vmatpush1.msra.mxu0 0.0
          %1981 = vmatprep.subr.mxu0 0.0
          %1982 = vmatpush1.msra.mxu0 0.0
          %1983 = vmatprep.subr.mxu0 0.0
          %1984 = vmatpush1.msra.mxu0 0.0
          %1985 = vmatprep.mubr.f32.mxu0 0.0
          %1986 = vmatmul.mubr.f32.gmra.mrb[0].mxu0 %v1849
          %v1987 = vpop.f32.mrb[0].mxu0
          %v1988 = vadd.f32 0.0, %v1987
          %v1989 = vpop.f32.mrb[0].mxu0
          %v1990 = vadd.f32 0.0, %v1989
          %1991 = vdwg.mxu0
          %v1992 = vadd.f32 %v1598, %v1917
          %v1993 = vadd.f32 %v1600, %v1919
          %v1994 = vadd.f32 %v1669, %v1988
          %v1995 = vadd.f32 %v1671, %v1990
          %v1996 = vxor.u32 %v1992, 2147483648
          %v1997 = vmul.f32 %v1996, 1.442695
          %v1998 = vpow.pop %v1997
          %v1999 = vadd.f32 %v1998, 1.0
          %v2000 = vrcp.pop %v1999
          %v2001 = vmul.f32 1.0, %v2000
          %v2002 = vxor.u32 %v1993, 2147483648
          %v2003 = vmul.f32 %v2002, 1.442695
          %v2004 = vpow.pop %v2003
          %v2005 = vadd.f32 %v2004, 1.0
          %v2006 = vrcp.pop %v2005
          %v2007 = vmul.f32 1.0, %v2006
          %v2008 = vtanh.pop %v1994
          %v2009 = vxor.u32 %v1995, 2147483648
          %v2010 = vmul.f32 %v2009, 1.442695
          %v2011 = vpow.pop %v2010
          %v2012 = vadd.f32 %v2011, 1.0
          %v2013 = vrcp.pop %v2012
          %v2014 = vmul.f32 1.0, %v2013
          %v2015 = vmul.f32 %v2008, %v2001
          %v2016 = vmul.f32 %v2007, %v1524
          %v2017 = vadd.f32 %v2015, %v2016
          %v2018 = vtanh.pop %v2017
          %v2019 = vmul.f32 %v2014, %v2018
          %s2020 = smul.u32 %s1530, 8
          %s2021 = scalar_lea.vmem %s305, %s2020 [#allocation14]
          %2022 = vst [vmem:[%s2021] sm:$0xff] %v2019
          %s2023 = sadd.s32 %s544, 3
          %2024 = vmatprep.subr.mxu0 %v445
          %2025 = vmatpush1.msra.mxu0 %v444
          %2026 = vmatprep.subr.mxu0 %v449
          %2027 = vmatpush1.msra.mxu0 %v448
          %2028 = vmatprep.subr.mxu0 %v453
          %2029 = vmatpush1.msra.mxu0 %v452
          %2030 = vmatprep.subr.mxu0 %v457
          %2031 = vmatpush1.msra.mxu0 %v456
          %2032 = vmatprep.subr.mxu0 %v461
          %2033 = vmatpush1.msra.mxu0 %v460
          %2034 = vmatprep.subr.mxu0 %v465
          %2035 = vmatpush1.msra.mxu0 %v464
          %2036 = vmatprep.subr.mxu0 %v469
          %2037 = vmatpush1.msra.mxu0 %v468
          %2038 = vmatprep.subr.mxu0 %v473
          %2039 = vmatpush1.msra.mxu0 %v472
          %2040 = vmatprep.subr.mxu0 %v477
          %2041 = vmatpush1.msra.mxu0 %v476
          %2042 = vmatprep.subr.mxu0 %v481
          %2043 = vmatpush1.msra.mxu0 %v480
          %2044 = vmatprep.subr.mxu0 %v485
          %2045 = vmatpush1.msra.mxu0 %v484
          %2046 = vmatprep.subr.mxu0 %v489
          %2047 = vmatpush1.msra.mxu0 %v488
          %2048 = vmatprep.subr.mxu0 %v493
          %2049 = vmatpush1.msra.mxu0 %v492
          %2050 = vmatprep.subr.mxu0 %v497
          %2051 = vmatpush1.msra.mxu0 %v496
          %2052 = vmatprep.subr.mxu0 %v501
          %2053 = vmatpush1.msra.mxu0 %v500
          %2054 = vmatprep.subr.mxu0 %v505
          %2055 = vmatpush1.msra.mxu0 %v504
          %2056 = vmatprep.subr.mxu0 0.0
          %2057 = vmatpush1.msra.mxu0 0.0
          %2058 = vmatprep.subr.mxu0 0.0
          %2059 = vmatpush1.msra.mxu0 0.0
          %2060 = vmatprep.subr.mxu0 0.0
          %2061 = vmatpush1.msra.mxu0 0.0
          %2062 = vmatprep.subr.mxu0 0.0
          %2063 = vmatpush1.msra.mxu0 0.0
          %2064 = vmatprep.subr.mxu0 0.0
          %2065 = vmatpush1.msra.mxu0 0.0
          %2066 = vmatprep.subr.mxu0 0.0
          %2067 = vmatpush1.msra.mxu0 0.0
          %2068 = vmatprep.subr.mxu0 0.0
          %2069 = vmatpush1.msra.mxu0 0.0
          %2070 = vmatprep.subr.mxu0 0.0
          %2071 = vmatpush1.msra.mxu0 0.0
          %2072 = vmatprep.subr.mxu0 0.0
          %2073 = vmatpush1.msra.mxu0 0.0
          %2074 = vmatprep.subr.mxu0 0.0
          %2075 = vmatpush1.msra.mxu0 0.0
          %2076 = vmatprep.subr.mxu0 0.0
          %2077 = vmatpush1.msra.mxu0 0.0
          %2078 = vmatprep.subr.mxu0 0.0
          %2079 = vmatpush1.msra.mxu0 0.0
          %2080 = vmatprep.subr.mxu0 0.0
          %2081 = vmatpush1.msra.mxu0 0.0
          %2082 = vmatprep.subr.mxu0 0.0
          %2083 = vmatpush1.msra.mxu0 0.0
          %2084 = vmatprep.subr.mxu0 0.0
          %2085 = vmatpush1.msra.mxu0 0.0
          %2086 = vmatprep.subr.mxu0 0.0
          %2087 = vmatpush1.msra.mxu0 0.0
          %2088 = vmatprep.mubr.f32.mxu0 0.0
          %2089 = vmatmul.mubr.f32.gmra.mrb[0].mxu0 %v2019
          %v2090 = vpop.f32.mrb[0].mxu0
          %v2091 = vadd.f32 %v513, %v2090
          %v2092 = vpop.f32.mrb[0].mxu0
          %v2093 = vadd.f32 %v517, %v2092
          %2094 = vdwg.mxu0
          %2095 = vmatprep.subr.mxu0 %v447
          %2096 = vmatpush1.msra.mxu0 %v446
          %2097 = vmatprep.subr.mxu0 %v451
          %2098 = vmatpush1.msra.mxu0 %v450
          %2099 = vmatprep.subr.mxu0 %v455
          %2100 = vmatpush1.msra.mxu0 %v454
          %2101 = vmatprep.subr.mxu0 %v459
          %2102 = vmatpush1.msra.mxu0 %v458
          %2103 = vmatprep.subr.mxu0 %v463
          %2104 = vmatpush1.msra.mxu0 %v462
          %2105 = vmatprep.subr.mxu0 %v467
          %2106 = vmatpush1.msra.mxu0 %v466
          %2107 = vmatprep.subr.mxu0 %v471
          %2108 = vmatpush1.msra.mxu0 %v470
          %2109 = vmatprep.subr.mxu0 %v475
          %2110 = vmatpush1.msra.mxu0 %v474
          %2111 = vmatprep.subr.mxu0 %v479
          %2112 = vmatpush1.msra.mxu0 %v478
          %2113 = vmatprep.subr.mxu0 %v483
          %2114 = vmatpush1.msra.mxu0 %v482
          %2115 = vmatprep.subr.mxu0 %v487
          %2116 = vmatpush1.msra.mxu0 %v486
          %2117 = vmatprep.subr.mxu0 %v491
          %2118 = vmatpush1.msra.mxu0 %v490
          %2119 = vmatprep.subr.mxu0 %v495
          %2120 = vmatpush1.msra.mxu0 %v494
          %2121 = vmatprep.subr.mxu0 %v499
          %2122 = vmatpush1.msra.mxu0 %v498
          %2123 = vmatprep.subr.mxu0 %v503
          %2124 = vmatpush1.msra.mxu0 %v502
          %2125 = vmatprep.subr.mxu0 %v507
          %2126 = vmatpush1.msra.mxu0 %v506
          %2127 = vmatprep.subr.mxu0 0.0
          %2128 = vmatpush1.msra.mxu0 0.0
          %2129 = vmatprep.subr.mxu0 0.0
          %2130 = vmatpush1.msra.mxu0 0.0
          %2131 = vmatprep.subr.mxu0 0.0
          %2132 = vmatpush1.msra.mxu0 0.0
          %2133 = vmatprep.subr.mxu0 0.0
          %2134 = vmatpush1.msra.mxu0 0.0
          %2135 = vmatprep.subr.mxu0 0.0
          %2136 = vmatpush1.msra.mxu0 0.0
          %2137 = vmatprep.subr.mxu0 0.0
          %2138 = vmatpush1.msra.mxu0 0.0
          %2139 = vmatprep.subr.mxu0 0.0
          %2140 = vmatpush1.msra.mxu0 0.0
          %2141 = vmatprep.subr.mxu0 0.0
          %2142 = vmatpush1.msra.mxu0 0.0
          %2143 = vmatprep.subr.mxu0 0.0
          %2144 = vmatpush1.msra.mxu0 0.0
          %2145 = vmatprep.subr.mxu0 0.0
          %2146 = vmatpush1.msra.mxu0 0.0
          %2147 = vmatprep.subr.mxu0 0.0
          %2148 = vmatpush1.msra.mxu0 0.0
          %2149 = vmatprep.subr.mxu0 0.0
          %2150 = vmatpush1.msra.mxu0 0.0
          %2151 = vmatprep.subr.mxu0 0.0
          %2152 = vmatpush1.msra.mxu0 0.0
          %2153 = vmatprep.subr.mxu0 0.0
          %2154 = vmatpush1.msra.mxu0 0.0
          %2155 = vmatprep.subr.mxu0 0.0
          %2156 = vmatpush1.msra.mxu0 0.0
          %2157 = vmatprep.subr.mxu0 0.0
          %2158 = vmatpush1.msra.mxu0 0.0
          %2159 = vmatprep.mubr.f32.mxu0 0.0
          %2160 = vmatmul.mubr.f32.gmra.mrb[0].mxu0 %v2019
          %v2161 = vpop.f32.mrb[0].mxu0
          %v2162 = vadd.f32 %v521, %v2161
          %v2163 = vpop.f32.mrb[0].mxu0
          %v2164 = vadd.f32 %v525, %v2163
          %2165 = vdwg.mxu0
          %s2166 = smul.u32 %s2023, 4
          %s2167 = smul.addr %s2166, 8
          %s2168 = scalar_lea.vmem %s267, %s2167 [#allocation6]
          %v2169 = vld [vmem:[%s2168] sm:$0xff]
          %v2170 = vld [vmem:[%s2168 + $0x8] sm:$0xff]
          %v2171 = vld [vmem:[%s2168 + $0x10] sm:$0xff]
          %v2172 = vld [vmem:[%s2168 + $0x18] sm:$0xff]
          %2173 = vmatprep.subr.mxu0 %v317
          %2174 = vmatpush1.msra.mxu0 %v316
          %2175 = vmatprep.subr.mxu0 %v321
          %2176 = vmatpush1.msra.mxu0 %v320
          %2177 = vmatprep.subr.mxu0 %v325
          %2178 = vmatpush1.msra.mxu0 %v324
          %2179 = vmatprep.subr.mxu0 %v329
          %2180 = vmatpush1.msra.mxu0 %v328
          %2181 = vmatprep.subr.mxu0 %v333
          %2182 = vmatpush1.msra.mxu0 %v332
          %2183 = vmatprep.subr.mxu0 %v337
          %2184 = vmatpush1.msra.mxu0 %v336
          %2185 = vmatprep.subr.mxu0 %v341
          %2186 = vmatpush1.msra.mxu0 %v340
          %2187 = vmatprep.subr.mxu0 %v345
          %2188 = vmatpush1.msra.mxu0 %v344
          %2189 = vmatprep.subr.mxu0 %v349
          %2190 = vmatpush1.msra.mxu0 %v348
          %2191 = vmatprep.subr.mxu0 %v353
          %2192 = vmatpush1.msra.mxu0 %v352
          %2193 = vmatprep.subr.mxu0 %v357
          %2194 = vmatpush1.msra.mxu0 %v356
          %2195 = vmatprep.subr.mxu0 %v361
          %2196 = vmatpush1.msra.mxu0 %v360
          %2197 = vmatprep.subr.mxu0 %v365
          %2198 = vmatpush1.msra.mxu0 %v364
          %2199 = vmatprep.subr.mxu0 %v369
          %2200 = vmatpush1.msra.mxu0 %v368
          %2201 = vmatprep.subr.mxu0 %v373
          %2202 = vmatpush1.msra.mxu0 %v372
          %2203 = vmatprep.subr.mxu0 %v377
          %2204 = vmatpush1.msra.mxu0 %v376
          %2205 = vmatprep.subr.mxu0 0.0
          %2206 = vmatpush1.msra.mxu0 0.0
          %2207 = vmatprep.subr.mxu0 0.0
          %2208 = vmatpush1.msra.mxu0 0.0
          %2209 = vmatprep.subr.mxu0 0.0
          %2210 = vmatpush1.msra.mxu0 0.0
          %2211 = vmatprep.subr.mxu0 0.0
          %2212 = vmatpush1.msra.mxu0 0.0
          %2213 = vmatprep.subr.mxu0 0.0
          %2214 = vmatpush1.msra.mxu0 0.0
          %2215 = vmatprep.subr.mxu0 0.0
          %2216 = vmatpush1.msra.mxu0 0.0
          %2217 = vmatprep.subr.mxu0 0.0
          %2218 = vmatpush1.msra.mxu0 0.0
          %2219 = vmatprep.subr.mxu0 0.0
          %2220 = vmatpush1.msra.mxu0 0.0
          %2221 = vmatprep.subr.mxu0 0.0
          %2222 = vmatpush1.msra.mxu0 0.0
          %2223 = vmatprep.subr.mxu0 0.0
          %2224 = vmatpush1.msra.mxu0 0.0
          %2225 = vmatprep.subr.mxu0 0.0
          %2226 = vmatpush1.msra.mxu0 0.0
          %2227 = vmatprep.subr.mxu0 0.0
          %2228 = vmatpush1.msra.mxu0 0.0
          %2229 = vmatprep.subr.mxu0 0.0
          %2230 = vmatpush1.msra.mxu0 0.0
          %2231 = vmatprep.subr.mxu0 0.0
          %2232 = vmatpush1.msra.mxu0 0.0
          %2233 = vmatprep.subr.mxu0 0.0
          %2234 = vmatpush1.msra.mxu0 0.0
          %2235 = vmatprep.subr.mxu0 0.0
          %2236 = vmatpush1.msra.mxu0 0.0
          %2237 = vmatprep.mubr.f32.mxu0 0.0
          %2238 = vmatmul.mubr.f32.gmra.mrb[0].mxu0 %v1849
          %v2239 = vpop.f32.mrb[0].mxu0
          %v2240 = vadd.f32 0.0, %v2239
          %v2241 = vpop.f32.mrb[0].mxu0
          %v2242 = vadd.f32 0.0, %v2241
          %2243 = vdwg.mxu0
          %2244 = vmatprep.subr.mxu0 %v319
          %2245 = vmatpush1.msra.mxu0 %v318
          %2246 = vmatprep.subr.mxu0 %v323
          %2247 = vmatpush1.msra.mxu0 %v322
          %2248 = vmatprep.subr.mxu0 %v327
          %2249 = vmatpush1.msra.mxu0 %v326
          %2250 = vmatprep.subr.mxu0 %v331
          %2251 = vmatpush1.msra.mxu0 %v330
          %2252 = vmatprep.subr.mxu0 %v335
          %2253 = vmatpush1.msra.mxu0 %v334
          %2254 = vmatprep.subr.mxu0 %v339
          %2255 = vmatpush1.msra.mxu0 %v338
          %2256 = vmatprep.subr.mxu0 %v343
          %2257 = vmatpush1.msra.mxu0 %v342
          %2258 = vmatprep.subr.mxu0 %v347
          %2259 = vmatpush1.msra.mxu0 %v346
          %2260 = vmatprep.subr.mxu0 %v351
          %2261 = vmatpush1.msra.mxu0 %v350
          %2262 = vmatprep.subr.mxu0 %v355
          %2263 = vmatpush1.msra.mxu0 %v354
          %2264 = vmatprep.subr.mxu0 %v359
          %2265 = vmatpush1.msra.mxu0 %v358
          %2266 = vmatprep.subr.mxu0 %v363
          %2267 = vmatpush1.msra.mxu0 %v362
          %2268 = vmatprep.subr.mxu0 %v367
          %2269 = vmatpush1.msra.mxu0 %v366
          %2270 = vmatprep.subr.mxu0 %v371
          %2271 = vmatpush1.msra.mxu0 %v370
          %2272 = vmatprep.subr.mxu0 %v375
          %2273 = vmatpush1.msra.mxu0 %v374
          %2274 = vmatprep.subr.mxu0 %v379
          %2275 = vmatpush1.msra.mxu0 %v378
          %2276 = vmatprep.subr.mxu0 0.0
          %2277 = vmatpush1.msra.mxu0 0.0
          %2278 = vmatprep.subr.mxu0 0.0
          %2279 = vmatpush1.msra.mxu0 0.0
          %2280 = vmatprep.subr.mxu0 0.0
          %2281 = vmatpush1.msra.mxu0 0.0
          %2282 = vmatprep.subr.mxu0 0.0
          %2283 = vmatpush1.msra.mxu0 0.0
          %2284 = vmatprep.subr.mxu0 0.0
          %2285 = vmatpush1.msra.mxu0 0.0
          %2286 = vmatprep.subr.mxu0 0.0
          %2287 = vmatpush1.msra.mxu0 0.0
          %2288 = vmatprep.subr.mxu0 0.0
          %2289 = vmatpush1.msra.mxu0 0.0
          %2290 = vmatprep.subr.mxu0 0.0
          %2291 = vmatpush1.msra.mxu0 0.0
          %2292 = vmatprep.subr.mxu0 0.0
          %2293 = vmatpush1.msra.mxu0 0.0
          %2294 = vmatprep.subr.mxu0 0.0
          %2295 = vmatpush1.msra.mxu0 0.0
          %2296 = vmatprep.subr.mxu0 0.0
          %2297 = vmatpush1.msra.mxu0 0.0
          %2298 = vmatprep.subr.mxu0 0.0
          %2299 = vmatpush1.msra.mxu0 0.0
          %2300 = vmatprep.subr.mxu0 0.0
          %2301 = vmatpush1.msra.mxu0 0.0
          %2302 = vmatprep.subr.mxu0 0.0
          %2303 = vmatpush1.msra.mxu0 0.0
          %2304 = vmatprep.subr.mxu0 0.0
          %2305 = vmatpush1.msra.mxu0 0.0
          %2306 = vmatprep.subr.mxu0 0.0
          %2307 = vmatpush1.msra.mxu0 0.0
          %2308 = vmatprep.mubr.f32.mxu0 0.0
          %2309 = vmatmul.mubr.f32.gmra.mrb[0].mxu0 %v1849
          %v2310 = vpop.f32.mrb[0].mxu0
          %v2311 = vadd.f32 0.0, %v2310
          %v2312 = vpop.f32.mrb[0].mxu0
          %v2313 = vadd.f32 0.0, %v2312
          %2314 = vdwg.mxu0
          %v2315 = vadd.f32 %v2169, %v2240
          %v2316 = vadd.f32 %v2170, %v2242
          %v2317 = vadd.f32 %v2171, %v2311
          %v2318 = vadd.f32 %v2172, %v2313
          %v2319 = vxor.u32 %v2315, 2147483648
          %v2320 = vmul.f32 %v2319, 1.442695
          %v2321 = vpow.pop %v2320
          %v2322 = vadd.f32 %v2321, 1.0
          %v2323 = vrcp.pop %v2322
          %v2324 = vmul.f32 1.0, %v2323
          %v2325 = vxor.u32 %v2316, 2147483648
          %v2326 = vmul.f32 %v2325, 1.442695
          %v2327 = vpow.pop %v2326
          %v2328 = vadd.f32 %v2327, 1.0
          %v2329 = vrcp.pop %v2328
          %v2330 = vmul.f32 1.0, %v2329
          %v2331 = vtanh.pop %v2317
          %v2332 = vxor.u32 %v2318, 2147483648
          %v2333 = vmul.f32 %v2332, 1.442695
          %v2334 = vpow.pop %v2333
          %v2335 = vadd.f32 %v2334, 1.0
          %v2336 = vrcp.pop %v2335
          %v2337 = vmul.f32 1.0, %v2336
          %v2338 = vmul.f32 %v2331, %v2324
          %v2339 = vmul.f32 %v2330, %v1847
          %v2340 = vadd.f32 %v2338, %v2339
          %v2341 = vtanh.pop %v2340
          %v2342 = vmul.f32 %v2337, %v2341
          %2343 = vmatprep.subr.mxu0 %v381
          %2344 = vmatpush1.msra.mxu0 %v380
          %2345 = vmatprep.subr.mxu0 %v385
          %2346 = vmatpush1.msra.mxu0 %v384
          %2347 = vmatprep.subr.mxu0 %v389
          %2348 = vmatpush1.msra.mxu0 %v388
          %2349 = vmatprep.subr.mxu0 %v393
          %2350 = vmatpush1.msra.mxu0 %v392
          %2351 = vmatprep.subr.mxu0 %v397
          %2352 = vmatpush1.msra.mxu0 %v396
          %2353 = vmatprep.subr.mxu0 %v401
          %2354 = vmatpush1.msra.mxu0 %v400
          %2355 = vmatprep.subr.mxu0 %v405
          %2356 = vmatpush1.msra.mxu0 %v404
          %2357 = vmatprep.subr.mxu0 %v409
          %2358 = vmatpush1.msra.mxu0 %v408
          %2359 = vmatprep.subr.mxu0 %v413
          %2360 = vmatpush1.msra.mxu0 %v412
          %2361 = vmatprep.subr.mxu0 %v417
          %2362 = vmatpush1.msra.mxu0 %v416
          %2363 = vmatprep.subr.mxu0 %v421
          %2364 = vmatpush1.msra.mxu0 %v420
          %2365 = vmatprep.subr.mxu0 %v425
          %2366 = vmatpush1.msra.mxu0 %v424
          %2367 = vmatprep.subr.mxu0 %v429
          %2368 = vmatpush1.msra.mxu0 %v428
          %2369 = vmatprep.subr.mxu0 %v433
          %2370 = vmatpush1.msra.mxu0 %v432
          %2371 = vmatprep.subr.mxu0 %v437
          %2372 = vmatpush1.msra.mxu0 %v436
          %2373 = vmatprep.subr.mxu0 %v441
          %2374 = vmatpush1.msra.mxu0 %v440
          %2375 = vmatprep.subr.mxu0 0.0
          %2376 = vmatpush1.msra.mxu0 0.0
          %2377 = vmatprep.subr.mxu0 0.0
          %2378 = vmatpush1.msra.mxu0 0.0
          %2379 = vmatprep.subr.mxu0 0.0
          %2380 = vmatpush1.msra.mxu0 0.0
          %2381 = vmatprep.subr.mxu0 0.0
          %2382 = vmatpush1.msra.mxu0 0.0
          %2383 = vmatprep.subr.mxu0 0.0
          %2384 = vmatpush1.msra.mxu0 0.0
          %2385 = vmatprep.subr.mxu0 0.0
          %2386 = vmatpush1.msra.mxu0 0.0
          %2387 = vmatprep.subr.mxu0 0.0
          %2388 = vmatpush1.msra.mxu0 0.0
          %2389 = vmatprep.subr.mxu0 0.0
          %2390 = vmatpush1.msra.mxu0 0.0
          %2391 = vmatprep.subr.mxu0 0.0
          %2392 = vmatpush1.msra.mxu0 0.0
          %2393 = vmatprep.subr.mxu0 0.0
          %2394 = vmatpush1.msra.mxu0 0.0
          %2395 = vmatprep.subr.mxu0 0.0
          %2396 = vmatpush1.msra.mxu0 0.0
          %2397 = vmatprep.subr.mxu0 0.0
          %2398 = vmatpush1.msra.mxu0 0.0
          %2399 = vmatprep.subr.mxu0 0.0
          %2400 = vmatpush1.msra.mxu0 0.0
          %2401 = vmatprep.subr.mxu0 0.0
          %2402 = vmatpush1.msra.mxu0 0.0
          %2403 = vmatprep.subr.mxu0 0.0
          %2404 = vmatpush1.msra.mxu0 0.0
          %2405 = vmatprep.subr.mxu0 0.0
          %2406 = vmatpush1.msra.mxu0 0.0
          %2407 = vmatprep.mubr.f32.mxu0 0.0
          %2408 = vmatmul.mubr.f32.gmra.mrb[0].mxu0 %v2342
          %v2409 = vpop.f32.mrb[0].mxu0
          %v2410 = vadd.f32 0.0, %v2409
          %v2411 = vpop.f32.mrb[0].mxu0
          %v2412 = vadd.f32 0.0, %v2411
          %2413 = vdwg.mxu0
          %2414 = vmatprep.subr.mxu0 %v383
          %2415 = vmatpush1.msra.mxu0 %v382
          %2416 = vmatprep.subr.mxu0 %v387
          %2417 = vmatpush1.msra.mxu0 %v386
          %2418 = vmatprep.subr.mxu0 %v391
          %2419 = vmatpush1.msra.mxu0 %v390
          %2420 = vmatprep.subr.mxu0 %v395
          %2421 = vmatpush1.msra.mxu0 %v394
          %2422 = vmatprep.subr.mxu0 %v399
          %2423 = vmatpush1.msra.mxu0 %v398
          %2424 = vmatprep.subr.mxu0 %v403
          %2425 = vmatpush1.msra.mxu0 %v402
          %2426 = vmatprep.subr.mxu0 %v407
          %2427 = vmatpush1.msra.mxu0 %v406
          %2428 = vmatprep.subr.mxu0 %v411
          %2429 = vmatpush1.msra.mxu0 %v410
          %2430 = vmatprep.subr.mxu0 %v415
          %2431 = vmatpush1.msra.mxu0 %v414
          %2432 = vmatprep.subr.mxu0 %v419
          %2433 = vmatpush1.msra.mxu0 %v418
          %2434 = vmatprep.subr.mxu0 %v423
          %2435 = vmatpush1.msra.mxu0 %v422
          %2436 = vmatprep.subr.mxu0 %v427
          %2437 = vmatpush1.msra.mxu0 %v426
          %2438 = vmatprep.subr.mxu0 %v431
          %2439 = vmatpush1.msra.mxu0 %v430
          %2440 = vmatprep.subr.mxu0 %v435
          %2441 = vmatpush1.msra.mxu0 %v434
          %2442 = vmatprep.subr.mxu0 %v439
          %2443 = vmatpush1.msra.mxu0 %v438
          %2444 = vmatprep.subr.mxu0 %v443
          %2445 = vmatpush1.msra.mxu0 %v442
          %2446 = vmatprep.subr.mxu0 0.0
          %2447 = vmatpush1.msra.mxu0 0.0
          %2448 = vmatprep.subr.mxu0 0.0
          %2449 = vmatpush1.msra.mxu0 0.0
          %2450 = vmatprep.subr.mxu0 0.0
          %2451 = vmatpush1.msra.mxu0 0.0
          %2452 = vmatprep.subr.mxu0 0.0
          %2453 = vmatpush1.msra.mxu0 0.0
          %2454 = vmatprep.subr.mxu0 0.0
          %2455 = vmatpush1.msra.mxu0 0.0
          %2456 = vmatprep.subr.mxu0 0.0
          %2457 = vmatpush1.msra.mxu0 0.0
          %2458 = vmatprep.subr.mxu0 0.0
          %2459 = vmatpush1.msra.mxu0 0.0
          %2460 = vmatprep.subr.mxu0 0.0
          %2461 = vmatpush1.msra.mxu0 0.0
          %2462 = vmatprep.subr.mxu0 0.0
          %2463 = vmatpush1.msra.mxu0 0.0
          %2464 = vmatprep.subr.mxu0 0.0
          %2465 = vmatpush1.msra.mxu0 0.0
          %2466 = vmatprep.subr.mxu0 0.0
          %2467 = vmatpush1.msra.mxu0 0.0
          %2468 = vmatprep.subr.mxu0 0.0
          %2469 = vmatpush1.msra.mxu0 0.0
          %2470 = vmatprep.subr.mxu0 0.0
          %2471 = vmatpush1.msra.mxu0 0.0
          %2472 = vmatprep.subr.mxu0 0.0
          %2473 = vmatpush1.msra.mxu0 0.0
          %2474 = vmatprep.subr.mxu0 0.0
          %2475 = vmatpush1.msra.mxu0 0.0
          %2476 = vmatprep.subr.mxu0 0.0
          %2477 = vmatpush1.msra.mxu0 0.0
          %2478 = vmatprep.mubr.f32.mxu0 0.0
          %2479 = vmatmul.mubr.f32.gmra.mrb[0].mxu0 %v2342
          %v2480 = vpop.f32.mrb[0].mxu0
          %v2481 = vadd.f32 0.0, %v2480
          %v2482 = vpop.f32.mrb[0].mxu0
          %v2483 = vadd.f32 0.0, %v2482
          %2484 = vdwg.mxu0
          %v2485 = vadd.f32 %v2091, %v2410
          %v2486 = vadd.f32 %v2093, %v2412
          %v2487 = vadd.f32 %v2162, %v2481
          %v2488 = vadd.f32 %v2164, %v2483
          %v2489 = vxor.u32 %v2485, 2147483648
          %v2490 = vmul.f32 %v2489, 1.442695
          %v2491 = vpow.pop %v2490
          %v2492 = vadd.f32 %v2491, 1.0
          %v2493 = vrcp.pop %v2492
          %v2494 = vmul.f32 1.0, %v2493
          %v2495 = vxor.u32 %v2486, 2147483648
          %v2496 = vmul.f32 %v2495, 1.442695
          %v2497 = vpow.pop %v2496
          %v2498 = vadd.f32 %v2497, 1.0
          %v2499 = vrcp.pop %v2498
          %v2500 = vmul.f32 1.0, %v2499
          %v2501 = vtanh.pop %v2487
          %v2502 = vxor.u32 %v2488, 2147483648
          %v2503 = vmul.f32 %v2502, 1.442695
          %v2504 = vpow.pop %v2503
          %v2505 = vadd.f32 %v2504, 1.0
          %v2506 = vrcp.pop %v2505
          %v2507 = vmul.f32 1.0, %v2506
          %v2508 = vmul.f32 %v2501, %v2494
          %v2509 = vmul.f32 %v2500, %v2017
          %v2510 = vadd.f32 %v2508, %v2509
          %v2511 = vtanh.pop %v2510
          %v2512 = vmul.f32 %v2507, %v2511
          %s2513 = smul.u32 %s2023, 8
          %s2514 = scalar_lea.vmem %s305, %s2513 [#allocation14]
          %2515 = vst [vmem:[%s2514] sm:$0xff] %v2512
        $region65: #{tpu_custom_call.1} parent=39 // loop_footer
          %s539 = sadd.s32 1, %s535
        $region66: #{tpu_custom_call.1} parent=39 // loop_footer_branch
          %534 = sbr.rel target = $region62
        $region67: #{tpu_custom_call.1} parent=39 // loop_exit
          _
        %2516 = vst [vmem:[#allocation2] sm:$0xff] %v540
        %2517 = vst [vmem:[#allocation3] sm:$0xff] %v541
        %2518 = vst [vmem:[#allocation4] sm:$0xff] %v542
        %2519 = vst [vmem:[#allocation5] sm:$0xff] %v543
        %s2520 = sand.u32 %s158, 1
        %s2521 = scalar_lea.sflag [#allocation8], %s2520
        %s2522 = sand.u32 %s158, 1
        %s2523 = smul.addr %s2522, 64
        %s2524 = scalar_lea.vmem [#allocation14], %s2523
        // Predicated region
        $region68: #{tpu_custom_call.1} parent=39 // pred_check
          %p2525 = pneg %p168
        $region69: #{tpu_custom_call.1} parent=39 // pred_check_branch
          %2527 = sbr.rel (%p2525) target = $region71
        $region70: #{tpu_custom_call.1} parent=39 // pred_region
          %s2528 = smul.u32 8, %s29
          %s2530 = ssub.s32 1024, 1024
          %2531 = vsyncadd %s2521, %s2530
          %s2532 = sadd.s32 %s28, %s2528
          %s2533 = smul.addr %s2532, 128
          %s2534 = scalar_lea.hbm %s5, %s2533
          %s2535 = sshll.u32 %s2524, 4
          %s2536 = int_to_ptr.vmem [resolvable:$true] %s2535
          %2541 = dma.vmem_to_hbm [thread:$0]  %s2536, 1024, %s2534, %s2521, 128, 128, 8
        $region71: #{tpu_custom_call.1} parent=39 // pred_fallthru
          _
      $region40: #{tpu_custom_call.1} parent=5 // pred_fallthru
        _
      %p2542 = scmp.le.s32.totalorder 2, %s19
      // Predicated region
      $region72: #{tpu_custom_call.1} parent=5 // pred_check
        %p2543 = pneg %p2542
      $region73: #{tpu_custom_call.1} parent=5 // pred_check_branch
        %2545 = sbr.rel (%p2543) target = $region75
      $region74: #{tpu_custom_call.1} parent=5 // pred_region
        %s2546 = ssub.s32 %s19, 2
        // Predicated region
        $region76: #{tpu_custom_call.1} parent=74 // pred_check
          %p2547 = pneg %p174
        $region77: #{tpu_custom_call.1} parent=74 // pred_check_branch
          %2549 = sbr.rel (%p2547) target = $region79
        $region78: #{tpu_custom_call.1} parent=74 // pred_region
          %s2550 = sand.u32 %s159, 1
          %s2551 = scalar_lea.sflag [#allocation8], %s2550
          %s2552 = sand.u32 %s159, 1
          %s2553 = smul.addr %s2552, 64
          %s2554 = scalar_lea.vmem [#allocation14], %s2553
          %2555 = dma.done %s2551, 1024
        $region79: #{tpu_custom_call.1} parent=74 // pred_fallthru
          _
      $region75: #{tpu_custom_call.1} parent=5 // pred_fallthru
        _
    $region6: #{tpu_custom_call.1} parent=1 // loop_footer
      %s23 = sadd.s32 1, %s19
    $region7: #{tpu_custom_call.1} parent=1 // loop_footer_branch
      %18 = sbr.rel target = $region3
    $region8: #{tpu_custom_call.1} parent=1 // loop_exit
      _
    %2556 = vsyncpa [#allocation7], 1
    %s2557 = scalar_lea.sflag [#allocation7], 1
    %2558 = vsyncpa %s2557, 1
    %2559 = vsyncpa [#allocation10], 1
    %2560 = vsyncpa [#allocation13], 1
    %2561 = vsyncpa [#allocation8], 1
    %s2562 = scalar_lea.sflag [#allocation8], 1
    %2563 = vsyncpa %s2562, 1

</llo_original>
